<compile_context>
chip_gen: v5e
topology: v5e:2x2
jax: 0.10.0
libtpu: 0.0.40
codegen_flags: <defaults>
</compile_context>

<pallas_src>
import numpy as np
import jax
import jax.numpy as jnp
from jax.experimental import pallas as pl
from jax.experimental.pallas import tpu as pltpu

# ----------------------------- configuration --------------------------------
B, C_IN, H, W = 2, 4, 16, 16          # input images (NCHW)
S = H * W                              # 256 spatial positions
COLS0 = S * B                          # 512 lane columns at full resolution
AUG_C = 4                              # aug_tensor channels
CH = (8, 16, 16, 32, 32)               # encoder channels per scale (x1..x5)
FEAT_DIM = 32                          # projection-head output dim
LEVELS = 4                             # log2(H) downsample levels

# pyramid-panel column segments (all offsets are multiples of 128)
SEG_H1, SEG_H2, SEG_H3, SEG_H4, SEG_H5, SEG_FEAT = 0, 512, 640, 768, 896, 1024
PANEL_COLS = 1152
PANEL_ROWS = 32
WSEG = 128                             # encoder weight-panel segment stride


# ------------------------ P-order spatial permutation ------------------------
def _build_perm():
    """perm[std_index] = P-order index (finest 2x2 quad digit outermost)."""
    perm = np.zeros(S, dtype=np.int32)
    for h in range(H):
        for w in range(W):
            sp = 0
            for k in range(LEVELS):                       # k = 0 is finest
                q = 2 * ((h >> k) & 1) + ((w >> k) & 1)
                sp += q * (4 ** (LEVELS - 1 - k))
            perm[h * W + w] = sp
    return perm


_PERM_NP = _build_perm()
PERM = jnp.asarray(_PERM_NP)                    # p-order index for each std pos
INV_PERM = jnp.asarray(np.argsort(_PERM_NP))    # std pos feeding each P slot


def to_cf(x_nchw):
    """(B,C,H,W) NCHW -> (C, S*B) channels-first panel, col = p_order*B + b."""
    b, c = x_nchw.shape[0], x_nchw.shape[1]
    xs = jnp.transpose(x_nchw, (1, 2, 3, 0)).reshape(c, S, b)
    return xs[:, INV_PERM, :].reshape(c, S * b)


def from_cf(panel, b):
    """(C, S*B) channels-first panel -> (B,C,H,W) NCHW."""
    c = panel.shape[0]
    ys = panel.reshape(c, S, b)[:, PERM, :].reshape(c, H, W, b)
    return jnp.transpose(ys, (3, 0, 1, 2))


def _relu(x):
    return jnp.maximum(x, 0.0)


# ----------------------------- encoder kernel --------------------------------
def _encoder_kernel(x_ref, w_ref, b_ref, out_ref):
    # grid = (encoder_index,); whole batch is folded into the lane dim.
    def wseg(i, c_out, k):                       # bf16 weight slice (c_out, k)
        return w_ref[0, 0:c_out, i * WSEG:i * WSEG + k]

    def bcol(i, c_out):                          # f32 bias column (c_out, 1)
        return b_ref[0, 0:c_out, i:i + 1]

    out_ref[0, :, :] = jnp.zeros((PANEL_ROWS, PANEL_COLS), jnp.float32)

    x = x_ref[0].astype(jnp.bfloat16)                                   # (4,512)
    h = _relu(jnp.dot(wseg(0, CH[0], C_IN), x,
                      preferred_element_type=jnp.float32) + bcol(0, CH[0]))
    out_ref[0, 0:CH[0], SEG_H1:SEG_H1 + COLS0] = h                      # h1

    seg_out = (SEG_H2, SEG_H3, SEG_H4, SEG_H5)
    cols, prev = COLS0, CH[0]
    for i in range(1, 5):
        nb = cols // 4
        # stride-2 conv == one matmul on the 4 quad column-blocks stacked on K
        xcat = jnp.concatenate([h[:, q * nb:(q + 1) * nb] for q in range(4)],
                               axis=0).astype(jnp.bfloat16)             # (4*prev, nb)
        h = _relu(jnp.dot(wseg(i, CH[i], 4 * prev), xcat,
                          preferred_element_type=jnp.float32) + bcol(i, CH[i]))
        out_ref[0, 0:CH[i], seg_out[i - 1]:seg_out[i - 1] + nb] = h
        cols, prev = nb, CH[i]

    # global pool (spatial==1 at this scale) + projection head
    feat = (jnp.dot(wseg(5, FEAT_DIM, CH[4]), h.astype(jnp.bfloat16),
                    preferred_element_type=jnp.float32) + bcol(5, FEAT_DIM))
    out_ref[0, 0:FEAT_DIM, SEG_FEAT:SEG_FEAT + B] = feat


def encoder_pallas(x_panels, w_panel, b_panel):
    """x_panels: (2, C_IN, COLS0) f32; w_panel: (2,32,768) bf16; b: (2,32,8)."""
    return pl.pallas_call(
        _encoder_kernel,
        out_shape=jax.ShapeDtypeStruct((2, PANEL_ROWS, PANEL_COLS), jnp.float32),
        grid=(2,),
        in_specs=[
            pl.BlockSpec((1, C_IN, COLS0), lambda e: (e, 0, 0)),
            pl.BlockSpec((1, PANEL_ROWS, 6 * WSEG), lambda e: (e, 0, 0)),
            pl.BlockSpec((1, PANEL_ROWS, 8), lambda e: (e, 0, 0)),
        ],
        out_specs=pl.BlockSpec((1, PANEL_ROWS, PANEL_COLS), lambda e: (e, 0, 0)),
        compiler_params=pltpu.CompilerParams(
            dimension_semantics=("parallel",)),
    )(x_panels, w_panel, b_panel)


# ------------------------------ decoder kernel --------------------------------
def _decoder_kernel(alpha_ref, panel_ref, aug_ref, wu_ref, wm_ref, bias_ref,
                    wo_ref, out_ref):
    # grid = (branch,).  branch 0: feats_q, 1: feats_k, 2: alpha-mixed.
    br = pl.program_id(0)
    a = alpha_ref[0]
    cq = jnp.where(br == 0, 1.0, jnp.where(br == 1, 0.0, a)).astype(jnp.float32)
    ck = 1.0 - cq

    def mixed_skip(off, c, w):
        fq = panel_ref[0, 0:c, off:off + w]
        fk = panel_ref[1, 0:c, off:off + w]
        return cq * fq + ck * fk

    d = mixed_skip(SEG_H5, CH[4], B)                               # (32, 2) f32
    cols, d_ch = B, CH[4]
    stage_cfg = ((CH[3], SEG_H4), (CH[2], SEG_H3), (CH[1], SEG_H2), (CH[0], SEG_H1))
    for i, (c, seg) in enumerate(stage_cfg):
        # depth_to_space "up" conv: one matmul, 4 quad outputs stacked on rows
        wu = wu_ref[i, 0:4 * c, 0:d_ch]                            # bf16
        bu = bias_ref[i, 0:4 * c, 0:1]                             # f32
        up = _relu(jnp.dot(wu, d.astype(jnp.bfloat16),
                           preferred_element_type=jnp.float32) + bu)   # (4c, cols)
        # skip contribution over all 4 quad blocks in one lane-dense matmul
        skip = mixed_skip(seg, c, 4 * cols).astype(jnp.bfloat16)       # (c, 4*cols)
        wm2 = wm_ref[i, 1, 0:c, 0:c]
        s_all = jnp.dot(wm2, skip, preferred_element_type=jnp.float32)
        wm1 = wm_ref[i, 0, 0:c, 0:c]
        bm = bias_ref[i, 0:c, 1:2]
        blocks = []
        for q in range(4):
            u_q = up[q * c:(q + 1) * c, :].astype(jnp.bfloat16)
            m_q = _relu(jnp.dot(wm1, u_q, preferred_element_type=jnp.float32)
                        + s_all[:, q * cols:(q + 1) * cols] + bm)
            blocks.append(m_q)
        d = jnp.concatenate(blocks, axis=1)                        # (c, 4*cols)
        cols, d_ch = 4 * cols, c

    aug = aug_ref[0].astype(jnp.bfloat16)                          # (4, 512)
    wod = wo_ref[0:C_IN, 0:CH[0]].astype(jnp.bfloat16)
    woa = wo_ref[0:C_IN, CH[0]:CH[0] + AUG_C].astype(jnp.bfloat16)
    bo = wo_ref[0:C_IN, 12:13]
    out = (jnp.dot(wod, d.astype(jnp.bfloat16), preferred_element_type=jnp.float32)
           + jnp.dot(woa, aug, preferred_element_type=jnp.float32) + bo)
    out_ref[0, :, :] = out


def decoder_pallas(alpha_arr, qk_panel, aug_panels, wu, wm, bias, wo):
    return pl.pallas_call(
        _decoder_kernel,
        out_shape=jax.ShapeDtypeStruct((3, C_IN, COLS0), jnp.float32),
        grid=(3,),
        in_specs=[
            pl.BlockSpec(memory_space=pltpu.MemorySpace.SMEM),                 # alpha
            pl.BlockSpec((2, PANEL_ROWS, PANEL_COLS), lambda b: (0, 0, 0)),    # q/k pyramid panels
            pl.BlockSpec((1, AUG_C, COLS0), lambda b: (b, 0, 0)),              # aug per branch
            pl.BlockSpec((4, 128, 32), lambda b: (0, 0, 0)),                   # Wu panel (bf16)
            pl.BlockSpec((4, 2, 32, 32), lambda b: (0, 0, 0, 0)),              # Wm panel (bf16)
            pl.BlockSpec((4, 128, 8), lambda b: (0, 0, 0)),                    # bias panel (f32)
            pl.BlockSpec((8, 16), lambda b: (0, 0)),                           # out weights + bias
        ],
        out_specs=pl.BlockSpec((1, C_IN, COLS0), lambda b: (b, 0, 0)),
        compiler_params=pltpu.CompilerParams(
            dimension_semantics=("parallel",)),
    )(alpha_arr, qk_panel, aug_panels, wu, wm, bias, wo)


# ------------------------------- parameters ----------------------------------
def _lin(key, fan_in, shape):
    return jax.random.normal(key, shape, jnp.float32) / np.sqrt(fan_in)


def init_encoder_params(key):
    ks = jax.random.split(key, 6)
    p = {"w0": _lin(ks[0], C_IN, (C_IN, CH[0])),
         "b0": jnp.zeros((1, CH[0]), jnp.float32)}
    prev = CH[0]
    for i in range(1, 5):
        p[f"wd{i}"] = _lin(ks[i], 4 * prev, (4, prev, CH[i]))
        p[f"bd{i}"] = jnp.zeros((1, CH[i]), jnp.float32)
        prev = CH[i]
    p["wp"] = _lin(ks[5], CH[4], (CH[4], FEAT_DIM))
    p["bp"] = jnp.zeros((1, FEAT_DIM), jnp.float32)
    return p


def init_decoder_params(key):
    skip_ch = [CH[3], CH[2], CH[1], CH[0]]     # [32, 16, 16, 8]
    ks = jax.random.split(key, 10)
    p = {}
    d_ch, ki = CH[4], 0
    for i, c in enumerate(skip_ch):
        p[f"wu{i}"] = _lin(ks[ki], d_ch, (4, d_ch, c)); ki += 1
        p[f"bu{i}"] = jnp.zeros((4, 1, c), jnp.float32)
        p[f"wm{i}"] = _lin(ks[ki], 2 * c, (2, c, c)); ki += 1
        p[f"bm{i}"] = jnp.zeros((1, c), jnp.float32)
        d_ch = c
    p["wod"] = _lin(ks[8], CH[0] + AUG_C, (CH[0], C_IN))
    p["woa"] = _lin(ks[9], CH[0] + AUG_C, (AUG_C, C_IN))
    p["bo"] = jnp.zeros((1, C_IN), jnp.float32)
    return p


def pack_encoder_params(p):
    """Pack the 12 encoder tensors into one weight panel + one bias panel."""
    w = jnp.zeros((PANEL_ROWS, 6 * WSEG), jnp.float32)
    w = w.at[0:CH[0], 0:C_IN].set(p["w0"].T)
    prev = CH[0]
    for i in range(1, 5):
        wcat = jnp.transpose(p[f"wd{i}"], (2, 0, 1)).reshape(CH[i], 4 * prev)
        w = w.at[0:CH[i], i * WSEG:i * WSEG + 4 * prev].set(wcat)
        prev = CH[i]
    w = w.at[0:FEAT_DIM, 5 * WSEG:5 * WSEG + CH[4]].set(p["wp"].T)

    b = jnp.zeros((PANEL_ROWS, 8), jnp.float32)
    b = b.at[0:CH[0], 0].set(p["b0"].reshape(-1))
    for i in range(1, 5):
        b = b.at[0:CH[i], i].set(p[f"bd{i}"].reshape(-1))
    b = b.at[0:FEAT_DIM, 5].set(p["bp"].reshape(-1))
    return w, b


def pack_decoder_params(p):
    """Pack the 19 decoder tensors into Wu / Wm / bias panels + out weights."""
    skip_ch = [CH[3], CH[2], CH[1], CH[0]]
    wu = jnp.zeros((4, 128, 32), jnp.float32)
    wm = jnp.zeros((4, 2, 32, 32), jnp.float32)
    bias = jnp.zeros((4, 128, 8), jnp.float32)
    d_ch = CH[4]
    for i, c in enumerate(skip_ch):
        wu_cat = jnp.transpose(p[f"wu{i}"], (0, 2, 1)).reshape(4 * c, d_ch)
        wu = wu.at[i, 0:4 * c, 0:d_ch].set(wu_cat)
        wm = wm.at[i, 0, 0:c, 0:c].set(p[f"wm{i}"][0].T)
        wm = wm.at[i, 1, 0:c, 0:c].set(p[f"wm{i}"][1].T)
        bias = bias.at[i, 0:4 * c, 0].set(p[f"bu{i}"].reshape(4 * c))
        bias = bias.at[i, 0:c, 1].set(p[f"bm{i}"].reshape(c))
        d_ch = c
    wo = jnp.zeros((8, 16), jnp.float32)
    wo = wo.at[0:C_IN, 0:CH[0]].set(p["wod"].T)
    wo = wo.at[0:C_IN, CH[0]:CH[0] + AUG_C].set(p["woa"].T)
    wo = wo.at[0:C_IN, 12].set(p["bo"].reshape(-1))
    return wu, wm, bias, wo


# --------------------------- PCRLModel2d forward ------------------------------
@jax.jit
def pcrl_forward(params, x1, x2, aug_tensor1, aug_tensor2, aug_tensor_h,
                 shuffle_key, alpha):
    bsz = x1.shape[0]
    # get_shuffle_ids (torch.randperm -> seeded jax.random.permutation)
    shuffle_ids = jax.random.permutation(shuffle_key, bsz)
    reverse_ids = jnp.argsort(shuffle_ids)
    x2_shuf = x2[shuffle_ids]

    x_panels = jnp.stack([to_cf(x1), to_cf(x2_shuf)], axis=0)      # (2,4,512)
    panel = encoder_pallas(x_panels, params["enc_w"], params["enc_b"])

    # un-shuffle the EMA pyramid (batch lives inside the lane dim) + detach
    col = jnp.arange(PANEL_COLS)
    unshuf = (col // bsz) * bsz + reverse_ids[col % bsz]
    panel_q = panel[0]
    panel_k = jax.lax.stop_gradient(panel[1][:, unshuf])

    feat_q = panel_q[0:FEAT_DIM, SEG_FEAT:SEG_FEAT + bsz].T
    feat_k = panel_k[0:FEAT_DIM, SEG_FEAT:SEG_FEAT + bsz].T

    alpha32 = jnp.asarray(alpha, jnp.float32)
    # feat_mixed = encoder(x5_alpha, mixup=True): projection head on mixed x5
    # (tiny 2x32 @ 32x32 matmul, done in plain XLA per review).
    x5_q = panel_q[0:CH[4], SEG_H5:SEG_H5 + bsz]
    x5_k = panel_k[0:CH[4], SEG_H5:SEG_H5 + bsz]
    x5_mixed = alpha32 * x5_q + (1.0 - alpha32) * x5_k
    feat_mixed = x5_mixed.T @ params["wp"] + params["bp"]

    qk_panel = jnp.stack([panel_q, panel_k], axis=0)               # (2,32,1152)
    aug_panels = jnp.stack([to_cf(aug_tensor1), to_cf(aug_tensor2),
                            to_cf(aug_tensor_h)], axis=0)          # (3,4,512)
    alpha_arr = jnp.reshape(alpha32, (1,))

    out_p = decoder_pallas(alpha_arr, qk_panel, aug_panels,
                           params["dec_wu"], params["dec_wm"],
                           params["dec_bias"], params["dec_wo"])   # (3,4,512)

    Pre_To_x1 = from_cf(out_p[0], bsz)
    Pre_Tm_x2 = from_cf(out_p[1], bsz)
    Pre_Th_x = from_cf(out_p[2], bsz)
    return feat_k, feat_q, feat_mixed, Pre_To_x1, Pre_Tm_x2, Pre_Th_x


# ------------------------------------ main ------------------------------------
if __name__ == "__main__":
    np.random.seed(0)
    key = jax.random.PRNGKey(0)
    (k_x1, k_x2, k_a1, k_a2, k_ah,
     k_shuf, k_enc, k_ema, k_dec) = jax.random.split(key, 9)

    x1 = jax.random.normal(k_x1, (B, C_IN, H, W), jnp.float32)
    x2 = jax.random.normal(k_x2, (B, C_IN, H, W), jnp.float32)
    aug_tensor1 = jax.random.normal(k_a1, (B, AUG_C, H, W), jnp.float32)
    aug_tensor2 = jax.random.normal(k_a2, (B, AUG_C, H, W), jnp.float32)
    aug_tensor_h = jax.random.normal(k_ah, (B, AUG_C, H, W), jnp.float32)

    enc_params = init_encoder_params(k_enc)
    ema_params = init_encoder_params(k_ema)     # separate deterministic EMA encoder
    dec_params = init_decoder_params(k_dec)

    enc_w0, enc_b0 = pack_encoder_params(enc_params)
    ema_w0, ema_b0 = pack_encoder_params(ema_params)
    dec_wu, dec_wm, dec_bias, dec_wo = pack_decoder_params(dec_params)
    params = {
        "enc_w": jnp.stack([enc_w0, ema_w0], axis=0).astype(jnp.bfloat16),
        "enc_b": jnp.stack([enc_b0, ema_b0], axis=0),
        "wp": enc_params["wp"], "bp": enc_params["bp"],
        "dec_wu": dec_wu.astype(jnp.bfloat16),
        "dec_wm": dec_wm.astype(jnp.bfloat16),
        "dec_bias": dec_bias, "dec_wo": dec_wo,
    }

    # TODO(synk): np.random.beta / torch.randperm in the reference are host-side
    # nondeterministic RNG; reproduced with seeded numpy / jax.random.  alpha is
    # passed as a traced jnp scalar so new values never retrace the jit.
    alpha_host = float(np.random.beta(1.0, 1.0))
    alpha_host = max(alpha_host, 1.0 - alpha_host)
    alpha = jnp.asarray(alpha_host, dtype=jnp.float32)

    outs = pcrl_forward(params, x1, x2, aug_tensor1, aug_tensor2, aug_tensor_h,
                        k_shuf, alpha)
    outs = jax.block_until_ready(outs)

    feat_k, feat_q, feat_mixed, p1, p2, p3 = outs
    assert feat_k.shape == (B, FEAT_DIM)
    assert feat_q.shape == (B, FEAT_DIM)
    assert feat_mixed.shape == (B, FEAT_DIM)
    assert p1.shape == (B, C_IN, H, W)
    assert p2.shape == (B, C_IN, H, W)
    assert p3.shape == (B, C_IN, H, W)
    assert all(bool(jnp.all(jnp.isfinite(t))) for t in outs)
    print("KERNEL_OK")
</pallas_src>

<mosaic_0001>
module attributes {stable_mosaic.version = 11 : i64} {
  func.func @_encoder_kernel(%arg0: i32, %arg1: memref<1x4x512xf32, #tpu.memory_space<vmem>>, %arg2: memref<1x32x768xbf16, #tpu.memory_space<vmem>>, %arg3: memref<1x32x8xf32, #tpu.memory_space<vmem>>, %arg4: memref<1x32x1152xf32, #tpu.memory_space<vmem>>) attributes {dimension_semantics = [#tpu.dimension_semantics<parallel>], iteration_bounds = array<i64: 2>, scalar_prefetch = 0 : i64, scratch_operands = 0 : i64, tpu.core_type = #tpu.core_type<tc>, window_params = [{transform_indices = @transform_0, window_bounds = array<i64: 1, 4, 512>}, {transform_indices = @transform_1, window_bounds = array<i64: 1, 32, 768>}, {transform_indices = @transform_2, window_bounds = array<i64: 1, 32, 8>}, {transform_indices = @transform_3, window_bounds = array<i64: 1, 32, 1152>}]} {
    %cst = arith.constant 0.000000e+00 : f32
    %0 = vector.broadcast %cst : f32 to vector<32x1152xf32>
    %c0 = arith.constant 0 : index
    %c0_0 = arith.constant 0 : index
    %c0_1 = arith.constant 0 : index
    %1 = vector.load %arg4[%c0, %c0_0, %c0_1] : memref<1x32x1152xf32, #tpu.memory_space<vmem>>, vector<1x32x1152xf32>
    %2 = vector.shape_cast %1 : vector<1x32x1152xf32> to vector<32x1152xf32>
    %3 = vector.shape_cast %0 : vector<32x1152xf32> to vector<1x32x1152xf32>
    tpu.vector_store %arg4[%c0, %c0_0, %c0_1], %3 {strides = array<i32>} : memref<1x32x1152xf32, #tpu.memory_space<vmem>>, vector<1x32x1152xf32>,
    %c0_2 = arith.constant 0 : index
    %c0_3 = arith.constant 0 : index
    %c0_4 = arith.constant 0 : index
    %4 = vector.load %arg1[%c0_2, %c0_3, %c0_4] : memref<1x4x512xf32, #tpu.memory_space<vmem>>, vector<1x4x512xf32>
    %5 = vector.shape_cast %4 : vector<1x4x512xf32> to vector<4x512xf32>
    %6 = arith.truncf %5 : vector<4x512xf32> to vector<4x512xbf16>
    %c0_5 = arith.constant 0 : index
    %c0_6 = arith.constant 0 : index
    %c0_7 = arith.constant 0 : index
    %7 = vector.load %arg2[%c0_5, %c0_6, %c0_7] : memref<1x32x768xbf16, #tpu.memory_space<vmem>>, vector<1x8x4xbf16>
    %8 = vector.shape_cast %7 : vector<1x8x4xbf16> to vector<8x4xbf16>
    %cst_8 = arith.constant dense<0.000000e+00> : vector<8x512xf32>
    %9 = tpu.matmul %8, %6, %cst_8 {dimension_numbers = #tpu.dot_dimension_numbers<[1], [0], [0], [1], [0, 0, 1, 1], [], []>} : vector<8x4xbf16>, vector<4x512xbf16>, vector<8x512xf32> -> vector<8x512xf32>
    %c0_9 = arith.constant 0 : index
    %c0_10 = arith.constant 0 : index
    %c0_11 = arith.constant 0 : index
    %10 = vector.load %arg3[%c0_9, %c0_10, %c0_11] : memref<1x32x8xf32, #tpu.memory_space<vmem>>, vector<1x8x1xf32>
    %11 = vector.shape_cast %10 : vector<1x8x1xf32> to vector<8x1xf32>
    %12 = vector.broadcast %11 : vector<8x1xf32> to vector<8x512xf32>
    %13 = arith.addf %9, %12 : vector<8x512xf32>
    %cst_12 = arith.constant 0.000000e+00 : f32
    %14 = vector.broadcast %cst_12 : f32 to vector<8x512xf32>
    %15 = arith.maximumf %13, %14 : vector<8x512xf32>
    %c0_13 = arith.constant 0 : index
    %c0_14 = arith.constant 0 : index
    %c0_15 = arith.constant 0 : index
    %16 = vector.load %arg4[%c0_13, %c0_14, %c0_15] : memref<1x32x1152xf32, #tpu.memory_space<vmem>>, vector<1x8x512xf32>
    %17 = vector.shape_cast %16 : vector<1x8x512xf32> to vector<8x512xf32>
    %18 = vector.shape_cast %15 : vector<8x512xf32> to vector<1x8x512xf32>
    tpu.vector_store %arg4[%c0_13, %c0_14, %c0_15], %18 {strides = array<i32>} : memref<1x32x1152xf32, #tpu.memory_space<vmem>>, vector<1x8x512xf32>,
    %19 = vector.extract_strided_slice %15 {offsets = [0, 0], sizes = [8, 128], strides = [1, 1]} : vector<8x512xf32> to vector<8x128xf32>
    %20 = vector.extract_strided_slice %15 {offsets = [0, 128], sizes = [8, 128], strides = [1, 1]} : vector<8x512xf32> to vector<8x128xf32>
    %21 = vector.extract_strided_slice %15 {offsets = [0, 256], sizes = [8, 128], strides = [1, 1]} : vector<8x512xf32> to vector<8x128xf32>
    %22 = vector.extract_strided_slice %15 {offsets = [0, 384], sizes = [8, 128], strides = [1, 1]} : vector<8x512xf32> to vector<8x128xf32>
    %23 = tpu.concatenate %19, %20, %21, %22 in 0 : vector<8x128xf32>, vector<8x128xf32>, vector<8x128xf32>, vector<8x128xf32> -> vector<32x128xf32>
    %24 = arith.truncf %23 : vector<32x128xf32> to vector<32x128xbf16>
    %c0_16 = arith.constant 0 : index
    %c0_17 = arith.constant 0 : index
    %c128 = arith.constant 128 : index
    %25 = vector.load %arg2[%c0_16, %c0_17, %c128] : memref<1x32x768xbf16, #tpu.memory_space<vmem>>, vector<1x16x32xbf16>
    %26 = vector.shape_cast %25 : vector<1x16x32xbf16> to vector<16x32xbf16>
    %cst_18 = arith.constant dense<0.000000e+00> : vector<16x128xf32>
    %27 = tpu.matmul %26, %24, %cst_18 {dimension_numbers = #tpu.dot_dimension_numbers<[1], [0], [0], [1], [0, 0, 1, 1], [], []>} : vector<16x32xbf16>, vector<32x128xbf16>, vector<16x128xf32> -> vector<16x128xf32>
    %c0_19 = arith.constant 0 : index
    %c0_20 = arith.constant 0 : index
    %c1 = arith.constant 1 : index
    %28 = vector.load %arg3[%c0_19, %c0_20, %c1] : memref<1x32x8xf32, #tpu.memory_space<vmem>>, vector<1x16x1xf32>
    %29 = vector.shape_cast %28 : vector<1x16x1xf32> to vector<16x1xf32>
    %30 = vector.broadcast %29 : vector<16x1xf32> to vector<16x128xf32>
    %31 = arith.addf %27, %30 : vector<16x128xf32>
    %cst_21 = arith.constant 0.000000e+00 : f32
    %32 = vector.broadcast %cst_21 : f32 to vector<16x128xf32>
    %33 = arith.maximumf %31, %32 : vector<16x128xf32>
    %c0_22 = arith.constant 0 : index
    %c0_23 = arith.constant 0 : index
    %c512 = arith.constant 512 : index
    %34 = vector.load %arg4[%c0_22, %c0_23, %c512] : memref<1x32x1152xf32, #tpu.memory_space<vmem>>, vector<1x16x128xf32>
    %35 = vector.shape_cast %34 : vector<1x16x128xf32> to vector<16x128xf32>
    %36 = vector.shape_cast %33 : vector<16x128xf32> to vector<1x16x128xf32>
    tpu.vector_store %arg4[%c0_22, %c0_23, %c512], %36 {strides = array<i32>} : memref<1x32x1152xf32, #tpu.memory_space<vmem>>, vector<1x16x128xf32>,
    %37 = vector.extract_strided_slice %33 {offsets = [0, 0], sizes = [16, 32], strides = [1, 1]} : vector<16x128xf32> to vector<16x32xf32>
    %38 = vector.extract_strided_slice %33 {offsets = [0, 32], sizes = [16, 32], strides = [1, 1]} : vector<16x128xf32> to vector<16x32xf32>
    %39 = vector.extract_strided_slice %33 {offsets = [0, 64], sizes = [16, 32], strides = [1, 1]} : vector<16x128xf32> to vector<16x32xf32>
    %40 = vector.extract_strided_slice %33 {offsets = [0, 96], sizes = [16, 32], strides = [1, 1]} : vector<16x128xf32> to vector<16x32xf32>
    %41 = tpu.concatenate %37, %38, %39, %40 in 0 : vector<16x32xf32>, vector<16x32xf32>, vector<16x32xf32>, vector<16x32xf32> -> vector<64x32xf32>
    %42 = arith.truncf %41 : vector<64x32xf32> to vector<64x32xbf16>
    %c0_24 = arith.constant 0 : index
    %c0_25 = arith.constant 0 : index
    %c256 = arith.constant 256 : index
    %43 = vector.load %arg2[%c0_24, %c0_25, %c256] : memref<1x32x768xbf16, #tpu.memory_space<vmem>>, vector<1x16x64xbf16>
    %44 = vector.shape_cast %43 : vector<1x16x64xbf16> to vector<16x64xbf16>
    %cst_26 = arith.constant dense<0.000000e+00> : vector<16x32xf32>
    %45 = tpu.matmul %44, %42, %cst_26 {dimension_numbers = #tpu.dot_dimension_numbers<[1], [0], [0], [1], [0, 0, 1, 1], [], []>} : vector<16x64xbf16>, vector<64x32xbf16>, vector<16x32xf32> -> vector<16x32xf32>
    %c0_27 = arith.constant 0 : index
    %c0_28 = arith.constant 0 : index
    %c2 = arith.constant 2 : index
    %46 = vector.load %arg3[%c0_27, %c0_28, %c2] : memref<1x32x8xf32, #tpu.memory_space<vmem>>, vector<1x16x1xf32>
    %47 = vector.shape_cast %46 : vector<1x16x1xf32> to vector<16x1xf32>
    %48 = vector.broadcast %47 : vector<16x1xf32> to vector<16x32xf32>
    %49 = arith.addf %45, %48 : vector<16x32xf32>
    %cst_29 = arith.constant 0.000000e+00 : f32
    %50 = vector.broadcast %cst_29 : f32 to vector<16x32xf32>
    %51 = arith.maximumf %49, %50 : vector<16x32xf32>
    %c0_30 = arith.constant 0 : index
    %c0_31 = arith.constant 0 : index
    %c640 = arith.constant 640 : index
    %52 = vector.load %arg4[%c0_30, %c0_31, %c640] : memref<1x32x1152xf32, #tpu.memory_space<vmem>>, vector<1x16x32xf32>
    %53 = vector.shape_cast %52 : vector<1x16x32xf32> to vector<16x32xf32>
    %54 = vector.shape_cast %51 : vector<16x32xf32> to vector<1x16x32xf32>
    tpu.vector_store %arg4[%c0_30, %c0_31, %c640], %54 {strides = array<i32>} : memref<1x32x1152xf32, #tpu.memory_space<vmem>>, vector<1x16x32xf32>,
    %55 = vector.extract_strided_slice %51 {offsets = [0, 0], sizes = [16, 8], strides = [1, 1]} : vector<16x32xf32> to vector<16x8xf32>
    %56 = vector.extract_strided_slice %51 {offsets = [0, 8], sizes = [16, 8], strides = [1, 1]} : vector<16x32xf32> to vector<16x8xf32>
    %57 = vector.extract_strided_slice %51 {offsets = [0, 16], sizes = [16, 8], strides = [1, 1]} : vector<16x32xf32> to vector<16x8xf32>
    %58 = vector.extract_strided_slice %51 {offsets = [0, 24], sizes = [16, 8], strides = [1, 1]} : vector<16x32xf32> to vector<16x8xf32>
    %59 = tpu.concatenate %55, %56, %57, %58 in 0 : vector<16x8xf32>, vector<16x8xf32>, vector<16x8xf32>, vector<16x8xf32> -> vector<64x8xf32>
    %60 = arith.truncf %59 : vector<64x8xf32> to vector<64x8xbf16>
    %c0_32 = arith.constant 0 : index
    %c0_33 = arith.constant 0 : index
    %c384 = arith.constant 384 : index
    %61 = vector.load %arg2[%c0_32, %c0_33, %c384] : memref<1x32x768xbf16, #tpu.memory_space<vmem>>, vector<1x32x64xbf16>
    %62 = vector.shape_cast %61 : vector<1x32x64xbf16> to vector<32x64xbf16>
    %cst_34 = arith.constant dense<0.000000e+00> : vector<32x8xf32>
    %63 = tpu.matmul %62, %60, %cst_34 {dimension_numbers = #tpu.dot_dimension_numbers<[1], [0], [0], [1], [0, 0, 1, 1], [], []>} : vector<32x64xbf16>, vector<64x8xbf16>, vector<32x8xf32> -> vector<32x8xf32>
    %c0_35 = arith.constant 0 : index
    %c0_36 = arith.constant 0 : index
    %c3 = arith.constant 3 : index
    %64 = vector.load %arg3[%c0_35, %c0_36, %c3] : memref<1x32x8xf32, #tpu.memory_space<vmem>>, vector<1x32x1xf32>
    %65 = vector.shape_cast %64 : vector<1x32x1xf32> to vector<32x1xf32>
    %66 = vector.broadcast %65 : vector<32x1xf32> to vector<32x8xf32>
    %67 = arith.addf %63, %66 : vector<32x8xf32>
    %cst_37 = arith.constant 0.000000e+00 : f32
    %68 = vector.broadcast %cst_37 : f32 to vector<32x8xf32>
    %69 = arith.maximumf %67, %68 : vector<32x8xf32>
    %c0_38 = arith.constant 0 : index
    %c0_39 = arith.constant 0 : index
    %c768 = arith.constant 768 : index
    %70 = vector.load %arg4[%c0_38, %c0_39, %c768] : memref<1x32x1152xf32, #tpu.memory_space<vmem>>, vector<1x32x8xf32>
    %71 = vector.shape_cast %70 : vector<1x32x8xf32> to vector<32x8xf32>
    %72 = vector.shape_cast %69 : vector<32x8xf32> to vector<1x32x8xf32>
    tpu.vector_store %arg4[%c0_38, %c0_39, %c768], %72 {strides = array<i32>} : memref<1x32x1152xf32, #tpu.memory_space<vmem>>, vector<1x32x8xf32>,
    %73 = vector.extract_strided_slice %69 {offsets = [0, 0], sizes = [32, 2], strides = [1, 1]} : vector<32x8xf32> to vector<32x2xf32>
    %74 = vector.extract_strided_slice %69 {offsets = [0, 2], sizes = [32, 2], strides = [1, 1]} : vector<32x8xf32> to vector<32x2xf32>
    %75 = vector.extract_strided_slice %69 {offsets = [0, 4], sizes = [32, 2], strides = [1, 1]} : vector<32x8xf32> to vector<32x2xf32>
    %76 = vector.extract_strided_slice %69 {offsets = [0, 6], sizes = [32, 2], strides = [1, 1]} : vector<32x8xf32> to vector<32x2xf32>
    %77 = tpu.concatenate %73, %74, %75, %76 in 0 : vector<32x2xf32>, vector<32x2xf32>, vector<32x2xf32>, vector<32x2xf32> -> vector<128x2xf32>
    %78 = arith.truncf %77 : vector<128x2xf32> to vector<128x2xbf16>
    %c0_40 = arith.constant 0 : index
    %c0_41 = arith.constant 0 : index
    %c512_42 = arith.constant 512 : index
    %79 = vector.load %arg2[%c0_40, %c0_41, %c512_42] : memref<1x32x768xbf16, #tpu.memory_space<vmem>>, vector<1x32x128xbf16>
    %80 = vector.shape_cast %79 : vector<1x32x128xbf16> to vector<32x128xbf16>
    %cst_43 = arith.constant dense<0.000000e+00> : vector<32x2xf32>
    %81 = tpu.matmul %80, %78, %cst_43 {dimension_numbers = #tpu.dot_dimension_numbers<[1], [0], [0], [1], [0, 0, 1, 1], [], []>} : vector<32x128xbf16>, vector<128x2xbf16>, vector<32x2xf32> -> vector<32x2xf32>
    %c0_44 = arith.constant 0 : index
    %c0_45 = arith.constant 0 : index
    %c4 = arith.constant 4 : index
    %82 = vector.load %arg3[%c0_44, %c0_45, %c4] : memref<1x32x8xf32, #tpu.memory_space<vmem>>, vector<1x32x1xf32>
    %83 = vector.shape_cast %82 : vector<1x32x1xf32> to vector<32x1xf32>
    %84 = vector.broadcast %83 : vector<32x1xf32> to vector<32x2xf32>
    %85 = arith.addf %81, %84 : vector<32x2xf32>
    %cst_46 = arith.constant 0.000000e+00 : f32
    %86 = vector.broadcast %cst_46 : f32 to vector<32x2xf32>
    %87 = arith.maximumf %85, %86 : vector<32x2xf32>
    %c0_47 = arith.constant 0 : index
    %c0_48 = arith.constant 0 : index
    %c896 = arith.constant 896 : index
    %88 = vector.load %arg4[%c0_47, %c0_48, %c896] : memref<1x32x1152xf32, #tpu.memory_space<vmem>>, vector<1x32x2xf32>
    %89 = vector.shape_cast %88 : vector<1x32x2xf32> to vector<32x2xf32>
    %90 = vector.shape_cast %87 : vector<32x2xf32> to vector<1x32x2xf32>
    tpu.vector_store %arg4[%c0_47, %c0_48, %c896], %90 {strides = array<i32>} : memref<1x32x1152xf32, #tpu.memory_space<vmem>>, vector<1x32x2xf32>,
    %c0_49 = arith.constant 0 : index
    %c0_50 = arith.constant 0 : index
    %c640_51 = arith.constant 640 : index
    %91 = vector.load %arg2[%c0_49, %c0_50, %c640_51] : memref<1x32x768xbf16, #tpu.memory_space<vmem>>, vector<1x32x32xbf16>
    %92 = vector.shape_cast %91 : vector<1x32x32xbf16> to vector<32x32xbf16>
    %93 = arith.truncf %87 : vector<32x2xf32> to vector<32x2xbf16>
    %cst_52 = arith.constant dense<0.000000e+00> : vector<32x2xf32>
    %94 = tpu.matmul %92, %93, %cst_52 {dimension_numbers = #tpu.dot_dimension_numbers<[1], [0], [0], [1], [0, 0, 1, 1], [], []>} : vector<32x32xbf16>, vector<32x2xbf16>, vector<32x2xf32> -> vector<32x2xf32>
    %c0_53 = arith.constant 0 : index
    %c0_54 = arith.constant 0 : index
    %c5 = arith.constant 5 : index
    %95 = vector.load %arg3[%c0_53, %c0_54, %c5] : memref<1x32x8xf32, #tpu.memory_space<vmem>>, vector<1x32x1xf32>
    %96 = vector.shape_cast %95 : vector<1x32x1xf32> to vector<32x1xf32>
    %97 = vector.broadcast %96 : vector<32x1xf32> to vector<32x2xf32>
    %98 = arith.addf %94, %97 : vector<32x2xf32>
    %c0_55 = arith.constant 0 : index
    %c0_56 = arith.constant 0 : index
    %c1024 = arith.constant 1024 : index
    %99 = vector.load %arg4[%c0_55, %c0_56, %c1024] : memref<1x32x1152xf32, #tpu.memory_space<vmem>>, vector<1x32x2xf32>
    %100 = vector.shape_cast %99 : vector<1x32x2xf32> to vector<32x2xf32>
    %101 = vector.shape_cast %98 : vector<32x2xf32> to vector<1x32x2xf32>
    tpu.vector_store %arg4[%c0_55, %c0_56, %c1024], %101 {strides = array<i32>} : memref<1x32x1152xf32, #tpu.memory_space<vmem>>, vector<1x32x2xf32>,
    return
  }
  func.func @transform_0(%arg0: i32) -> (i32, i32, i32) {
    %c0_i32 = arith.constant 0 : i32
    %c0_i32_0 = arith.constant 0 : i32
    %c0_i32_1 = arith.constant 0 : i32
    return %arg0, %c0_i32, %c0_i32_0 : i32, i32, i32
  }
  func.func @transform_1(%arg0: i32) -> (i32, i32, i32) {
    %c0_i32 = arith.constant 0 : i32
    %c0_i32_0 = arith.constant 0 : i32
    %c0_i32_1 = arith.constant 0 : i32
    return %arg0, %c0_i32, %c0_i32_0 : i32, i32, i32
  }
  func.func @transform_2(%arg0: i32) -> (i32, i32, i32) {
    %c0_i32 = arith.constant 0 : i32
    %c0_i32_0 = arith.constant 0 : i32
    %c0_i32_1 = arith.constant 0 : i32
    return %arg0, %c0_i32, %c0_i32_0 : i32, i32, i32
  }
  func.func @transform_3(%arg0: i32) -> (i32, i32, i32) {
    %c0_i32 = arith.constant 0 : i32
    %c0_i32_0 = arith.constant 0 : i32
    %c0_i32_1 = arith.constant 0 : i32
    return %arg0, %c0_i32, %c0_i32_0 : i32, i32, i32
  }
}

module attributes {stable_mosaic.version = 11 : i64} {
  func.func @_decoder_kernel(%arg0: i32, %arg1: memref<1xf32, #tpu.memory_space<smem>>, %arg2: memref<2x32x1152xf32, #tpu.memory_space<vmem>>, %arg3: memref<1x4x512xf32, #tpu.memory_space<vmem>>, %arg4: memref<4x128x32xbf16, #tpu.memory_space<vmem>>, %arg5: memref<4x2x32x32xbf16, #tpu.memory_space<vmem>>, %arg6: memref<4x128x8xf32, #tpu.memory_space<vmem>>, %arg7: memref<8x16xf32, #tpu.memory_space<vmem>>, %arg8: memref<1x4x512xf32, #tpu.memory_space<vmem>>) attributes {dimension_semantics = [#tpu.dimension_semantics<parallel>], iteration_bounds = array<i64: 3>, scalar_prefetch = 0 : i64, scratch_operands = 0 : i64, tpu.core_type = #tpu.core_type<tc>, window_params = [{transform_indices = @transform_0, window_bounds = array<i64: 1>}, {pipeline_mode = #tpu.pipeline_mode<synchronous>, transform_indices = @transform_1, window_bounds = array<i64: 2, 32, 1152>}, {transform_indices = @transform_2, window_bounds = array<i64: 1, 4, 512>}, {pipeline_mode = #tpu.pipeline_mode<synchronous>, transform_indices = @transform_3, window_bounds = array<i64: 4, 128, 32>}, {pipeline_mode = #tpu.pipeline_mode<synchronous>, transform_indices = @transform_4, window_bounds = array<i64: 4, 2, 32, 32>}, {pipeline_mode = #tpu.pipeline_mode<synchronous>, transform_indices = @transform_5, window_bounds = array<i64: 4, 128, 8>}, {pipeline_mode = #tpu.pipeline_mode<synchronous>, transform_indices = @transform_6, window_bounds = array<i64: 8, 16>}, {transform_indices = @transform_7, window_bounds = array<i64: 1, 4, 512>}]} {
    %c0 = arith.constant 0 : index
    %0 = memref.load %arg1[%c0] : memref<1xf32, #tpu.memory_space<smem>>
    %c0_i32 = arith.constant 0 : i32
    %1 = arith.cmpi eq, %arg0, %c0_i32 : i32
    %c1_i32 = arith.constant 1 : i32
    %2 = arith.cmpi eq, %arg0, %c1_i32 : i32
    %cst = arith.constant 0.000000e+00 : f32
    %3 = arith.select %2, %cst, %0 : f32
    %cst_0 = arith.constant 1.000000e+00 : f32
    %4 = arith.select %1, %cst_0, %3 : f32
    %cst_1 = arith.constant 1.000000e+00 : f32
    %5 = arith.subf %cst_1, %4 : f32
    %c0_2 = arith.constant 0 : index
    %c0_3 = arith.constant 0 : index
    %c896 = arith.constant 896 : index
    %6 = vector.load %arg2[%c0_2, %c0_3, %c896] : memref<2x32x1152xf32, #tpu.memory_space<vmem>>, vector<1x32x2xf32>
    %7 = vector.shape_cast %6 : vector<1x32x2xf32> to vector<32x2xf32>
    %c1 = arith.constant 1 : index
    %c0_4 = arith.constant 0 : index
    %c896_5 = arith.constant 896 : index
    %8 = vector.load %arg2[%c1, %c0_4, %c896_5] : memref<2x32x1152xf32, #tpu.memory_space<vmem>>, vector<1x32x2xf32>
    %9 = vector.shape_cast %8 : vector<1x32x2xf32> to vector<32x2xf32>
    %10 = vector.broadcast %4 : f32 to vector<32x2xf32>
    %11 = arith.mulf %10, %7 : vector<32x2xf32>
    %12 = vector.broadcast %5 : f32 to vector<32x2xf32>
    %13 = arith.mulf %12, %9 : vector<32x2xf32>
    %14 = arith.addf %11, %13 : vector<32x2xf32>
    %c0_6 = arith.constant 0 : index
    %c0_7 = arith.constant 0 : index
    %c0_8 = arith.constant 0 : index
    %15 = vector.load %arg4[%c0_6, %c0_7, %c0_8] : memref<4x128x32xbf16, #tpu.memory_space<vmem>>, vector<1x128x32xbf16>
    %16 = vector.shape_cast %15 : vector<1x128x32xbf16> to vector<128x32xbf16>
    %c0_9 = arith.constant 0 : index
    %c0_10 = arith.constant 0 : index
    %c0_11 = arith.constant 0 : index
    %17 = vector.load %arg6[%c0_9, %c0_10, %c0_11] : memref<4x128x8xf32, #tpu.memory_space<vmem>>, vector<1x128x1xf32>
    %18 = vector.shape_cast %17 : vector<1x128x1xf32> to vector<128x1xf32>
    %19 = arith.truncf %14 : vector<32x2xf32> to vector<32x2xbf16>
    %cst_12 = arith.constant dense<0.000000e+00> : vector<128x2xf32>
    %20 = tpu.matmul %16, %19, %cst_12 {dimension_numbers = #tpu.dot_dimension_numbers<[1], [0], [0], [1], [0, 0, 1, 1], [], []>} : vector<128x32xbf16>, vector<32x2xbf16>, vector<128x2xf32> -> vector<128x2xf32>
    %21 = vector.broadcast %18 : vector<128x1xf32> to vector<128x2xf32>
    %22 = arith.addf %20, %21 : vector<128x2xf32>
    %cst_13 = arith.constant 0.000000e+00 : f32
    %23 = vector.broadcast %cst_13 : f32 to vector<128x2xf32>
    %24 = arith.maximumf %22, %23 : vector<128x2xf32>
    %c0_14 = arith.constant 0 : index
    %c0_15 = arith.constant 0 : index
    %c768 = arith.constant 768 : index
    %25 = vector.load %arg2[%c0_14, %c0_15, %c768] : memref<2x32x1152xf32, #tpu.memory_space<vmem>>, vector<1x32x8xf32>
    %26 = vector.shape_cast %25 : vector<1x32x8xf32> to vector<32x8xf32>
    %c1_16 = arith.constant 1 : index
    %c0_17 = arith.constant 0 : index
    %c768_18 = arith.constant 768 : index
    %27 = vector.load %arg2[%c1_16, %c0_17, %c768_18] : memref<2x32x1152xf32, #tpu.memory_space<vmem>>, vector<1x32x8xf32>
    %28 = vector.shape_cast %27 : vector<1x32x8xf32> to vector<32x8xf32>
    %29 = vector.broadcast %4 : f32 to vector<32x8xf32>
    %30 = arith.mulf %29, %26 : vector<32x8xf32>
    %31 = vector.broadcast %5 : f32 to vector<32x8xf32>
    %32 = arith.mulf %31, %28 : vector<32x8xf32>
    %33 = arith.addf %30, %32 : vector<32x8xf32>
    %34 = arith.truncf %33 : vector<32x8xf32> to vector<32x8xbf16>
    %c0_19 = arith.constant 0 : index
    %c1_20 = arith.constant 1 : index
    %c0_21 = arith.constant 0 : index
    %c0_22 = arith.constant 0 : index
    %35 = vector.load %arg5[%c0_19, %c1_20, %c0_21, %c0_22] : memref<4x2x32x32xbf16, #tpu.memory_space<vmem>>, vector<1x1x32x32xbf16>
    %36 = vector.shape_cast %35 : vector<1x1x32x32xbf16> to vector<32x32xbf16>
    %cst_23 = arith.constant dense<0.000000e+00> : vector<32x8xf32>
    %37 = tpu.matmul %36, %34, %cst_23 {dimension_numbers = #tpu.dot_dimension_numbers<[1], [0], [0], [1], [0, 0, 1, 1], [], []>} : vector<32x32xbf16>, vector<32x8xbf16>, vector<32x8xf32> -> vector<32x8xf32>
    %c0_24 = arith.constant 0 : index
    %c0_25 = arith.constant 0 : index
    %c0_26 = arith.constant 0 : index
    %c0_27 = arith.constant 0 : index
    %38 = vector.load %arg5[%c0_24, %c0_25, %c0_26, %c0_27] : memref<4x2x32x32xbf16, #tpu.memory_space<vmem>>, vector<1x1x32x32xbf16>
    %39 = vector.shape_cast %38 : vector<1x1x32x32xbf16> to vector<32x32xbf16>
    %c0_28 = arith.constant 0 : index
    %c0_29 = arith.constant 0 : index
    %c1_30 = arith.constant 1 : index
    %40 = vector.load %arg6[%c0_28, %c0_29, %c1_30] : memref<4x128x8xf32, #tpu.memory_space<vmem>>, vector<1x32x1xf32>
    %41 = vector.shape_cast %40 : vector<1x32x1xf32> to vector<32x1xf32>
    %42 = vector.extract_strided_slice %24 {offsets = [0, 0], sizes = [32, 2], strides = [1, 1]} : vector<128x2xf32> to vector<32x2xf32>
    %43 = arith.truncf %42 : vector<32x2xf32> to vector<32x2xbf16>
    %cst_31 = arith.constant dense<0.000000e+00> : vector<32x2xf32>
    %44 = tpu.matmul %39, %43, %cst_31 {dimension_numbers = #tpu.dot_dimension_numbers<[1], [0], [0], [1], [0, 0, 1, 1], [], []>} : vector<32x32xbf16>, vector<32x2xbf16>, vector<32x2xf32> -> vector<32x2xf32>
    %45 = vector.extract_strided_slice %37 {offsets = [0, 0], sizes = [32, 2], strides = [1, 1]} : vector<32x8xf32> to vector<32x2xf32>
    %46 = arith.addf %44, %45 : vector<32x2xf32>
    %47 = vector.broadcast %41 : vector<32x1xf32> to vector<32x2xf32>
    %48 = arith.addf %46, %47 : vector<32x2xf32>
    %cst_32 = arith.constant 0.000000e+00 : f32
    %49 = vector.broadcast %cst_32 : f32 to vector<32x2xf32>
    %50 = arith.maximumf %48, %49 : vector<32x2xf32>
    %51 = vector.extract_strided_slice %24 {offsets = [32, 0], sizes = [32, 2], strides = [1, 1]} : vector<128x2xf32> to vector<32x2xf32>
    %52 = arith.truncf %51 : vector<32x2xf32> to vector<32x2xbf16>
    %cst_33 = arith.constant dense<0.000000e+00> : vector<32x2xf32>
    %53 = tpu.matmul %39, %52, %cst_33 {dimension_numbers = #tpu.dot_dimension_numbers<[1], [0], [0], [1], [0, 0, 1, 1], [], []>} : vector<32x32xbf16>, vector<32x2xbf16>, vector<32x2xf32> -> vector<32x2xf32>
    %54 = vector.extract_strided_slice %37 {offsets = [0, 2], sizes = [32, 2], strides = [1, 1]} : vector<32x8xf32> to vector<32x2xf32>
    %55 = arith.addf %53, %54 : vector<32x2xf32>
    %56 = vector.broadcast %41 : vector<32x1xf32> to vector<32x2xf32>
    %57 = arith.addf %55, %56 : vector<32x2xf32>
    %cst_34 = arith.constant 0.000000e+00 : f32
    %58 = vector.broadcast %cst_34 : f32 to vector<32x2xf32>
    %59 = arith.maximumf %57, %58 : vector<32x2xf32>
    %60 = vector.extract_strided_slice %24 {offsets = [64, 0], sizes = [32, 2], strides = [1, 1]} : vector<128x2xf32> to vector<32x2xf32>
    %61 = arith.truncf %60 : vector<32x2xf32> to vector<32x2xbf16>
    %cst_35 = arith.constant dense<0.000000e+00> : vector<32x2xf32>
    %62 = tpu.matmul %39, %61, %cst_35 {dimension_numbers = #tpu.dot_dimension_numbers<[1], [0], [0], [1], [0, 0, 1, 1], [], []>} : vector<32x32xbf16>, vector<32x2xbf16>, vector<32x2xf32> -> vector<32x2xf32>
    %63 = vector.extract_strided_slice %37 {offsets = [0, 4], sizes = [32, 2], strides = [1, 1]} : vector<32x8xf32> to vector<32x2xf32>
    %64 = arith.addf %62, %63 : vector<32x2xf32>
    %65 = vector.broadcast %41 : vector<32x1xf32> to vector<32x2xf32>
    %66 = arith.addf %64, %65 : vector<32x2xf32>
    %cst_36 = arith.constant 0.000000e+00 : f32
    %67 = vector.broadcast %cst_36 : f32 to vector<32x2xf32>
    %68 = arith.maximumf %66, %67 : vector<32x2xf32>
    %69 = vector.extract_strided_slice %24 {offsets = [96, 0], sizes = [32, 2], strides = [1, 1]} : vector<128x2xf32> to vector<32x2xf32>
    %70 = arith.truncf %69 : vector<32x2xf32> to vector<32x2xbf16>
    %cst_37 = arith.constant dense<0.000000e+00> : vector<32x2xf32>
    %71 = tpu.matmul %39, %70, %cst_37 {dimension_numbers = #tpu.dot_dimension_numbers<[1], [0], [0], [1], [0, 0, 1, 1], [], []>} : vector<32x32xbf16>, vector<32x2xbf16>, vector<32x2xf32> -> vector<32x2xf32>
    %72 = vector.extract_strided_slice %37 {offsets = [0, 6], sizes = [32, 2], strides = [1, 1]} : vector<32x8xf32> to vector<32x2xf32>
    %73 = arith.addf %71, %72 : vector<32x2xf32>
    %74 = vector.broadcast %41 : vector<32x1xf32> to vector<32x2xf32>
    %75 = arith.addf %73, %74 : vector<32x2xf32>
    %cst_38 = arith.constant 0.000000e+00 : f32
    %76 = vector.broadcast %cst_38 : f32 to vector<32x2xf32>
    %77 = arith.maximumf %75, %76 : vector<32x2xf32>
    %78 = tpu.concatenate %50, %59, %68, %77 in 1 : vector<32x2xf32>, vector<32x2xf32>, vector<32x2xf32>, vector<32x2xf32> -> vector<32x8xf32>
    %c1_39 = arith.constant 1 : index
    %c0_40 = arith.constant 0 : index
    %c0_41 = arith.constant 0 : index
    %79 = vector.load %arg4[%c1_39, %c0_40, %c0_41] : memref<4x128x32xbf16, #tpu.memory_space<vmem>>, vector<1x64x32xbf16>
    %80 = vector.shape_cast %79 : vector<1x64x32xbf16> to vector<64x32xbf16>
    %c1_42 = arith.constant 1 : index
    %c0_43 = arith.constant 0 : index
    %c0_44 = arith.constant 0 : index
    %81 = vector.load %arg6[%c1_42, %c0_43, %c0_44] : memref<4x128x8xf32, #tpu.memory_space<vmem>>, vector<1x64x1xf32>
    %82 = vector.shape_cast %81 : vector<1x64x1xf32> to vector<64x1xf32>
    %83 = arith.truncf %78 : vector<32x8xf32> to vector<32x8xbf16>
    %cst_45 = arith.constant dense<0.000000e+00> : vector<64x8xf32>
    %84 = tpu.matmul %80, %83, %cst_45 {dimension_numbers = #tpu.dot_dimension_numbers<[1], [0], [0], [1], [0, 0, 1, 1], [], []>} : vector<64x32xbf16>, vector<32x8xbf16>, vector<64x8xf32> -> vector<64x8xf32>
    %85 = vector.broadcast %82 : vector<64x1xf32> to vector<64x8xf32>
    %86 = arith.addf %84, %85 : vector<64x8xf32>
    %cst_46 = arith.constant 0.000000e+00 : f32
    %87 = vector.broadcast %cst_46 : f32 to vector<64x8xf32>
    %88 = arith.maximumf %86, %87 : vector<64x8xf32>
    %c0_47 = arith.constant 0 : index
    %c0_48 = arith.constant 0 : index
    %c640 = arith.constant 640 : index
    %89 = vector.load %arg2[%c0_47, %c0_48, %c640] : memref<2x32x1152xf32, #tpu.memory_space<vmem>>, vector<1x16x32xf32>
    %90 = vector.shape_cast %89 : vector<1x16x32xf32> to vector<16x32xf32>
    %c1_49 = arith.constant 1 : index
    %c0_50 = arith.constant 0 : index
    %c640_51 = arith.constant 640 : index
    %91 = vector.load %arg2[%c1_49, %c0_50, %c640_51] : memref<2x32x1152xf32, #tpu.memory_space<vmem>>, vector<1x16x32xf32>
    %92 = vector.shape_cast %91 : vector<1x16x32xf32> to vector<16x32xf32>
    %93 = vector.broadcast %4 : f32 to vector<16x32xf32>
    %94 = arith.mulf %93, %90 : vector<16x32xf32>
    %95 = vector.broadcast %5 : f32 to vector<16x32xf32>
    %96 = arith.mulf %95, %92 : vector<16x32xf32>
    %97 = arith.addf %94, %96 : vector<16x32xf32>
    %98 = arith.truncf %97 : vector<16x32xf32> to vector<16x32xbf16>
    %c1_52 = arith.constant 1 : index
    %c1_53 = arith.constant 1 : index
    %c0_54 = arith.constant 0 : index
    %c0_55 = arith.constant 0 : index
    %99 = vector.load %arg5[%c1_52, %c1_53, %c0_54, %c0_55] : memref<4x2x32x32xbf16, #tpu.memory_space<vmem>>, vector<1x1x16x16xbf16>
    %100 = vector.shape_cast %99 : vector<1x1x16x16xbf16> to vector<16x16xbf16>
    %cst_56 = arith.constant dense<0.000000e+00> : vector<16x32xf32>
    %101 = tpu.matmul %100, %98, %cst_56 {dimension_numbers = #tpu.dot_dimension_numbers<[1], [0], [0], [1], [0, 0, 1, 1], [], []>} : vector<16x16xbf16>, vector<16x32xbf16>, vector<16x32xf32> -> vector<16x32xf32>
    %c1_57 = arith.constant 1 : index
    %c0_58 = arith.constant 0 : index
    %c0_59 = arith.constant 0 : index
    %c0_60 = arith.constant 0 : index
    %102 = vector.load %arg5[%c1_57, %c0_58, %c0_59, %c0_60] : memref<4x2x32x32xbf16, #tpu.memory_space<vmem>>, vector<1x1x16x16xbf16>
    %103 = vector.shape_cast %102 : vector<1x1x16x16xbf16> to vector<16x16xbf16>
    %c1_61 = arith.constant 1 : index
    %c0_62 = arith.constant 0 : index
    %c1_63 = arith.constant 1 : index
    %104 = vector.load %arg6[%c1_61, %c0_62, %c1_63] : memref<4x128x8xf32, #tpu.memory_space<vmem>>, vector<1x16x1xf32>
    %105 = vector.shape_cast %104 : vector<1x16x1xf32> to vector<16x1xf32>
    %106 = vector.extract_strided_slice %88 {offsets = [0, 0], sizes = [16, 8], strides = [1, 1]} : vector<64x8xf32> to vector<16x8xf32>
    %107 = arith.truncf %106 : vector<16x8xf32> to vector<16x8xbf16>
    %cst_64 = arith.constant dense<0.000000e+00> : vector<16x8xf32>
    %108 = tpu.matmul %103, %107, %cst_64 {dimension_numbers = #tpu.dot_dimension_numbers<[1], [0], [0], [1], [0, 0, 1, 1], [], []>} : vector<16x16xbf16>, vector<16x8xbf16>, vector<16x8xf32> -> vector<16x8xf32>
    %109 = vector.extract_strided_slice %101 {offsets = [0, 0], sizes = [16, 8], strides = [1, 1]} : vector<16x32xf32> to vector<16x8xf32>
    %110 = arith.addf %108, %109 : vector<16x8xf32>
    %111 = vector.broadcast %105 : vector<16x1xf32> to vector<16x8xf32>
    %112 = arith.addf %110, %111 : vector<16x8xf32>
    %cst_65 = arith.constant 0.000000e+00 : f32
    %113 = vector.broadcast %cst_65 : f32 to vector<16x8xf32>
    %114 = arith.maximumf %112, %113 : vector<16x8xf32>
    %115 = vector.extract_strided_slice %88 {offsets = [16, 0], sizes = [16, 8], strides = [1, 1]} : vector<64x8xf32> to vector<16x8xf32>
    %116 = arith.truncf %115 : vector<16x8xf32> to vector<16x8xbf16>
    %cst_66 = arith.constant dense<0.000000e+00> : vector<16x8xf32>
    %117 = tpu.matmul %103, %116, %cst_66 {dimension_numbers = #tpu.dot_dimension_numbers<[1], [0], [0], [1], [0, 0, 1, 1], [], []>} : vector<16x16xbf16>, vector<16x8xbf16>, vector<16x8xf32> -> vector<16x8xf32>
    %118 = vector.extract_strided_slice %101 {offsets = [0, 8], sizes = [16, 8], strides = [1, 1]} : vector<16x32xf32> to vector<16x8xf32>
    %119 = arith.addf %117, %118 : vector<16x8xf32>
    %120 = vector.broadcast %105 : vector<16x1xf32> to vector<16x8xf32>
    %121 = arith.addf %119, %120 : vector<16x8xf32>
    %cst_67 = arith.constant 0.000000e+00 : f32
    %122 = vector.broadcast %cst_67 : f32 to vector<16x8xf32>
    %123 = arith.maximumf %121, %122 : vector<16x8xf32>
    %124 = vector.extract_strided_slice %88 {offsets = [32, 0], sizes = [16, 8], strides = [1, 1]} : vector<64x8xf32> to vector<16x8xf32>
    %125 = arith.truncf %124 : vector<16x8xf32> to vector<16x8xbf16>
    %cst_68 = arith.constant dense<0.000000e+00> : vector<16x8xf32>
    %126 = tpu.matmul %103, %125, %cst_68 {dimension_numbers = #tpu.dot_dimension_numbers<[1], [0], [0], [1], [0, 0, 1, 1], [], []>} : vector<16x16xbf16>, vector<16x8xbf16>, vector<16x8xf32> -> vector<16x8xf32>
    %127 = vector.extract_strided_slice %101 {offsets = [0, 16], sizes = [16, 8], strides = [1, 1]} : vector<16x32xf32> to vector<16x8xf32>
    %128 = arith.addf %126, %127 : vector<16x8xf32>
    %129 = vector.broadcast %105 : vector<16x1xf32> to vector<16x8xf32>
    %130 = arith.addf %128, %129 : vector<16x8xf32>
    %cst_69 = arith.constant 0.000000e+00 : f32
    %131 = vector.broadcast %cst_69 : f32 to vector<16x8xf32>
    %132 = arith.maximumf %130, %131 : vector<16x8xf32>
    %133 = vector.extract_strided_slice %88 {offsets = [48, 0], sizes = [16, 8], strides = [1, 1]} : vector<64x8xf32> to vector<16x8xf32>
    %134 = arith.truncf %133 : vector<16x8xf32> to vector<16x8xbf16>
    %cst_70 = arith.constant dense<0.000000e+00> : vector<16x8xf32>
    %135 = tpu.matmul %103, %134, %cst_70 {dimension_numbers = #tpu.dot_dimension_numbers<[1], [0], [0], [1], [0, 0, 1, 1], [], []>} : vector<16x16xbf16>, vector<16x8xbf16>, vector<16x8xf32> -> vector<16x8xf32>
    %136 = vector.extract_strided_slice %101 {offsets = [0, 24], sizes = [16, 8], strides = [1, 1]} : vector<16x32xf32> to vector<16x8xf32>
    %137 = arith.addf %135, %136 : vector<16x8xf32>
    %138 = vector.broadcast %105 : vector<16x1xf32> to vector<16x8xf32>
    %139 = arith.addf %137, %138 : vector<16x8xf32>
    %cst_71 = arith.constant 0.000000e+00 : f32
    %140 = vector.broadcast %cst_71 : f32 to vector<16x8xf32>
    %141 = arith.maximumf %139, %140 : vector<16x8xf32>
    %142 = tpu.concatenate %114, %123, %132, %141 in 1 : vector<16x8xf32>, vector<16x8xf32>, vector<16x8xf32>, vector<16x8xf32> -> vector<16x32xf32>
    %c2 = arith.constant 2 : index
    %c0_72 = arith.constant 0 : index
    %c0_73 = arith.constant 0 : index
    %143 = vector.load %arg4[%c2, %c0_72, %c0_73] : memref<4x128x32xbf16, #tpu.memory_space<vmem>>, vector<1x64x16xbf16>
    %144 = vector.shape_cast %143 : vector<1x64x16xbf16> to vector<64x16xbf16>
    %c2_74 = arith.constant 2 : index
    %c0_75 = arith.constant 0 : index
    %c0_76 = arith.constant 0 : index
    %145 = vector.load %arg6[%c2_74, %c0_75, %c0_76] : memref<4x128x8xf32, #tpu.memory_space<vmem>>, vector<1x64x1xf32>
    %146 = vector.shape_cast %145 : vector<1x64x1xf32> to vector<64x1xf32>
    %147 = arith.truncf %142 : vector<16x32xf32> to vector<16x32xbf16>
    %cst_77 = arith.constant dense<0.000000e+00> : vector<64x32xf32>
    %148 = tpu.matmul %144, %147, %cst_77 {dimension_numbers = #tpu.dot_dimension_numbers<[1], [0], [0], [1], [0, 0, 1, 1], [], []>} : vector<64x16xbf16>, vector<16x32xbf16>, vector<64x32xf32> -> vector<64x32xf32>
    %149 = vector.broadcast %146 : vector<64x1xf32> to vector<64x32xf32>
    %150 = arith.addf %148, %149 : vector<64x32xf32>
    %cst_78 = arith.constant 0.000000e+00 : f32
    %151 = vector.broadcast %cst_78 : f32 to vector<64x32xf32>
    %152 = arith.maximumf %150, %151 : vector<64x32xf32>
    %c0_79 = arith.constant 0 : index
    %c0_80 = arith.constant 0 : index
    %c512 = arith.constant 512 : index
    %153 = vector.load %arg2[%c0_79, %c0_80, %c512] : memref<2x32x1152xf32, #tpu.memory_space<vmem>>, vector<1x16x128xf32>
    %154 = vector.shape_cast %153 : vector<1x16x128xf32> to vector<16x128xf32>
    %c1_81 = arith.constant 1 : index
    %c0_82 = arith.constant 0 : index
    %c512_83 = arith.constant 512 : index
    %155 = vector.load %arg2[%c1_81, %c0_82, %c512_83] : memref<2x32x1152xf32, #tpu.memory_space<vmem>>, vector<1x16x128xf32>
    %156 = vector.shape_cast %155 : vector<1x16x128xf32> to vector<16x128xf32>
    %157 = vector.broadcast %4 : f32 to vector<16x128xf32>
    %158 = arith.mulf %157, %154 : vector<16x128xf32>
    %159 = vector.broadcast %5 : f32 to vector<16x128xf32>
    %160 = arith.mulf %159, %156 : vector<16x128xf32>
    %161 = arith.addf %158, %160 : vector<16x128xf32>
    %162 = arith.truncf %161 : vector<16x128xf32> to vector<16x128xbf16>
    %c2_84 = arith.constant 2 : index
    %c1_85 = arith.constant 1 : index
    %c0_86 = arith.constant 0 : index
    %c0_87 = arith.constant 0 : index
    %163 = vector.load %arg5[%c2_84, %c1_85, %c0_86, %c0_87] : memref<4x2x32x32xbf16, #tpu.memory_space<vmem>>, vector<1x1x16x16xbf16>
    %164 = vector.shape_cast %163 : vector<1x1x16x16xbf16> to vector<16x16xbf16>
    %cst_88 = arith.constant dense<0.000000e+00> : vector<16x128xf32>
    %165 = tpu.matmul %164, %162, %cst_88 {dimension_numbers = #tpu.dot_dimension_numbers<[1], [0], [0], [1], [0, 0, 1, 1], [], []>} : vector<16x16xbf16>, vector<16x128xbf16>, vector<16x128xf32> -> vector<16x128xf32>
    %c2_89 = arith.constant 2 : index
    %c0_90 = arith.constant 0 : index
    %c0_91 = arith.constant 0 : index
    %c0_92 = arith.constant 0 : index
    %166 = vector.load %arg5[%c2_89, %c0_90, %c0_91, %c0_92] : memref<4x2x32x32xbf16, #tpu.memory_space<vmem>>, vector<1x1x16x16xbf16>
    %167 = vector.shape_cast %166 : vector<1x1x16x16xbf16> to vector<16x16xbf16>
    %c2_93 = arith.constant 2 : index
    %c0_94 = arith.constant 0 : index
    %c1_95 = arith.constant 1 : index
    %168 = vector.load %arg6[%c2_93, %c0_94, %c1_95] : memref<4x128x8xf32, #tpu.memory_space<vmem>>, vector<1x16x1xf32>
    %169 = vector.shape_cast %168 : vector<1x16x1xf32> to vector<16x1xf32>
    %170 = vector.extract_strided_slice %152 {offsets = [0, 0], sizes = [16, 32], strides = [1, 1]} : vector<64x32xf32> to vector<16x32xf32>
    %171 = arith.truncf %170 : vector<16x32xf32> to vector<16x32xbf16>
    %cst_96 = arith.constant dense<0.000000e+00> : vector<16x32xf32>
    %172 = tpu.matmul %167, %171, %cst_96 {dimension_numbers = #tpu.dot_dimension_numbers<[1], [0], [0], [1], [0, 0, 1, 1], [], []>} : vector<16x16xbf16>, vector<16x32xbf16>, vector<16x32xf32> -> vector<16x32xf32>
    %173 = vector.extract_strided_slice %165 {offsets = [0, 0], sizes = [16, 32], strides = [1, 1]} : vector<16x128xf32> to vector<16x32xf32>
    %174 = arith.addf %172, %173 : vector<16x32xf32>
    %175 = vector.broadcast %169 : vector<16x1xf32> to vector<16x32xf32>
    %176 = arith.addf %174, %175 : vector<16x32xf32>
    %cst_97 = arith.constant 0.000000e+00 : f32
    %177 = vector.broadcast %cst_97 : f32 to vector<16x32xf32>
    %178 = arith.maximumf %176, %177 : vector<16x32xf32>
    %179 = vector.extract_strided_slice %152 {offsets = [16, 0], sizes = [16, 32], strides = [1, 1]} : vector<64x32xf32> to vector<16x32xf32>
    %180 = arith.truncf %179 : vector<16x32xf32> to vector<16x32xbf16>
    %cst_98 = arith.constant dense<0.000000e+00> : vector<16x32xf32>
    %181 = tpu.matmul %167, %180, %cst_98 {dimension_numbers = #tpu.dot_dimension_numbers<[1], [0], [0], [1], [0, 0, 1, 1], [], []>} : vector<16x16xbf16>, vector<16x32xbf16>, vector<16x32xf32> -> vector<16x32xf32>
    %182 = vector.extract_strided_slice %165 {offsets = [0, 32], sizes = [16, 32], strides = [1, 1]} : vector<16x128xf32> to vector<16x32xf32>
    %183 = arith.addf %181, %182 : vector<16x32xf32>
    %184 = vector.broadcast %169 : vector<16x1xf32> to vector<16x32xf32>
    %185 = arith.addf %183, %184 : vector<16x32xf32>
    %cst_99 = arith.constant 0.000000e+00 : f32
    %186 = vector.broadcast %cst_99 : f32 to vector<16x32xf32>
    %187 = arith.maximumf %185, %186 : vector<16x32xf32>
    %188 = vector.extract_strided_slice %152 {offsets = [32, 0], sizes = [16, 32], strides = [1, 1]} : vector<64x32xf32> to vector<16x32xf32>
    %189 = arith.truncf %188 : vector<16x32xf32> to vector<16x32xbf16>
    %cst_100 = arith.constant dense<0.000000e+00> : vector<16x32xf32>
    %190 = tpu.matmul %167, %189, %cst_100 {dimension_numbers = #tpu.dot_dimension_numbers<[1], [0], [0], [1], [0, 0, 1, 1], [], []>} : vector<16x16xbf16>, vector<16x32xbf16>, vector<16x32xf32> -> vector<16x32xf32>
    %191 = vector.extract_strided_slice %165 {offsets = [0, 64], sizes = [16, 32], strides = [1, 1]} : vector<16x128xf32> to vector<16x32xf32>
    %192 = arith.addf %190, %191 : vector<16x32xf32>
    %193 = vector.broadcast %169 : vector<16x1xf32> to vector<16x32xf32>
    %194 = arith.addf %192, %193 : vector<16x32xf32>
    %cst_101 = arith.constant 0.000000e+00 : f32
    %195 = vector.broadcast %cst_101 : f32 to vector<16x32xf32>
    %196 = arith.maximumf %194, %195 : vector<16x32xf32>
    %197 = vector.extract_strided_slice %152 {offsets = [48, 0], sizes = [16, 32], strides = [1, 1]} : vector<64x32xf32> to vector<16x32xf32>
    %198 = arith.truncf %197 : vector<16x32xf32> to vector<16x32xbf16>
    %cst_102 = arith.constant dense<0.000000e+00> : vector<16x32xf32>
    %199 = tpu.matmul %167, %198, %cst_102 {dimension_numbers = #tpu.dot_dimension_numbers<[1], [0], [0], [1], [0, 0, 1, 1], [], []>} : vector<16x16xbf16>, vector<16x32xbf16>, vector<16x32xf32> -> vector<16x32xf32>
    %200 = vector.extract_strided_slice %165 {offsets = [0, 96], sizes = [16, 32], strides = [1, 1]} : vector<16x128xf32> to vector<16x32xf32>
    %201 = arith.addf %199, %200 : vector<16x32xf32>
    %202 = vector.broadcast %169 : vector<16x1xf32> to vector<16x32xf32>
    %203 = arith.addf %201, %202 : vector<16x32xf32>
    %cst_103 = arith.constant 0.000000e+00 : f32
    %204 = vector.broadcast %cst_103 : f32 to vector<16x32xf32>
    %205 = arith.maximumf %203, %204 : vector<16x32xf32>
    %206 = tpu.concatenate %178, %187, %196, %205 in 1 : vector<16x32xf32>, vector<16x32xf32>, vector<16x32xf32>, vector<16x32xf32> -> vector<16x128xf32>
    %c3 = arith.constant 3 : index
    %c0_104 = arith.constant 0 : index
    %c0_105 = arith.constant 0 : index
    %207 = vector.load %arg4[%c3, %c0_104, %c0_105] : memref<4x128x32xbf16, #tpu.memory_space<vmem>>, vector<1x32x16xbf16>
    %208 = vector.shape_cast %207 : vector<1x32x16xbf16> to vector<32x16xbf16>
    %c3_106 = arith.constant 3 : index
    %c0_107 = arith.constant 0 : index
    %c0_108 = arith.constant 0 : index
    %209 = vector.load %arg6[%c3_106, %c0_107, %c0_108] : memref<4x128x8xf32, #tpu.memory_space<vmem>>, vector<1x32x1xf32>
    %210 = vector.shape_cast %209 : vector<1x32x1xf32> to vector<32x1xf32>
    %211 = arith.truncf %206 : vector<16x128xf32> to vector<16x128xbf16>
    %cst_109 = arith.constant dense<0.000000e+00> : vector<32x128xf32>
    %212 = tpu.matmul %208, %211, %cst_109 {dimension_numbers = #tpu.dot_dimension_numbers<[1], [0], [0], [1], [0, 0, 1, 1], [], []>} : vector<32x16xbf16>, vector<16x128xbf16>, vector<32x128xf32> -> vector<32x128xf32>
    %213 = vector.broadcast %210 : vector<32x1xf32> to vector<32x128xf32>
    %214 = arith.addf %212, %213 : vector<32x128xf32>
    %cst_110 = arith.constant 0.000000e+00 : f32
    %215 = vector.broadcast %cst_110 : f32 to vector<32x128xf32>
    %216 = arith.maximumf %214, %215 : vector<32x128xf32>
    %c0_111 = arith.constant 0 : index
    %c0_112 = arith.constant 0 : index
    %c0_113 = arith.constant 0 : index
    %217 = vector.load %arg2[%c0_111, %c0_112, %c0_113] : memref<2x32x1152xf32, #tpu.memory_space<vmem>>, vector<1x8x512xf32>
    %218 = vector.shape_cast %217 : vector<1x8x512xf32> to vector<8x512xf32>
    %c1_114 = arith.constant 1 : index
    %c0_115 = arith.constant 0 : index
    %c0_116 = arith.constant 0 : index
    %219 = vector.load %arg2[%c1_114, %c0_115, %c0_116] : memref<2x32x1152xf32, #tpu.memory_space<vmem>>, vector<1x8x512xf32>
    %220 = vector.shape_cast %219 : vector<1x8x512xf32> to vector<8x512xf32>
    %221 = vector.broadcast %4 : f32 to vector<8x512xf32>
    %222 = arith.mulf %221, %218 : vector<8x512xf32>
    %223 = vector.broadcast %5 : f32 to vector<8x512xf32>
    %224 = arith.mulf %223, %220 : vector<8x512xf32>
    %225 = arith.addf %222, %224 : vector<8x512xf32>
    %226 = arith.truncf %225 : vector<8x512xf32> to vector<8x512xbf16>
    %c3_117 = arith.constant 3 : index
    %c1_118 = arith.constant 1 : index
    %c0_119 = arith.constant 0 : index
    %c0_120 = arith.constant 0 : index
    %227 = vector.load %arg5[%c3_117, %c1_118, %c0_119, %c0_120] : memref<4x2x32x32xbf16, #tpu.memory_space<vmem>>, vector<1x1x8x8xbf16>
    %228 = vector.shape_cast %227 : vector<1x1x8x8xbf16> to vector<8x8xbf16>
    %cst_121 = arith.constant dense<0.000000e+00> : vector<8x512xf32>
    %229 = tpu.matmul %228, %226, %cst_121 {dimension_numbers = #tpu.dot_dimension_numbers<[1], [0], [0], [1], [0, 0, 1, 1], [], []>} : vector<8x8xbf16>, vector<8x512xbf16>, vector<8x512xf32> -> vector<8x512xf32>
    %c3_122 = arith.constant 3 : index
    %c0_123 = arith.constant 0 : index
    %c0_124 = arith.constant 0 : index
    %c0_125 = arith.constant 0 : index
    %230 = vector.load %arg5[%c3_122, %c0_123, %c0_124, %c0_125] : memref<4x2x32x32xbf16, #tpu.memory_space<vmem>>, vector<1x1x8x8xbf16>
    %231 = vector.shape_cast %230 : vector<1x1x8x8xbf16> to vector<8x8xbf16>
    %c3_126 = arith.constant 3 : index
    %c0_127 = arith.constant 0 : index
    %c1_128 = arith.constant 1 : index
    %232 = vector.load %arg6[%c3_126, %c0_127, %c1_128] : memref<4x128x8xf32, #tpu.memory_space<vmem>>, vector<1x8x1xf32>
    %233 = vector.shape_cast %232 : vector<1x8x1xf32> to vector<8x1xf32>
    %234 = vector.extract_strided_slice %216 {offsets = [0, 0], sizes = [8, 128], strides = [1, 1]} : vector<32x128xf32> to vector<8x128xf32>
    %235 = arith.truncf %234 : vector<8x128xf32> to vector<8x128xbf16>
    %cst_129 = arith.constant dense<0.000000e+00> : vector<8x128xf32>
    %236 = tpu.matmul %231, %235, %cst_129 {dimension_numbers = #tpu.dot_dimension_numbers<[1], [0], [0], [1], [0, 0, 1, 1], [], []>} : vector<8x8xbf16>, vector<8x128xbf16>, vector<8x128xf32> -> vector<8x128xf32>
    %237 = vector.extract_strided_slice %229 {offsets = [0, 0], sizes = [8, 128], strides = [1, 1]} : vector<8x512xf32> to vector<8x128xf32>
    %238 = arith.addf %236, %237 : vector<8x128xf32>
    %239 = vector.broadcast %233 : vector<8x1xf32> to vector<8x128xf32>
    %240 = arith.addf %238, %239 : vector<8x128xf32>
    %cst_130 = arith.constant 0.000000e+00 : f32
    %241 = vector.broadcast %cst_130 : f32 to vector<8x128xf32>
    %242 = arith.maximumf %240, %241 : vector<8x128xf32>
    %243 = vector.extract_strided_slice %216 {offsets = [8, 0], sizes = [8, 128], strides = [1, 1]} : vector<32x128xf32> to vector<8x128xf32>
    %244 = arith.truncf %243 : vector<8x128xf32> to vector<8x128xbf16>
    %cst_131 = arith.constant dense<0.000000e+00> : vector<8x128xf32>
    %245 = tpu.matmul %231, %244, %cst_131 {dimension_numbers = #tpu.dot_dimension_numbers<[1], [0], [0], [1], [0, 0, 1, 1], [], []>} : vector<8x8xbf16>, vector<8x128xbf16>, vector<8x128xf32> -> vector<8x128xf32>
    %246 = vector.extract_strided_slice %229 {offsets = [0, 128], sizes = [8, 128], strides = [1, 1]} : vector<8x512xf32> to vector<8x128xf32>
    %247 = arith.addf %245, %246 : vector<8x128xf32>
    %248 = vector.broadcast %233 : vector<8x1xf32> to vector<8x128xf32>
    %249 = arith.addf %247, %248 : vector<8x128xf32>
    %cst_132 = arith.constant 0.000000e+00 : f32
    %250 = vector.broadcast %cst_132 : f32 to vector<8x128xf32>
    %251 = arith.maximumf %249, %250 : vector<8x128xf32>
    %252 = vector.extract_strided_slice %216 {offsets = [16, 0], sizes = [8, 128], strides = [1, 1]} : vector<32x128xf32> to vector<8x128xf32>
    %253 = arith.truncf %252 : vector<8x128xf32> to vector<8x128xbf16>
    %cst_133 = arith.constant dense<0.000000e+00> : vector<8x128xf32>
    %254 = tpu.matmul %231, %253, %cst_133 {dimension_numbers = #tpu.dot_dimension_numbers<[1], [0], [0], [1], [0, 0, 1, 1], [], []>} : vector<8x8xbf16>, vector<8x128xbf16>, vector<8x128xf32> -> vector<8x128xf32>
    %255 = vector.extract_strided_slice %229 {offsets = [0, 256], sizes = [8, 128], strides = [1, 1]} : vector<8x512xf32> to vector<8x128xf32>
    %256 = arith.addf %254, %255 : vector<8x128xf32>
    %257 = vector.broadcast %233 : vector<8x1xf32> to vector<8x128xf32>
    %258 = arith.addf %256, %257 : vector<8x128xf32>
    %cst_134 = arith.constant 0.000000e+00 : f32
    %259 = vector.broadcast %cst_134 : f32 to vector<8x128xf32>
    %260 = arith.maximumf %258, %259 : vector<8x128xf32>
    %261 = vector.extract_strided_slice %216 {offsets = [24, 0], sizes = [8, 128], strides = [1, 1]} : vector<32x128xf32> to vector<8x128xf32>
    %262 = arith.truncf %261 : vector<8x128xf32> to vector<8x128xbf16>
    %cst_135 = arith.constant dense<0.000000e+00> : vector<8x128xf32>
    %263 = tpu.matmul %231, %262, %cst_135 {dimension_numbers = #tpu.dot_dimension_numbers<[1], [0], [0], [1], [0, 0, 1, 1], [], []>} : vector<8x8xbf16>, vector<8x128xbf16>, vector<8x128xf32> -> vector<8x128xf32>
    %264 = vector.extract_strided_slice %229 {offsets = [0, 384], sizes = [8, 128], strides = [1, 1]} : vector<8x512xf32> to vector<8x128xf32>
    %265 = arith.addf %263, %264 : vector<8x128xf32>
    %266 = vector.broadcast %233 : vector<8x1xf32> to vector<8x128xf32>
    %267 = arith.addf %265, %266 : vector<8x128xf32>
    %cst_136 = arith.constant 0.000000e+00 : f32
    %268 = vector.broadcast %cst_136 : f32 to vector<8x128xf32>
    %269 = arith.maximumf %267, %268 : vector<8x128xf32>
    %270 = tpu.concatenate %242, %251, %260, %269 in 1 : vector<8x128xf32>, vector<8x128xf32>, vector<8x128xf32>, vector<8x128xf32> -> vector<8x512xf32>
    %c0_137 = arith.constant 0 : index
    %c0_138 = arith.constant 0 : index
    %c0_139 = arith.constant 0 : index
    %271 = vector.load %arg3[%c0_137, %c0_138, %c0_139] : memref<1x4x512xf32, #tpu.memory_space<vmem>>, vector<1x4x512xf32>
    %272 = vector.shape_cast %271 : vector<1x4x512xf32> to vector<4x512xf32>
    %273 = arith.truncf %272 : vector<4x512xf32> to vector<4x512xbf16>
    %c0_140 = arith.constant 0 : index
    %c0_141 = arith.constant 0 : index
    %274 = vector.load %arg7[%c0_140, %c0_141] : memref<8x16xf32, #tpu.memory_space<vmem>>, vector<4x8xf32>
    %275 = arith.truncf %274 : vector<4x8xf32> to vector<4x8xbf16>
    %c0_142 = arith.constant 0 : index
    %c8 = arith.constant 8 : index
    %276 = vector.load %arg7[%c0_142, %c8] : memref<8x16xf32, #tpu.memory_space<vmem>>, vector<4x4xf32>
    %277 = arith.truncf %276 : vector<4x4xf32> to vector<4x4xbf16>
    %c0_143 = arith.constant 0 : index
    %c12 = arith.constant 12 : index
    %278 = vector.load %arg7[%c0_143, %c12] : memref<8x16xf32, #tpu.memory_space<vmem>>, vector<4x1xf32>
    %279 = arith.truncf %270 : vector<8x512xf32> to vector<8x512xbf16>
    %cst_144 = arith.constant dense<0.000000e+00> : vector<4x512xf32>
    %280 = tpu.matmul %275, %279, %cst_144 {dimension_numbers = #tpu.dot_dimension_numbers<[1], [0], [0], [1], [0, 0, 1, 1], [], []>} : vector<4x8xbf16>, vector<8x512xbf16>, vector<4x512xf32> -> vector<4x512xf32>
    %cst_145 = arith.constant dense<0.000000e+00> : vector<4x512xf32>
    %281 = tpu.matmul %277, %273, %cst_145 {dimension_numbers = #tpu.dot_dimension_numbers<[1], [0], [0], [1], [0, 0, 1, 1], [], []>} : vector<4x4xbf16>, vector<4x512xbf16>, vector<4x512xf32> -> vector<4x512xf32>
    %282 = arith.addf %280, %281 : vector<4x512xf32>
    %283 = vector.broadcast %278 : vector<4x1xf32> to vector<4x512xf32>
    %284 = arith.addf %282, %283 : vector<4x512xf32>
    %c0_146 = arith.constant 0 : index
    %c0_147 = arith.constant 0 : index
    %c0_148 = arith.constant 0 : index
    %285 = vector.load %arg8[%c0_146, %c0_147, %c0_148] : memref<1x4x512xf32, #tpu.memory_space<vmem>>, vector<1x4x512xf32>
    %286 = vector.shape_cast %285 : vector<1x4x512xf32> to vector<4x512xf32>
    %287 = vector.shape_cast %284 : vector<4x512xf32> to vector<1x4x512xf32>
    tpu.vector_store %arg8[%c0_146, %c0_147, %c0_148], %287 {strides = array<i32>} : memref<1x4x512xf32, #tpu.memory_space<vmem>>, vector<1x4x512xf32>,
    return
  }
  func.func @transform_0(%arg0: i32) -> i32 {
    %c0_i32 = arith.constant 0 : i32
    %c0_i32_0 = arith.constant 0 : i32
    return %c0_i32 : i32
  }
  func.func @transform_1(%arg0: i32) -> (i32, i32, i32) {
    %c0_i32 = arith.constant 0 : i32
    %c0_i32_0 = arith.constant 0 : i32
    %c0_i32_1 = arith.constant 0 : i32
    %c0_i32_2 = arith.constant 0 : i32
    return %c0_i32, %c0_i32_0, %c0_i32_1 : i32, i32, i32
  }
  func.func @transform_2(%arg0: i32) -> (i32, i32, i32) {
    %c0_i32 = arith.constant 0 : i32
    %c0_i32_0 = arith.constant 0 : i32
    %c0_i32_1 = arith.constant 0 : i32
    return %arg0, %c0_i32, %c0_i32_0 : i32, i32, i32
  }
  func.func @transform_3(%arg0: i32) -> (i32, i32, i32) {
    %c0_i32 = arith.constant 0 : i32
    %c0_i32_0 = arith.constant 0 : i32
    %c0_i32_1 = arith.constant 0 : i32
    %c0_i32_2 = arith.constant 0 : i32
    return %c0_i32, %c0_i32_0, %c0_i32_1 : i32, i32, i32
  }
  func.func @transform_4(%arg0: i32) -> (i32, i32, i32, i32) {
    %c0_i32 = arith.constant 0 : i32
    %c0_i32_0 = arith.constant 0 : i32
    %c0_i32_1 = arith.constant 0 : i32
    %c0_i32_2 = arith.constant 0 : i32
    %c0_i32_3 = arith.constant 0 : i32
    return %c0_i32, %c0_i32_0, %c0_i32_1, %c0_i32_2 : i32, i32, i32, i32
  }
  func.func @transform_5(%arg0: i32) -> (i32, i32, i32) {
    %c0_i32 = arith.constant 0 : i32
    %c0_i32_0 = arith.constant 0 : i32
    %c0_i32_1 = arith.constant 0 : i32
    %c0_i32_2 = arith.constant 0 : i32
    return %c0_i32, %c0_i32_0, %c0_i32_1 : i32, i32, i32
  }
  func.func @transform_6(%arg0: i32) -> (i32, i32) {
    %c0_i32 = arith.constant 0 : i32
    %c0_i32_0 = arith.constant 0 : i32
    %c0_i32_1 = arith.constant 0 : i32
    return %c0_i32, %c0_i32_0 : i32, i32
  }
  func.func @transform_7(%arg0: i32) -> (i32, i32, i32) {
    %c0_i32 = arith.constant 0 : i32
    %c0_i32_0 = arith.constant 0 : i32
    %c0_i32_1 = arith.constant 0 : i32
    return %arg0, %c0_i32, %c0_i32_0 : i32, i32, i32
  }
}

</mosaic_0001>

<llo_original>
// kernel: pcrl_forward.2
$region0: #{pcrl_forward.2}
  #allocation0 [shape = 'u32[]', space=smem, size = 0x4, offset = 0x4, fixed_abs, tag = 'smem constant byte address 0x4 - core index']
  #allocation1 [shape = 'u32[72,128]{1,0:T(1,128)}', space=vmem, size = 0x9000, scoped, tag = 'internal scratch']
  %s0 = inlined_call_operand.vmem [shape: f32[2,4,512], index: 0, kind: input, shape index: {}]
  %s1 = inlined_call_operand.vmem [shape: bf16[2,32,768], index: 1, kind: input, shape index: {}]
  %s2 = inlined_call_operand.vmem [shape: f32[2,32,8], index: 2, kind: input, shape index: {}]
  %s3 = inlined_call_operand.vmem [shape: f32[2,32,1152], index: 3, kind: output, shape index: {}]
  %s4 = sld [smem:[#allocation0]]
  $region45: #{pcrl_forward.2} parent=0
    _
  %s6 = ssub.s32 1, %s4
  %s7 = scalar_select 0, %s6, %s4
  loop: start=0, step=1, limit=4
  $region2: #{pcrl_forward.2} parent=0 // loop_pre_header
    _
  $region3: #{pcrl_forward.2} parent=0 // loop_header
    %s9 = sphi 0, %s13
    %p10 = scmp.ge.s32.totalorder %s9, 4
    %s19 = sphi 0, %s21
    %s22 = sphi 0, %s19
    %s23 = sphi 0, %s22
    %s39 = sphi 0, %s23
    %s45 = sphi 0, %s47
    %s48 = sphi 0, %s45
    %s49 = sphi 0, %s48
    %s65 = sphi 0, %s49
    %s71 = sphi 0, %s73
    %s74 = sphi 0, %s71
    %s75 = sphi 0, %s74
    %s91 = sphi 0, %s75
    %s97 = sphi 0, %s99
    %s100 = sphi 0, %s97
    %s101 = sphi 0, %s100
    %s117 = sphi 0, %s101
  $region4: #{pcrl_forward.2} parent=0 // loop_header_branch
    %12 = sbr.rel (%p10) target = $region8
  $region5: #{pcrl_forward.2} parent=0 // loop_body
    %s14 = ssub.s32 %s9, 1
    %s15 = ssub.s32 %s9, 2
    %s16 = sadd.s32 %s9, 1
    %s17 = ssub.s32 %s9, %s16
    %p18 = scmp.eq.s32.totalorder %s17, 0
    %s20 = sadd.s32 %s19, 1
    %s21 = scalar_select %p18, %s19, %s20
    %p24 = pneg %p18
    %p25 = scmp.eq.s32.totalorder %s9, 1
    %p26 = por %p24, %p25
    %p27 = scmp.ne.s32.totalorder %s19, %s22
    %p28 = scmp.eq.s32.totalorder %s9, 0
    %p29 = por %p27, %p28
    %p30 = scmp.ne.s32.totalorder %s19, %s22
    %p31 = scmp.eq.s32.totalorder %s14, 1
    %p32 = por %p30, %p31
    %p33 = scmp.ne.s32.totalorder %s22, %s23
    %p34 = scmp.eq.s32.totalorder %s14, 0
    %p35 = por %p33, %p34
    %p36 = scmp.ne.s32.totalorder %s22, %s23
    %p37 = scmp.eq.s32.totalorder %s15, 1
    %p38 = por %p36, %p37
    %p40 = scmp.ne.s32.totalorder %s23, %s39
    %p41 = scmp.eq.s32.totalorder %s15, 0
    %p42 = por %p40, %p41
    %s43 = ssub.s32 %s9, %s16
    %p44 = scmp.eq.s32.totalorder %s43, 0
    %s46 = sadd.s32 %s45, 1
    %s47 = scalar_select %p44, %s45, %s46
    %p50 = pneg %p44
    %p51 = scmp.eq.s32.totalorder %s9, 1
    %p52 = por %p50, %p51
    %p53 = scmp.ne.s32.totalorder %s45, %s48
    %p54 = scmp.eq.s32.totalorder %s9, 0
    %p55 = por %p53, %p54
    %p56 = scmp.ne.s32.totalorder %s45, %s48
    %p57 = scmp.eq.s32.totalorder %s14, 1
    %p58 = por %p56, %p57
    %p59 = scmp.ne.s32.totalorder %s48, %s49
    %p60 = scmp.eq.s32.totalorder %s14, 0
    %p61 = por %p59, %p60
    %p62 = scmp.ne.s32.totalorder %s48, %s49
    %p63 = scmp.eq.s32.totalorder %s15, 1
    %p64 = por %p62, %p63
    %p66 = scmp.ne.s32.totalorder %s49, %s65
    %p67 = scmp.eq.s32.totalorder %s15, 0
    %p68 = por %p66, %p67
    %s69 = ssub.s32 %s9, %s16
    %p70 = scmp.eq.s32.totalorder %s69, 0
    %s72 = sadd.s32 %s71, 1
    %s73 = scalar_select %p70, %s71, %s72
    %p76 = pneg %p70
    %p77 = scmp.eq.s32.totalorder %s9, 1
    %p78 = por %p76, %p77
    %p79 = scmp.ne.s32.totalorder %s71, %s74
    %p80 = scmp.eq.s32.totalorder %s9, 0
    %p81 = por %p79, %p80
    %p82 = scmp.ne.s32.totalorder %s71, %s74
    %p83 = scmp.eq.s32.totalorder %s14, 1
    %p84 = por %p82, %p83
    %p85 = scmp.ne.s32.totalorder %s74, %s75
    %p86 = scmp.eq.s32.totalorder %s14, 0
    %p87 = por %p85, %p86
    %p88 = scmp.ne.s32.totalorder %s74, %s75
    %p89 = scmp.eq.s32.totalorder %s15, 1
    %p90 = por %p88, %p89
    %p92 = scmp.ne.s32.totalorder %s75, %s91
    %p93 = scmp.eq.s32.totalorder %s15, 0
    %p94 = por %p92, %p93
    %s95 = ssub.s32 %s9, %s16
    %p96 = scmp.eq.s32.totalorder %s95, 0
    %s98 = sadd.s32 %s97, 1
    %s99 = scalar_select %p96, %s97, %s98
    %p102 = pneg %p96
    %p103 = scmp.eq.s32.totalorder %s9, 1
    %p104 = por %p102, %p103
    %p105 = scmp.ne.s32.totalorder %s97, %s100
    %p106 = scmp.eq.s32.totalorder %s9, 0
    %p107 = por %p105, %p106
    %p108 = scmp.ne.s32.totalorder %s97, %s100
    %p109 = scmp.eq.s32.totalorder %s14, 1
    %p110 = por %p108, %p109
    %p111 = scmp.ne.s32.totalorder %s100, %s101
    %p112 = scmp.eq.s32.totalorder %s14, 0
    %p113 = por %p111, %p112
    %p114 = scmp.ne.s32.totalorder %s100, %s101
    %p115 = scmp.eq.s32.totalorder %s15, 1
    %p116 = por %p114, %p115
    %p118 = scmp.ne.s32.totalorder %s101, %s117
    %p119 = scmp.eq.s32.totalorder %s15, 0
    %p120 = por %p118, %p119
    %p121 = scmp.le.s32.totalorder 1, %s9
    %p122 = scmp.lt.s32.totalorder %s9, 3
    %p123 = pnand %p121, %p122
    %p124 = pneg %p123
    // Predicated region
    $region9: #{pcrl_forward.2} parent=5 // pred_check
      _
    $region10: #{pcrl_forward.2} parent=5 // pred_check_branch
      %126 = sbr.rel (%p123) target = $region12
    $region11: #{pcrl_forward.2} parent=5 // pred_region
      %s127 = ssub.s32 %s9, 1
    $region12: #{pcrl_forward.2} parent=5 // pred_fallthru
      _
    %p128 = scmp.lt.s32.totalorder %s9, 2
    // Predicated region
    $region13: #{pcrl_forward.2} parent=5 // pred_check
      %p129 = pneg %p128
    $region14: #{pcrl_forward.2} parent=5 // pred_check_branch
      %131 = sbr.rel (%p129) target = $region16
    $region15: #{pcrl_forward.2} parent=5 // pred_region
      // Predicated region
      $region17: #{pcrl_forward.2} parent=15 // pred_check
        %p132 = pneg %p29
      $region18: #{pcrl_forward.2} parent=15 // pred_check_branch
        %134 = sbr.rel (%p132) target = $region20
      $region19: #{pcrl_forward.2} parent=15 // pred_region
        %p135 = scmp.lt.s32.totalorder %s9, 1
        %s136 = scalar_select %p135, %s9, 1
        %s137 = smul.addr %s136, 4
        %s138 = smul.addr %s137, 4
        %s139 = scalar_lea.vmem %s0, %s138
      $region20: #{pcrl_forward.2} parent=15 // pred_fallthru
        _
      // Predicated region
      $region21: #{pcrl_forward.2} parent=15 // pred_check
        %p140 = pneg %p55
      $region22: #{pcrl_forward.2} parent=15 // pred_check_branch
        %142 = sbr.rel (%p140) target = $region24
      $region23: #{pcrl_forward.2} parent=15 // pred_region
        %p143 = scmp.lt.s32.totalorder %s9, 1
        %s144 = scalar_select %p143, %s9, 1
        %s145 = smul.addr %s144, 24
        %s146 = smul.addr %s145, 4
        %s147 = scalar_lea.vmem %s1, %s146
      $region24: #{pcrl_forward.2} parent=15 // pred_fallthru
        _
      // Predicated region
      $region25: #{pcrl_forward.2} parent=15 // pred_check
        %p148 = pneg %p81
      $region26: #{pcrl_forward.2} parent=15 // pred_check_branch
        %150 = sbr.rel (%p148) target = $region28
      $region27: #{pcrl_forward.2} parent=15 // pred_region
        %p151 = scmp.lt.s32.totalorder %s9, 1
        %s152 = scalar_select %p151, %s9, 1
        %s153 = smul.addr %s152, 4
        %s154 = smul.addr %s153, 8
        %s155 = scalar_lea.vmem %s2, %s154
      $region28: #{pcrl_forward.2} parent=15 // pred_fallthru
        _
    $region16: #{pcrl_forward.2} parent=5 // pred_fallthru
      _
    %p156 = scmp.le.s32.totalorder 1, %s9
    %p157 = scmp.lt.s32.totalorder %s9, 3
    %p158 = pnand %p156, %p157
    %p159 = pneg %p158
    // Predicated region
    $region29: #{pcrl_forward.2} parent=5 // pred_check
      _
    $region30: #{pcrl_forward.2} parent=5 // pred_check_branch
      %161 = sbr.rel (%p158) target = $region32
    $region31: #{pcrl_forward.2} parent=5 // pred_region
      %s162 = ssub.s32 %s9, 1
      %p163 = scmp.lt.s32.totalorder %s14, 1
      %s164 = scalar_select %p163, %s14, 1
      %s165 = smul.addr %s164, 4
      %s166 = smul.addr %s165, 4
      %s167 = scalar_lea.vmem %s0, %s166
      %p168 = pneg %p35
      %p169 = pneg %p32
      %p170 = scmp.lt.s32.totalorder %s14, 1
      %s171 = scalar_select %p170, %s14, 1
      %s172 = smul.addr %s171, 24
      %s173 = smul.addr %s172, 4
      %s174 = scalar_lea.vmem %s1, %s173
      %p175 = pneg %p61
      %p176 = pneg %p58
      %p177 = scmp.lt.s32.totalorder %s14, 1
      %s178 = scalar_select %p177, %s14, 1
      %s179 = smul.addr %s178, 4
      %s180 = smul.addr %s179, 8
      %s181 = scalar_lea.vmem %s2, %s180
      %p182 = pneg %p87
      %p183 = pneg %p84
      %p184 = pneg %p113
      %p185 = pneg %p110
      %p186 = scmp.lt.s32.totalorder %s14, 1
      %s187 = scalar_select %p186, %s14, 1
      %s188 = smul.addr %s187, 36
      %s189 = smul.addr %s188, 8
      %s190 = scalar_lea.vmem %s3, %s189
      %p191 = scmp.lt.s32.totalorder %s14, 1
      %s192 = scalar_select %p191, %s14, 1
      %s193 = smul.addr %s192, 4
      %s194 = smul.addr %s193, 4
      %s195 = scalar_lea.vmem %s0, %s194
      %p196 = scmp.lt.s32.totalorder %s14, 1
      %s197 = scalar_select %p196, %s14, 1
      %s198 = smul.addr %s197, 24
      %s199 = smul.addr %s198, 4
      %s200 = scalar_lea.vmem %s1, %s199
      %p201 = scmp.lt.s32.totalorder %s14, 1
      %s202 = scalar_select %p201, %s14, 1
      %s203 = smul.addr %s202, 4
      %s204 = smul.addr %s203, 8
      %s205 = scalar_lea.vmem %s2, %s204
      %p206 = scmp.lt.s32.totalorder %s14, 1
      %s207 = scalar_select %p206, %s14, 1
      %s208 = smul.addr %s207, 36
      %s209 = smul.addr %s208, 8
      %s210 = scalar_lea.vmem %s3, %s209
      %212 = vst [vmem:[%s210] sm:$0xff] 0.0
      %213 = vst [vmem:[%s210 + $0x8] sm:$0xff] 0.0
      %214 = vst [vmem:[%s210 + $0x10] sm:$0xff] 0.0
      %215 = vst [vmem:[%s210 + $0x18] sm:$0xff] 0.0
      %216 = vst [vmem:[%s210 + $0x20] sm:$0xff] 0.0
      %217 = vst [vmem:[%s210 + $0x28] sm:$0xff] 0.0
      %218 = vst [vmem:[%s210 + $0x30] sm:$0xff] 0.0
      %219 = vst [vmem:[%s210 + $0x38] sm:$0xff] 0.0
      %220 = vst [vmem:[%s210 + $0x40] sm:$0xff] 0.0
      %221 = vst [vmem:[%s210 + $0x48] sm:$0xff] 0.0
      %222 = vst [vmem:[%s210 + $0x50] sm:$0xff] 0.0
      %223 = vst [vmem:[%s210 + $0x58] sm:$0xff] 0.0
      %224 = vst [vmem:[%s210 + $0x60] sm:$0xff] 0.0
      %225 = vst [vmem:[%s210 + $0x68] sm:$0xff] 0.0
      %226 = vst [vmem:[%s210 + $0x70] sm:$0xff] 0.0
      %227 = vst [vmem:[%s210 + $0x78] sm:$0xff] 0.0
      %228 = vst [vmem:[%s210 + $0x80] sm:$0xff] 0.0
      %229 = vst [vmem:[%s210 + $0x88] sm:$0xff] 0.0
      %230 = vst [vmem:[%s210 + $0x90] sm:$0xff] 0.0
      %231 = vst [vmem:[%s210 + $0x98] sm:$0xff] 0.0
      %232 = vst [vmem:[%s210 + $0xa0] sm:$0xff] 0.0
      %233 = vst [vmem:[%s210 + $0xa8] sm:$0xff] 0.0
      %234 = vst [vmem:[%s210 + $0xb0] sm:$0xff] 0.0
      %235 = vst [vmem:[%s210 + $0xb8] sm:$0xff] 0.0
      %236 = vst [vmem:[%s210 + $0xc0] sm:$0xff] 0.0
      %237 = vst [vmem:[%s210 + $0xc8] sm:$0xff] 0.0
      %238 = vst [vmem:[%s210 + $0xd0] sm:$0xff] 0.0
      %239 = vst [vmem:[%s210 + $0xd8] sm:$0xff] 0.0
      %240 = vst [vmem:[%s210 + $0xe0] sm:$0xff] 0.0
      %241 = vst [vmem:[%s210 + $0xe8] sm:$0xff] 0.0
      %242 = vst [vmem:[%s210 + $0xf0] sm:$0xff] 0.0
      %243 = vst [vmem:[%s210 + $0xf8] sm:$0xff] 0.0
      %244 = vst [vmem:[%s210 + $0x100] sm:$0xff] 0.0
      %245 = vst [vmem:[%s210 + $0x108] sm:$0xff] 0.0
      %246 = vst [vmem:[%s210 + $0x110] sm:$0xff] 0.0
      %247 = vst [vmem:[%s210 + $0x118] sm:$0xff] 0.0
      %v248 = vld [vmem:[%s195] sm:$0xff]
      %v249 = vld [vmem:[%s195 + $0x8] sm:$0xff]
      %252 = vst [vmem:[#allocation1] ss:$2 sm:$0xff] %v248
      %s253 = scalar_lea.vmem [#allocation1], 16
      %254 = vst [vmem:[%s253] ss:$2 sm:$0xff] %v249
      %v255 = vld.sshfl [vmem:[#allocation1] sm:$0xff pattern:$0x75316420]
      %v256 = vld.sshfl [vmem:[#allocation1 + $0x8] sm:$0xff pattern:$0x75316420]
      %v257 = vld.sshfl [vmem:[#allocation1 + $0x10] sm:$0xff pattern:$0x75316420]
      %v258 = vld.sshfl [vmem:[#allocation1 + $0x18] sm:$0xff pattern:$0x75316420]
      %v263 = vpack.c.bf16 %v255, %v255
      %v264 = vpack.c.bf16 %v256, %v256
      %v265 = vpack.c.bf16 %v257, %v257
      %v266 = vpack.c.bf16 %v258, %v258
      %v267 = vld [vmem:[%s200] sm:$0xf]
      %v268 = vld [vmem:[%s205] sm:$0xff]
      %270 = vset.pattern.permute.xlu0 0
      %271 = vperm.xlu0 %270, %v268
      %v272 = vpop.permute.xlu0 %271
      %vm274 = vcmask 31744
      %v276 = vsel %vm274, %v267, 0
      %vm278 = vcmask 1041408
      %v280 = vsel %vm278, %v263, 0
      %v283 = vsel %vm278, %v264, 0
      %v286 = vsel %vm278, %v265, 0
      %v289 = vsel %vm278, %v266, 0
      %291 = vmatpush.bf16.msra.mxu0 0
      %292 = vmatpush.bf16.msra.mxu0 0
      %293 = vmatpush.bf16.msra.mxu0 0
      %294 = vmatpush.bf16.msra.mxu0 0
      %295 = vmatpush.bf16.msra.mxu0 0
      %296 = vmatpush.bf16.msra.mxu0 0
      %297 = vmatpush.bf16.msra.mxu0 0
      %298 = vmatpush.bf16.msra.mxu0 %v280
      %299 = vmatmul.bf16.gmra.mxu0 %v276
      %v300 = vpop.f32.mrf.mxu0
      %v301 = vadd.f32 %v272, %v300
      %v302 = vpop.f32.mrf.mxu0
      %303 = vdwg.mxu0
      %304 = vmatpush.bf16.msra.mxu0 0
      %305 = vmatpush.bf16.msra.mxu0 0
      %306 = vmatpush.bf16.msra.mxu0 0
      %307 = vmatpush.bf16.msra.mxu0 0
      %308 = vmatpush.bf16.msra.mxu0 0
      %309 = vmatpush.bf16.msra.mxu0 0
      %310 = vmatpush.bf16.msra.mxu0 0
      %311 = vmatpush.bf16.msra.mxu0 %v283
      %312 = vmatmul.bf16.gmra.mxu0 %v276
      %v313 = vpop.f32.mrf.mxu0
      %v314 = vadd.f32 %v272, %v313
      %v315 = vpop.f32.mrf.mxu0
      %316 = vdwg.mxu0
      %317 = vmatpush.bf16.msra.mxu0 0
      %318 = vmatpush.bf16.msra.mxu0 0
      %319 = vmatpush.bf16.msra.mxu0 0
      %320 = vmatpush.bf16.msra.mxu0 0
      %321 = vmatpush.bf16.msra.mxu0 0
      %322 = vmatpush.bf16.msra.mxu0 0
      %323 = vmatpush.bf16.msra.mxu0 0
      %324 = vmatpush.bf16.msra.mxu0 %v286
      %325 = vmatmul.bf16.gmra.mxu0 %v276
      %v326 = vpop.f32.mrf.mxu0
      %v327 = vadd.f32 %v272, %v326
      %v328 = vpop.f32.mrf.mxu0
      %329 = vdwg.mxu0
      %330 = vmatpush.bf16.msra.mxu0 0
      %331 = vmatpush.bf16.msra.mxu0 0
      %332 = vmatpush.bf16.msra.mxu0 0
      %333 = vmatpush.bf16.msra.mxu0 0
      %334 = vmatpush.bf16.msra.mxu0 0
      %335 = vmatpush.bf16.msra.mxu0 0
      %336 = vmatpush.bf16.msra.mxu0 0
      %337 = vmatpush.bf16.msra.mxu0 %v289
      %338 = vmatmul.bf16.gmra.mxu0 %v276
      %v339 = vpop.f32.mrf.mxu0
      %v340 = vadd.f32 %v272, %v339
      %v341 = vpop.f32.mrf.mxu0
      %342 = vdwg.mxu0
      %v343 = vmax.f32 %v301, 0.0
      %v344 = vmax.f32 %v314, 0.0
      %v345 = vmax.f32 %v327, 0.0
      %v346 = vmax.f32 %v340, 0.0
      %347 = vst [vmem:[%s210] sm:$0xff] %v343
      %348 = vst [vmem:[%s210 + $0x8] sm:$0xff] %v344
      %349 = vst [vmem:[%s210 + $0x10] sm:$0xff] %v345
      %350 = vst [vmem:[%s210 + $0x18] sm:$0xff] %v346
      %v351 = vpack.c.bf16 %v344, %v343
      %v352 = vpack.c.bf16 %v346, %v345
      %v353 = vld [vmem:[%s200 + $0x4] sm:$0xf]
      %v354 = vld [vmem:[%s200 + $0x1c] sm:$0xf]
      %v355 = vld [vmem:[%s205] sm:$0xff]
      %v356 = vld [vmem:[%s205 + $0x8] sm:$0xff]
      %358 = vset.pattern.permute.xlu0 1
      %359 = vperm.xlu0 %358, %v355
      %v360 = vpop.permute.xlu0 %359
      %363 = vset.pattern.permute.xlu0 1
      %364 = vperm.xlu0 %363, %v356
      %v365 = vpop.permute.xlu0 %364
      %v369 = vunpack.c.l.b16 %v353
      %v370 = vunpack.c.l.b16 %v354
      %v371 = vpack.c.b16 %v370, %v369
      %vm372 = vcmask 261120
      %v374 = vsel %vm372, %v371, 0
      %376 = vmatpush.bf16.msra.mxu0 0
      %377 = vmatpush.bf16.msra.mxu0 0
      %378 = vmatpush.bf16.msra.mxu0 0
      %379 = vmatpush.bf16.msra.mxu0 0
      %380 = vmatpush.bf16.msra.mxu0 0
      %381 = vmatpush.bf16.msra.mxu0 0
      %382 = vmatpush.bf16.msra.mxu0 %v352
      %383 = vmatpush.bf16.msra.mxu0 %v351
      %384 = vmatmul.bf16.gmra.mxu0 %v374
      %v385 = vpop.f32.mrf.mxu0
      %v386 = vadd.f32 %v360, %v385
      %v387 = vpop.f32.mrf.mxu0
      %v388 = vadd.f32 %v365, %v387
      %389 = vdwg.mxu0
      %v390 = vmax.f32 %v386, 0.0
      %v391 = vmax.f32 %v388, 0.0
      %392 = vst [vmem:[%s210 + $0x20] sm:$0xff] %v390
      %393 = vst [vmem:[%s210 + $0x68] sm:$0xff] %v391
      %396 = vrot.lane.b32.xlu0 %v390, 96
      %v397 = vpop.permute.xlu0 %396
      %398 = vrot.lane.b32.xlu0 %v391, 96
      %v399 = vpop.permute.xlu0 %398
      %402 = vrot.lane.b32.xlu0 %v390, 64
      %v403 = vpop.permute.xlu0 %402
      %404 = vrot.lane.b32.xlu0 %v391, 64
      %v405 = vpop.permute.xlu0 %404
      %408 = vrot.lane.b32.xlu0 %v390, 32
      %v409 = vpop.permute.xlu0 %408
      %410 = vrot.lane.b32.xlu0 %v391, 32
      %v411 = vpop.permute.xlu0 %410
      %v414 = vpack.c.bf16 %v391, %v390
      %v415 = vpack.c.bf16 %v399, %v397
      %v416 = vpack.c.bf16 %v405, %v403
      %v417 = vpack.c.bf16 %v411, %v409
      %v418 = vld [vmem:[%s200 + $0x8] sm:$0xf]
      %v419 = vld [vmem:[%s200 + $0x20] sm:$0xf]
      %v420 = vld [vmem:[%s205] sm:$0xff]
      %v421 = vld [vmem:[%s205 + $0x8] sm:$0xff]
      %423 = vset.pattern.permute.xlu0 2
      %424 = vperm.xlu0 %423, %v420
      %v425 = vpop.permute.xlu0 %424
      %428 = vset.pattern.permute.xlu0 2
      %429 = vperm.xlu0 %428, %v421
      %v430 = vpop.permute.xlu0 %429
      %v434 = vunpack.c.l.b16 %v418
      %v435 = vunpack.c.l.b16 %v419
      %v436 = vpack.c.b16 %v435, %v434
      %vm437 = vcmask 523264
      %v439 = vsel %vm437, %v436, 0
      %441 = vmatpush.bf16.msra.mxu0 0
      %442 = vmatpush.bf16.msra.mxu0 0
      %443 = vmatpush.bf16.msra.mxu0 0
      %444 = vmatpush.bf16.msra.mxu0 0
      %445 = vmatpush.bf16.msra.mxu0 %v417
      %446 = vmatpush.bf16.msra.mxu0 %v416
      %447 = vmatpush.bf16.msra.mxu0 %v415
      %448 = vmatpush.bf16.msra.mxu0 %v414
      %449 = vmatmul.bf16.gmra.mxu0 %v439
      %v450 = vpop.f32.mrf.mxu0
      %v451 = vadd.f32 %v425, %v450
      %v452 = vpop.f32.mrf.mxu0
      %v453 = vadd.f32 %v430, %v452
      %454 = vdwg.mxu0
      %v455 = vmax.f32 %v451, 0.0
      %v456 = vmax.f32 %v453, 0.0
      %457 = vst.msk [vmem:[%s210 + $0x28] sm:$0xff] %vm372, %v455
      %458 = vst.msk [vmem:[%s210 + $0x70] sm:$0xff] %vm372, %v456
      %461 = vrot.lane.b32.xlu0 %v455, 120
      %v462 = vpop.permute.xlu0 %461
      %463 = vrot.lane.b32.xlu0 %v456, 120
      %v464 = vpop.permute.xlu0 %463
      %467 = vrot.lane.b32.xlu0 %v455, 112
      %v468 = vpop.permute.xlu0 %467
      %469 = vrot.lane.b32.xlu0 %v456, 112
      %v470 = vpop.permute.xlu0 %469
      %473 = vrot.lane.b32.xlu0 %v455, 104
      %v474 = vpop.permute.xlu0 %473
      %475 = vrot.lane.b32.xlu0 %v456, 104
      %v476 = vpop.permute.xlu0 %475
      %v479 = vpack.c.bf16 %v456, %v455
      %v480 = vpack.c.bf16 %v464, %v462
      %v481 = vpack.c.bf16 %v470, %v468
      %v482 = vpack.c.bf16 %v476, %v474
      %v483 = vld [vmem:[%s200 + $0xc] sm:$0xf]
      %v484 = vld [vmem:[%s200 + $0x24] sm:$0xf]
      %v485 = vld [vmem:[%s200 + $0x3c] sm:$0xf]
      %v486 = vld [vmem:[%s200 + $0x54] sm:$0xf]
      %v487 = vld [vmem:[%s205] sm:$0xff]
      %v488 = vld [vmem:[%s205 + $0x8] sm:$0xff]
      %v489 = vld [vmem:[%s205 + $0x10] sm:$0xff]
      %v490 = vld [vmem:[%s205 + $0x18] sm:$0xff]
      %492 = vset.pattern.permute.xlu0 3
      %493 = vperm.xlu0 %492, %v487
      %v494 = vpop.permute.xlu0 %493
      %497 = vset.pattern.permute.xlu0 3
      %498 = vperm.xlu0 %497, %v488
      %v499 = vpop.permute.xlu0 %498
      %502 = vset.pattern.permute.xlu0 3
      %503 = vperm.xlu0 %502, %v489
      %v504 = vpop.permute.xlu0 %503
      %507 = vset.pattern.permute.xlu0 3
      %508 = vperm.xlu0 %507, %v490
      %v509 = vpop.permute.xlu0 %508
      %v515 = vunpack.c.l.b16 %v483
      %v516 = vunpack.c.l.b16 %v484
      %v517 = vunpack.c.l.b16 %v485
      %v518 = vunpack.c.l.b16 %v486
      %v519 = vpack.c.b16 %v516, %v515
      %v520 = vpack.c.b16 %v518, %v517
      %v522 = vsel %vm437, %v519, 0
      %v525 = vsel %vm437, %v520, 0
      %527 = vmatpush.bf16.msra.mxu0 0
      %528 = vmatpush.bf16.msra.mxu0 0
      %529 = vmatpush.bf16.msra.mxu0 0
      %530 = vmatpush.bf16.msra.mxu0 0
      %531 = vmatpush.bf16.msra.mxu0 %v482
      %532 = vmatpush.bf16.msra.mxu0 %v481
      %533 = vmatpush.bf16.msra.mxu0 %v480
      %534 = vmatpush.bf16.msra.mxu0 %v479
      %535 = vmatmul.bf16.gmra.mxu0 %v522
      %v536 = vpop.f32.mrf.mxu0
      %v537 = vadd.f32 %v494, %v536
      %v538 = vpop.f32.mrf.mxu0
      %v539 = vadd.f32 %v499, %v538
      %540 = vmatmul.bf16.gmra.mxu0 %v525
      %v541 = vpop.f32.mrf.mxu0
      %v542 = vadd.f32 %v504, %v541
      %v543 = vpop.f32.mrf.mxu0
      %v544 = vadd.f32 %v509, %v543
      %545 = vdwg.mxu0
      %v546 = vmax.f32 %v537, 0.0
      %v547 = vmax.f32 %v539, 0.0
      %v548 = vmax.f32 %v542, 0.0
      %v549 = vmax.f32 %v544, 0.0
      %vm550 = vcmask 64512
      %551 = vst.msk [vmem:[%s210 + $0x30] sm:$0xff] %vm550, %v546
      %552 = vst.msk [vmem:[%s210 + $0x78] sm:$0xff] %vm550, %v547
      %553 = vst.msk [vmem:[%s210 + $0xc0] sm:$0xff] %vm550, %v548
      %554 = vst.msk [vmem:[%s210 + $0x108] sm:$0xff] %vm550, %v549
      %559 = vrot.lane.b32.xlu0 %v546, 126
      %v560 = vpop.permute.xlu0 %559
      %561 = vrot.lane.b32.xlu0 %v547, 126
      %v562 = vpop.permute.xlu0 %561
      %563 = vrot.lane.b32.xlu0 %v548, 126
      %v564 = vpop.permute.xlu0 %563
      %565 = vrot.lane.b32.xlu0 %v549, 126
      %v566 = vpop.permute.xlu0 %565
      %571 = vrot.lane.b32.xlu0 %v546, 124
      %v572 = vpop.permute.xlu0 %571
      %573 = vrot.lane.b32.xlu0 %v547, 124
      %v574 = vpop.permute.xlu0 %573
      %575 = vrot.lane.b32.xlu0 %v548, 124
      %v576 = vpop.permute.xlu0 %575
      %577 = vrot.lane.b32.xlu0 %v549, 124
      %v578 = vpop.permute.xlu0 %577
      %583 = vrot.lane.b32.xlu0 %v546, 122
      %v584 = vpop.permute.xlu0 %583
      %585 = vrot.lane.b32.xlu0 %v547, 122
      %v586 = vpop.permute.xlu0 %585
      %587 = vrot.lane.b32.xlu0 %v548, 122
      %v588 = vpop.permute.xlu0 %587
      %589 = vrot.lane.b32.xlu0 %v549, 122
      %v590 = vpop.permute.xlu0 %589
      %v595 = vpack.c.bf16 %v547, %v546
      %v596 = vpack.c.bf16 %v549, %v548
      %v597 = vpack.c.bf16 %v562, %v560
      %v598 = vpack.c.bf16 %v566, %v564
      %v599 = vpack.c.bf16 %v574, %v572
      %v600 = vpack.c.bf16 %v578, %v576
      %v601 = vpack.c.bf16 %v586, %v584
      %v602 = vpack.c.bf16 %v590, %v588
      %v603 = vld [vmem:[%s200 + $0x10] sm:$0xf]
      %v604 = vld [vmem:[%s200 + $0x28] sm:$0xf]
      %v605 = vld [vmem:[%s200 + $0x40] sm:$0xf]
      %v606 = vld [vmem:[%s200 + $0x58] sm:$0xf]
      %v607 = vld [vmem:[%s205] sm:$0xff]
      %v608 = vld [vmem:[%s205 + $0x8] sm:$0xff]
      %v609 = vld [vmem:[%s205 + $0x10] sm:$0xff]
      %v610 = vld [vmem:[%s205 + $0x18] sm:$0xff]
      %612 = vset.pattern.permute.xlu0 4
      %613 = vperm.xlu0 %612, %v607
      %v614 = vpop.permute.xlu0 %613
      %617 = vset.pattern.permute.xlu0 4
      %618 = vperm.xlu0 %617, %v608
      %v619 = vpop.permute.xlu0 %618
      %622 = vset.pattern.permute.xlu0 4
      %623 = vperm.xlu0 %622, %v609
      %v624 = vpop.permute.xlu0 %623
      %627 = vset.pattern.permute.xlu0 4
      %628 = vperm.xlu0 %627, %v610
      %v629 = vpop.permute.xlu0 %628
      %v635 = vunpack.c.l.b16 %v603
      %v636 = vunpack.c.l.b16 %v604
      %v637 = vunpack.c.l.b16 %v605
      %v638 = vunpack.c.l.b16 %v606
      %v639 = vpack.c.b16 %v636, %v635
      %v640 = vpack.c.b16 %v638, %v637
      %643 = vmatpush.bf16.msra.mxu0 %v602
      %644 = vmatpush.bf16.msra.mxu0 %v601
      %645 = vmatpush.bf16.msra.mxu0 %v600
      %646 = vmatpush.bf16.msra.mxu0 %v599
      %647 = vmatpush.bf16.msra.mxu0 %v598
      %648 = vmatpush.bf16.msra.mxu0 %v597
      %649 = vmatpush.bf16.msra.mxu0 %v596
      %650 = vmatpush.bf16.msra.mxu0 %v595
      %651 = vmatmul.bf16.gmra.mxu0 %v639
      %v652 = vpop.f32.mrf.mxu0
      %v653 = vadd.f32 %v614, %v652
      %v654 = vpop.f32.mrf.mxu0
      %v655 = vadd.f32 %v619, %v654
      %656 = vmatmul.bf16.gmra.mxu0 %v640
      %v657 = vpop.f32.mrf.mxu0
      %v658 = vadd.f32 %v624, %v657
      %v659 = vpop.f32.mrf.mxu0
      %v660 = vadd.f32 %v629, %v659
      %661 = vdwg.mxu0
      %v662 = vmax.f32 %v653, 0.0
      %v663 = vmax.f32 %v655, 0.0
      %v664 = vmax.f32 %v658, 0.0
      %v665 = vmax.f32 %v660, 0.0
      %vm666 = vcmask 15360
      %667 = vst.msk [vmem:[%s210 + $0x38] sm:$0xff] %vm666, %v662
      %668 = vst.msk [vmem:[%s210 + $0x80] sm:$0xff] %vm666, %v663
      %669 = vst.msk [vmem:[%s210 + $0xc8] sm:$0xff] %vm666, %v664
      %670 = vst.msk [vmem:[%s210 + $0x110] sm:$0xff] %vm666, %v665
      %v671 = vld [vmem:[%s200 + $0x14] sm:$0xf]
      %v672 = vld [vmem:[%s200 + $0x2c] sm:$0xf]
      %v673 = vld [vmem:[%s200 + $0x44] sm:$0xf]
      %v674 = vld [vmem:[%s200 + $0x5c] sm:$0xf]
      %v675 = vpack.c.bf16 %v663, %v662
      %v676 = vpack.c.bf16 %v665, %v664
      %v677 = vld [vmem:[%s205] sm:$0xff]
      %v678 = vld [vmem:[%s205 + $0x8] sm:$0xff]
      %v679 = vld [vmem:[%s205 + $0x10] sm:$0xff]
      %v680 = vld [vmem:[%s205 + $0x18] sm:$0xff]
      %682 = vset.pattern.permute.xlu0 5
      %683 = vperm.xlu0 %682, %v677
      %v684 = vpop.permute.xlu0 %683
      %687 = vset.pattern.permute.xlu0 5
      %688 = vperm.xlu0 %687, %v678
      %v689 = vpop.permute.xlu0 %688
      %692 = vset.pattern.permute.xlu0 5
      %693 = vperm.xlu0 %692, %v679
      %v694 = vpop.permute.xlu0 %693
      %697 = vset.pattern.permute.xlu0 5
      %698 = vperm.xlu0 %697, %v680
      %v699 = vpop.permute.xlu0 %698
      %v705 = vunpack.c.l.b16 %v671
      %v706 = vunpack.c.l.b16 %v672
      %v707 = vunpack.c.l.b16 %v673
      %v708 = vunpack.c.l.b16 %v674
      %v709 = vpack.c.b16 %v706, %v705
      %v710 = vpack.c.b16 %v708, %v707
      %v712 = vsel %vm372, %v709, 0
      %v715 = vsel %vm372, %v710, 0
      %717 = vmatpush.bf16.msra.mxu0 0
      %718 = vmatpush.bf16.msra.mxu0 0
      %719 = vmatpush.bf16.msra.mxu0 0
      %720 = vmatpush.bf16.msra.mxu0 0
      %721 = vmatpush.bf16.msra.mxu0 0
      %722 = vmatpush.bf16.msra.mxu0 0
      %723 = vmatpush.bf16.msra.mxu0 %v676
      %724 = vmatpush.bf16.msra.mxu0 %v675
      %725 = vmatmul.bf16.gmra.mxu0 %v712
      %v726 = vpop.f32.mrf.mxu0
      %v727 = vadd.f32 %v684, %v726
      %v728 = vpop.f32.mrf.mxu0
      %v729 = vadd.f32 %v689, %v728
      %730 = vmatmul.bf16.gmra.mxu0 %v715
      %v731 = vpop.f32.mrf.mxu0
      %v732 = vadd.f32 %v694, %v731
      %v733 = vpop.f32.mrf.mxu0
      %v734 = vadd.f32 %v699, %v733
      %735 = vdwg.mxu0
      %736 = vst.msk [vmem:[%s210 + $0x40] sm:$0xff] %vm666, %v727
      %737 = vst.msk [vmem:[%s210 + $0x88] sm:$0xff] %vm666, %v729
      %738 = vst.msk [vmem:[%s210 + $0xd0] sm:$0xff] %vm666, %v732
      %739 = vst.msk [vmem:[%s210 + $0x118] sm:$0xff] %vm666, %v734
      %p740 = scmp.lt.s32.totalorder %s14, 1
      %s741 = scalar_select %p740, %s14, 1
      %s742 = smul.addr %s741, 36
      %s743 = smul.addr %s742, 8
      %s744 = scalar_lea.vmem %s3, %s743
      // Predicated region
      $region33: #{pcrl_forward.2} parent=31 // pred_check
        %p745 = pneg %p110
      $region34: #{pcrl_forward.2} parent=31 // pred_check_branch
        %747 = sbr.rel (%p745) target = $region36
      $region35: #{pcrl_forward.2} parent=31 // pred_region
        _
      $region36: #{pcrl_forward.2} parent=31 // pred_fallthru
        _
    $region32: #{pcrl_forward.2} parent=5 // pred_fallthru
      _
    %p748 = scmp.le.s32.totalorder 2, %s9
    // Predicated region
    $region37: #{pcrl_forward.2} parent=5 // pred_check
      %p749 = pneg %p748
    $region38: #{pcrl_forward.2} parent=5 // pred_check_branch
      %751 = sbr.rel (%p749) target = $region40
    $region39: #{pcrl_forward.2} parent=5 // pred_region
      %s752 = ssub.s32 %s9, 2
      // Predicated region
      $region41: #{pcrl_forward.2} parent=39 // pred_check
        %p753 = pneg %p116
      $region42: #{pcrl_forward.2} parent=39 // pred_check_branch
        %755 = sbr.rel (%p753) target = $region44
      $region43: #{pcrl_forward.2} parent=39 // pred_region
        %p756 = scmp.lt.s32.totalorder %s15, 1
        %s757 = scalar_select %p756, %s15, 1
        %s758 = smul.addr %s757, 36
        %s759 = smul.addr %s758, 8
        %s760 = scalar_lea.vmem %s3, %s759
      $region44: #{pcrl_forward.2} parent=39 // pred_fallthru
        _
    $region40: #{pcrl_forward.2} parent=5 // pred_fallthru
      _
  $region6: #{pcrl_forward.2} parent=0 // loop_footer
    %s13 = sadd.s32 1, %s9
  $region7: #{pcrl_forward.2} parent=0 // loop_footer_branch
    %8 = sbr.rel target = $region3
  $region8: #{pcrl_forward.2} parent=0 // loop_exit
    _

// kernel: pcrl_forward.3
$region0: #{pcrl_forward.3}
  #allocation0 [shape = 'u32[]', space=smem, size = 0x4, offset = 0x4, fixed_abs, tag = 'smem constant byte address 0x4 - core index']
  #allocation1 [shape = 'u32[72,128]{1,0:T(1,128)}', space=vmem, size = 0x9000, scoped, tag = 'internal scratch']
  #allocation2 [shape = 'f32[1]{0:T(128)S(6)}', space=smem, size = 0x200, scoped, tag = 'scoped memory for pcrl_forward.3']
  %s0 = inlined_call_operand.<no memory space> [shape: f32[1], index: 0, kind: input, shape index: {}]
  %s1 = inlined_call_operand.vmem [shape: f32[2,32,1152], index: 1, kind: input, shape index: {}]
  %s2 = inlined_call_operand.vmem [shape: f32[3,4,512], index: 2, kind: input, shape index: {}]
  %s3 = inlined_call_operand.vmem [shape: bf16[4,128,32], index: 3, kind: input, shape index: {}]
  %s4 = inlined_call_operand.vmem [shape: bf16[4,2,32,32], index: 4, kind: input, shape index: {}]
  %s5 = inlined_call_operand.vmem [shape: f32[4,128,8], index: 5, kind: input, shape index: {}]
  %s6 = inlined_call_operand.vmem [shape: f32[8,16], index: 6, kind: input, shape index: {}]
  %s7 = inlined_call_operand.vmem [shape: f32[3,4,512], index: 7, kind: output, shape index: {}]
  %s8 = sld [smem:[#allocation0]]
  $region61: #{pcrl_forward.3} parent=0
    _
  %s10 = ssub.s32 1, %s8
  %s11 = scalar_select 0, %s10, %s8
  %12 = sst [smem:[#allocation2]] %s0
  loop: start=0, step=1, limit=5
  $region2: #{pcrl_forward.3} parent=0 // loop_pre_header
    _
  $region3: #{pcrl_forward.3} parent=0 // loop_header
    %s14 = sphi 0, %s18
    %p15 = scmp.ge.s32.totalorder %s14, 5
    %s22 = sphi 0, %s22
    %s24 = sphi 0, %s22
    %s25 = sphi 0, %s24
    %s39 = sphi 0, %s25
    %s43 = sphi 0, %s43
    %s45 = sphi 0, %s43
    %s46 = sphi 0, %s45
    %s60 = sphi 0, %s46
    %s66 = sphi 0, %s68
    %s69 = sphi 0, %s66
    %s70 = sphi 0, %s69
    %s86 = sphi 0, %s70
    %s90 = sphi 0, %s90
    %s92 = sphi 0, %s90
    %s93 = sphi 0, %s92
    %s107 = sphi 0, %s93
    %s111 = sphi 0, %s111
    %s113 = sphi 0, %s111
    %s114 = sphi 0, %s113
    %s128 = sphi 0, %s114
    %s132 = sphi 0, %s132
    %s134 = sphi 0, %s132
    %s135 = sphi 0, %s134
    %s149 = sphi 0, %s135
    %s153 = sphi 0, %s153
    %s155 = sphi 0, %s153
    %s156 = sphi 0, %s155
    %s170 = sphi 0, %s156
    %s176 = sphi 0, %s178
    %s179 = sphi 0, %s176
    %s180 = sphi 0, %s179
    %s196 = sphi 0, %s180
  $region4: #{pcrl_forward.3} parent=0 // loop_header_branch
    %17 = sbr.rel (%p15) target = $region8
  $region5: #{pcrl_forward.3} parent=0 // loop_body
    %s19 = ssub.s32 %s14, 1
    %s20 = ssub.s32 %s14, 2
    %s21 = sadd.s32 %s14, 1
    %s23 = sadd.s32 %s22, 1
    %p26 = scmp.eq.s32.totalorder %s14, 2
    %p27 = scmp.ne.s32.totalorder %s22, %s24
    %p28 = scmp.eq.s32.totalorder %s14, 0
    %p29 = por %p27, %p28
    %p30 = scmp.ne.s32.totalorder %s22, %s24
    %p31 = scmp.eq.s32.totalorder %s19, 2
    %p32 = por %p30, %p31
    %p33 = scmp.ne.s32.totalorder %s24, %s25
    %p34 = scmp.eq.s32.totalorder %s19, 0
    %p35 = por %p33, %p34
    %p36 = scmp.ne.s32.totalorder %s24, %s25
    %p37 = scmp.eq.s32.totalorder %s20, 2
    %p38 = por %p36, %p37
    %p40 = scmp.ne.s32.totalorder %s25, %s39
    %p41 = scmp.eq.s32.totalorder %s20, 0
    %p42 = por %p40, %p41
    %s44 = sadd.s32 %s43, 1
    %p47 = scmp.eq.s32.totalorder %s14, 2
    %p48 = scmp.ne.s32.totalorder %s43, %s45
    %p49 = scmp.eq.s32.totalorder %s14, 0
    %p50 = por %p48, %p49
    %p51 = scmp.ne.s32.totalorder %s43, %s45
    %p52 = scmp.eq.s32.totalorder %s19, 2
    %p53 = por %p51, %p52
    %p54 = scmp.ne.s32.totalorder %s45, %s46
    %p55 = scmp.eq.s32.totalorder %s19, 0
    %p56 = por %p54, %p55
    %p57 = scmp.ne.s32.totalorder %s45, %s46
    %p58 = scmp.eq.s32.totalorder %s20, 2
    %p59 = por %p57, %p58
    %p61 = scmp.ne.s32.totalorder %s46, %s60
    %p62 = scmp.eq.s32.totalorder %s20, 0
    %p63 = por %p61, %p62
    %s64 = ssub.s32 %s14, %s21
    %p65 = scmp.eq.s32.totalorder %s64, 0
    %s67 = sadd.s32 %s66, 1
    %s68 = scalar_select %p65, %s66, %s67
    %p71 = pneg %p65
    %p72 = scmp.eq.s32.totalorder %s14, 2
    %p73 = por %p71, %p72
    %p74 = scmp.ne.s32.totalorder %s66, %s69
    %p75 = scmp.eq.s32.totalorder %s14, 0
    %p76 = por %p74, %p75
    %p77 = scmp.ne.s32.totalorder %s66, %s69
    %p78 = scmp.eq.s32.totalorder %s19, 2
    %p79 = por %p77, %p78
    %p80 = scmp.ne.s32.totalorder %s69, %s70
    %p81 = scmp.eq.s32.totalorder %s19, 0
    %p82 = por %p80, %p81
    %p83 = scmp.ne.s32.totalorder %s69, %s70
    %p84 = scmp.eq.s32.totalorder %s20, 2
    %p85 = por %p83, %p84
    %p87 = scmp.ne.s32.totalorder %s70, %s86
    %p88 = scmp.eq.s32.totalorder %s20, 0
    %p89 = por %p87, %p88
    %s91 = sadd.s32 %s90, 1
    %p94 = scmp.eq.s32.totalorder %s14, 2
    %p95 = scmp.ne.s32.totalorder %s90, %s92
    %p96 = scmp.eq.s32.totalorder %s14, 0
    %p97 = por %p95, %p96
    %p98 = scmp.ne.s32.totalorder %s90, %s92
    %p99 = scmp.eq.s32.totalorder %s19, 2
    %p100 = por %p98, %p99
    %p101 = scmp.ne.s32.totalorder %s92, %s93
    %p102 = scmp.eq.s32.totalorder %s19, 0
    %p103 = por %p101, %p102
    %p104 = scmp.ne.s32.totalorder %s92, %s93
    %p105 = scmp.eq.s32.totalorder %s20, 2
    %p106 = por %p104, %p105
    %p108 = scmp.ne.s32.totalorder %s93, %s107
    %p109 = scmp.eq.s32.totalorder %s20, 0
    %p110 = por %p108, %p109
    %s112 = sadd.s32 %s111, 1
    %p115 = scmp.eq.s32.totalorder %s14, 2
    %p116 = scmp.ne.s32.totalorder %s111, %s113
    %p117 = scmp.eq.s32.totalorder %s14, 0
    %p118 = por %p116, %p117
    %p119 = scmp.ne.s32.totalorder %s111, %s113
    %p120 = scmp.eq.s32.totalorder %s19, 2
    %p121 = por %p119, %p120
    %p122 = scmp.ne.s32.totalorder %s113, %s114
    %p123 = scmp.eq.s32.totalorder %s19, 0
    %p124 = por %p122, %p123
    %p125 = scmp.ne.s32.totalorder %s113, %s114
    %p126 = scmp.eq.s32.totalorder %s20, 2
    %p127 = por %p125, %p126
    %p129 = scmp.ne.s32.totalorder %s114, %s128
    %p130 = scmp.eq.s32.totalorder %s20, 0
    %p131 = por %p129, %p130
    %s133 = sadd.s32 %s132, 1
    %p136 = scmp.eq.s32.totalorder %s14, 2
    %p137 = scmp.ne.s32.totalorder %s132, %s134
    %p138 = scmp.eq.s32.totalorder %s14, 0
    %p139 = por %p137, %p138
    %p140 = scmp.ne.s32.totalorder %s132, %s134
    %p141 = scmp.eq.s32.totalorder %s19, 2
    %p142 = por %p140, %p141
    %p143 = scmp.ne.s32.totalorder %s134, %s135
    %p144 = scmp.eq.s32.totalorder %s19, 0
    %p145 = por %p143, %p144
    %p146 = scmp.ne.s32.totalorder %s134, %s135
    %p147 = scmp.eq.s32.totalorder %s20, 2
    %p148 = por %p146, %p147
    %p150 = scmp.ne.s32.totalorder %s135, %s149
    %p151 = scmp.eq.s32.totalorder %s20, 0
    %p152 = por %p150, %p151
    %s154 = sadd.s32 %s153, 1
    %p157 = scmp.eq.s32.totalorder %s14, 2
    %p158 = scmp.ne.s32.totalorder %s153, %s155
    %p159 = scmp.eq.s32.totalorder %s14, 0
    %p160 = por %p158, %p159
    %p161 = scmp.ne.s32.totalorder %s153, %s155
    %p162 = scmp.eq.s32.totalorder %s19, 2
    %p163 = por %p161, %p162
    %p164 = scmp.ne.s32.totalorder %s155, %s156
    %p165 = scmp.eq.s32.totalorder %s19, 0
    %p166 = por %p164, %p165
    %p167 = scmp.ne.s32.totalorder %s155, %s156
    %p168 = scmp.eq.s32.totalorder %s20, 2
    %p169 = por %p167, %p168
    %p171 = scmp.ne.s32.totalorder %s156, %s170
    %p172 = scmp.eq.s32.totalorder %s20, 0
    %p173 = por %p171, %p172
    %s174 = ssub.s32 %s14, %s21
    %p175 = scmp.eq.s32.totalorder %s174, 0
    %s177 = sadd.s32 %s176, 1
    %s178 = scalar_select %p175, %s176, %s177
    %p181 = pneg %p175
    %p182 = scmp.eq.s32.totalorder %s14, 2
    %p183 = por %p181, %p182
    %p184 = scmp.ne.s32.totalorder %s176, %s179
    %p185 = scmp.eq.s32.totalorder %s14, 0
    %p186 = por %p184, %p185
    %p187 = scmp.ne.s32.totalorder %s176, %s179
    %p188 = scmp.eq.s32.totalorder %s19, 2
    %p189 = por %p187, %p188
    %p190 = scmp.ne.s32.totalorder %s179, %s180
    %p191 = scmp.eq.s32.totalorder %s19, 0
    %p192 = por %p190, %p191
    %p193 = scmp.ne.s32.totalorder %s179, %s180
    %p194 = scmp.eq.s32.totalorder %s20, 2
    %p195 = por %p193, %p194
    %p197 = scmp.ne.s32.totalorder %s180, %s196
    %p198 = scmp.eq.s32.totalorder %s20, 0
    %p199 = por %p197, %p198
    %p200 = scmp.le.s32.totalorder 1, %s14
    %p201 = scmp.lt.s32.totalorder %s14, 4
    %p202 = pnand %p200, %p201
    %p203 = pneg %p202
    // Predicated region
    $region9: #{pcrl_forward.3} parent=5 // pred_check
      _
    $region10: #{pcrl_forward.3} parent=5 // pred_check_branch
      %205 = sbr.rel (%p202) target = $region12
    $region11: #{pcrl_forward.3} parent=5 // pred_region
      %s206 = ssub.s32 %s14, 1
      // Predicated region
      $region13: #{pcrl_forward.3} parent=11 // pred_check
        %p207 = pneg %p35
      $region14: #{pcrl_forward.3} parent=11 // pred_check_branch
        %209 = sbr.rel (%p207) target = $region16
      $region15: #{pcrl_forward.3} parent=11 // pred_region
        _
      $region16: #{pcrl_forward.3} parent=11 // pred_fallthru
        _
      // Predicated region
      $region17: #{pcrl_forward.3} parent=11 // pred_check
        %p210 = pneg %p56
      $region18: #{pcrl_forward.3} parent=11 // pred_check_branch
        %212 = sbr.rel (%p210) target = $region20
      $region19: #{pcrl_forward.3} parent=11 // pred_region
        _
      $region20: #{pcrl_forward.3} parent=11 // pred_fallthru
        _
      // Predicated region
      $region21: #{pcrl_forward.3} parent=11 // pred_check
        %p213 = pneg %p103
      $region22: #{pcrl_forward.3} parent=11 // pred_check_branch
        %215 = sbr.rel (%p213) target = $region24
      $region23: #{pcrl_forward.3} parent=11 // pred_region
        _
      $region24: #{pcrl_forward.3} parent=11 // pred_fallthru
        _
      // Predicated region
      $region25: #{pcrl_forward.3} parent=11 // pred_check
        %p216 = pneg %p124
      $region26: #{pcrl_forward.3} parent=11 // pred_check_branch
        %218 = sbr.rel (%p216) target = $region28
      $region27: #{pcrl_forward.3} parent=11 // pred_region
        _
      $region28: #{pcrl_forward.3} parent=11 // pred_fallthru
        _
      // Predicated region
      $region29: #{pcrl_forward.3} parent=11 // pred_check
        %p219 = pneg %p145
      $region30: #{pcrl_forward.3} parent=11 // pred_check_branch
        %221 = sbr.rel (%p219) target = $region32
      $region31: #{pcrl_forward.3} parent=11 // pred_region
        _
      $region32: #{pcrl_forward.3} parent=11 // pred_fallthru
        _
      // Predicated region
      $region33: #{pcrl_forward.3} parent=11 // pred_check
        %p222 = pneg %p166
      $region34: #{pcrl_forward.3} parent=11 // pred_check_branch
        %224 = sbr.rel (%p222) target = $region36
      $region35: #{pcrl_forward.3} parent=11 // pred_region
        _
      $region36: #{pcrl_forward.3} parent=11 // pred_fallthru
        _
    $region12: #{pcrl_forward.3} parent=5 // pred_fallthru
      _
    %p225 = scmp.lt.s32.totalorder %s14, 3
    // Predicated region
    $region37: #{pcrl_forward.3} parent=5 // pred_check
      %p226 = pneg %p225
    $region38: #{pcrl_forward.3} parent=5 // pred_check_branch
      %228 = sbr.rel (%p226) target = $region40
    $region39: #{pcrl_forward.3} parent=5 // pred_region
      // Predicated region
      $region41: #{pcrl_forward.3} parent=39 // pred_check
        %p229 = pneg %p76
      $region42: #{pcrl_forward.3} parent=39 // pred_check_branch
        %231 = sbr.rel (%p229) target = $region44
      $region43: #{pcrl_forward.3} parent=39 // pred_region
        %p232 = scmp.lt.s32.totalorder %s14, 2
        %s233 = scalar_select %p232, %s14, 2
        %s234 = smul.addr %s233, 4
        %s235 = smul.addr %s234, 4
        %s236 = scalar_lea.vmem %s2, %s235
      $region44: #{pcrl_forward.3} parent=39 // pred_fallthru
        _
    $region40: #{pcrl_forward.3} parent=5 // pred_fallthru
      _
    %p237 = scmp.le.s32.totalorder 1, %s14
    %p238 = scmp.lt.s32.totalorder %s14, 4
    %p239 = pnand %p237, %p238
    %p240 = pneg %p239
    // Predicated region
    $region45: #{pcrl_forward.3} parent=5 // pred_check
      _
    $region46: #{pcrl_forward.3} parent=5 // pred_check_branch
      %242 = sbr.rel (%p239) target = $region48
    $region47: #{pcrl_forward.3} parent=5 // pred_region
      %s243 = ssub.s32 %s14, 1
      %p244 = pneg %p35
      %p245 = pneg %p32
      %p246 = pneg %p56
      %p247 = pneg %p53
      %p248 = scmp.lt.s32.totalorder %s19, 2
      %s249 = scalar_select %p248, %s19, 2
      %s250 = smul.addr %s249, 4
      %s251 = smul.addr %s250, 4
      %s252 = scalar_lea.vmem %s2, %s251
      %p253 = pneg %p82
      %p254 = pneg %p79
      %p255 = pneg %p103
      %p256 = pneg %p100
      %p257 = pneg %p124
      %p258 = pneg %p121
      %p259 = pneg %p145
      %p260 = pneg %p142
      %p261 = pneg %p166
      %p262 = pneg %p163
      %p263 = pneg %p192
      %p264 = pneg %p189
      %p265 = scmp.lt.s32.totalorder %s19, 2
      %s266 = scalar_select %p265, %s19, 2
      %s267 = smul.addr %s266, 4
      %s268 = smul.addr %s267, 4
      %s269 = scalar_lea.vmem %s7, %s268
      %p270 = scmp.lt.s32.totalorder %s19, 2
      %s271 = scalar_select %p270, %s19, 2
      %s272 = smul.addr %s271, 4
      %s273 = smul.addr %s272, 4
      %s274 = scalar_lea.vmem %s2, %s273
      %p275 = scmp.lt.s32.totalorder %s19, 2
      %s276 = scalar_select %p275, %s19, 2
      %s277 = smul.addr %s276, 4
      %s278 = smul.addr %s277, 4
      %s279 = scalar_lea.vmem %s7, %s278
      %s281 = sld [smem:[#allocation2]]
      %p282 = scmp.eq.s32.totalorder %s19, 0
      %p283 = scmp.eq.s32.totalorder %s19, 1
      %s284 = scalar_select %p283, 0.0, %s281
      %s285 = scalar_select %p282, 1.0, %s284
      %s286 = ssub.f32 1.0, %s285
      %v287 = vld [vmem:[%s1 + $0x38] sm:$0xff]
      %v288 = vld [vmem:[%s1 + $0x80] sm:$0xff]
      %v289 = vld [vmem:[%s1 + $0xc8] sm:$0xff]
      %v290 = vld [vmem:[%s1 + $0x110] sm:$0xff]
      %s291 = scalar_lea.vmem %s1, 288
      %v292 = vld [vmem:[%s291 + $0x38] sm:$0xff]
      %v293 = vld [vmem:[%s291 + $0x80] sm:$0xff]
      %v294 = vld [vmem:[%s291 + $0xc8] sm:$0xff]
      %v295 = vld [vmem:[%s291 + $0x110] sm:$0xff]
      %v296 = vstv %s285
      %v297 = vmul.f32 %v296, %v287
      %v298 = vmul.f32 %v296, %v288
      %v299 = vmul.f32 %v296, %v289
      %v300 = vmul.f32 %v296, %v290
      %v301 = vstv %s286
      %v302 = vmul.f32 %v301, %v292
      %v303 = vmul.f32 %v301, %v293
      %v304 = vmul.f32 %v301, %v294
      %v305 = vmul.f32 %v301, %v295
      %v306 = vadd.f32 %v297, %v302
      %v307 = vadd.f32 %v298, %v303
      %v308 = vadd.f32 %v299, %v304
      %v309 = vadd.f32 %v300, %v305
      %v310 = vld [vmem:[%s3] sm:$0xf]
      %v311 = vld [vmem:[%s3 + $0x4] sm:$0xf]
      %v312 = vld [vmem:[%s3 + $0x8] sm:$0xf]
      %v313 = vld [vmem:[%s3 + $0xc] sm:$0xf]
      %v314 = vld [vmem:[%s3 + $0x10] sm:$0xf]
      %v315 = vld [vmem:[%s3 + $0x14] sm:$0xf]
      %v316 = vld [vmem:[%s3 + $0x18] sm:$0xf]
      %v317 = vld [vmem:[%s3 + $0x1c] sm:$0xf]
      %v318 = vld [vmem:[%s3 + $0x20] sm:$0xf]
      %v319 = vld [vmem:[%s3 + $0x24] sm:$0xf]
      %v320 = vld [vmem:[%s3 + $0x28] sm:$0xf]
      %v321 = vld [vmem:[%s3 + $0x2c] sm:$0xf]
      %v322 = vld [vmem:[%s3 + $0x30] sm:$0xf]
      %v323 = vld [vmem:[%s3 + $0x34] sm:$0xf]
      %v324 = vld [vmem:[%s3 + $0x38] sm:$0xf]
      %v325 = vld [vmem:[%s3 + $0x3c] sm:$0xf]
      %v326 = vld [vmem:[%s5] sm:$0xff]
      %v327 = vld [vmem:[%s5 + $0x8] sm:$0xff]
      %v328 = vld [vmem:[%s5 + $0x10] sm:$0xff]
      %v329 = vld [vmem:[%s5 + $0x18] sm:$0xff]
      %v330 = vld [vmem:[%s5 + $0x20] sm:$0xff]
      %v331 = vld [vmem:[%s5 + $0x28] sm:$0xff]
      %v332 = vld [vmem:[%s5 + $0x30] sm:$0xff]
      %v333 = vld [vmem:[%s5 + $0x38] sm:$0xff]
      %v334 = vld [vmem:[%s5 + $0x40] sm:$0xff]
      %v335 = vld [vmem:[%s5 + $0x48] sm:$0xff]
      %v336 = vld [vmem:[%s5 + $0x50] sm:$0xff]
      %v337 = vld [vmem:[%s5 + $0x58] sm:$0xff]
      %v338 = vld [vmem:[%s5 + $0x60] sm:$0xff]
      %v339 = vld [vmem:[%s5 + $0x68] sm:$0xff]
      %v340 = vld [vmem:[%s5 + $0x70] sm:$0xff]
      %v341 = vld [vmem:[%s5 + $0x78] sm:$0xff]
      %v342 = vpack.c.bf16 %v307, %v306
      %v343 = vpack.c.bf16 %v309, %v308
      %345 = vset.pattern.permute.xlu0 0
      %346 = vperm.xlu0 %345, %v326
      %v347 = vpop.permute.xlu0 %346
      %350 = vset.pattern.permute.xlu0 0
      %351 = vperm.xlu0 %350, %v327
      %v352 = vpop.permute.xlu0 %351
      %355 = vset.pattern.permute.xlu0 0
      %356 = vperm.xlu0 %355, %v328
      %v357 = vpop.permute.xlu0 %356
      %360 = vset.pattern.permute.xlu0 0
      %361 = vperm.xlu0 %360, %v329
      %v362 = vpop.permute.xlu0 %361
      %365 = vset.pattern.permute.xlu0 0
      %366 = vperm.xlu0 %365, %v330
      %v367 = vpop.permute.xlu0 %366
      %370 = vset.pattern.permute.xlu0 0
      %371 = vperm.xlu0 %370, %v331
      %v372 = vpop.permute.xlu0 %371
      %375 = vset.pattern.permute.xlu0 0
      %376 = vperm.xlu0 %375, %v332
      %v377 = vpop.permute.xlu0 %376
      %380 = vset.pattern.permute.xlu0 0
      %381 = vperm.xlu0 %380, %v333
      %v382 = vpop.permute.xlu0 %381
      %385 = vset.pattern.permute.xlu0 0
      %386 = vperm.xlu0 %385, %v334
      %v387 = vpop.permute.xlu0 %386
      %390 = vset.pattern.permute.xlu0 0
      %391 = vperm.xlu0 %390, %v335
      %v392 = vpop.permute.xlu0 %391
      %395 = vset.pattern.permute.xlu0 0
      %396 = vperm.xlu0 %395, %v336
      %v397 = vpop.permute.xlu0 %396
      %400 = vset.pattern.permute.xlu0 0
      %401 = vperm.xlu0 %400, %v337
      %v402 = vpop.permute.xlu0 %401
      %405 = vset.pattern.permute.xlu0 0
      %406 = vperm.xlu0 %405, %v338
      %v407 = vpop.permute.xlu0 %406
      %410 = vset.pattern.permute.xlu0 0
      %411 = vperm.xlu0 %410, %v339
      %v412 = vpop.permute.xlu0 %411
      %415 = vset.pattern.permute.xlu0 0
      %416 = vperm.xlu0 %415, %v340
      %v417 = vpop.permute.xlu0 %416
      %420 = vset.pattern.permute.xlu0 0
      %421 = vperm.xlu0 %420, %v341
      %v422 = vpop.permute.xlu0 %421
      %v440 = vunpack.c.l.b16 %v310
      %v441 = vunpack.c.l.b16 %v311
      %v442 = vunpack.c.l.b16 %v312
      %v443 = vunpack.c.l.b16 %v313
      %v444 = vunpack.c.l.b16 %v314
      %v445 = vunpack.c.l.b16 %v315
      %v446 = vunpack.c.l.b16 %v316
      %v447 = vunpack.c.l.b16 %v317
      %v448 = vunpack.c.l.b16 %v318
      %v449 = vunpack.c.l.b16 %v319
      %v450 = vunpack.c.l.b16 %v320
      %v451 = vunpack.c.l.b16 %v321
      %v452 = vunpack.c.l.b16 %v322
      %v453 = vunpack.c.l.b16 %v323
      %v454 = vunpack.c.l.b16 %v324
      %v455 = vunpack.c.l.b16 %v325
      %v456 = vpack.c.b16 %v441, %v440
      %v457 = vpack.c.b16 %v443, %v442
      %v458 = vpack.c.b16 %v445, %v444
      %v459 = vpack.c.b16 %v447, %v446
      %v460 = vpack.c.b16 %v449, %v448
      %v461 = vpack.c.b16 %v451, %v450
      %v462 = vpack.c.b16 %v453, %v452
      %v463 = vpack.c.b16 %v455, %v454
      %vm464 = vcmask 261120
      %v466 = vsel %vm464, %v456, 0
      %v469 = vsel %vm464, %v457, 0
      %v472 = vsel %vm464, %v458, 0
      %v475 = vsel %vm464, %v459, 0
      %v478 = vsel %vm464, %v460, 0
      %v481 = vsel %vm464, %v461, 0
      %v484 = vsel %vm464, %v462, 0
      %v487 = vsel %vm464, %v463, 0
      %489 = vmatpush.bf16.msra.mxu0 0
      %490 = vmatpush.bf16.msra.mxu0 0
      %491 = vmatpush.bf16.msra.mxu0 0
      %492 = vmatpush.bf16.msra.mxu0 0
      %493 = vmatpush.bf16.msra.mxu0 0
      %494 = vmatpush.bf16.msra.mxu0 0
      %495 = vmatpush.bf16.msra.mxu0 %v343
      %496 = vmatpush.bf16.msra.mxu0 %v342
      %497 = vmatmul.bf16.gmra.mxu0 %v466
      %v498 = vpop.f32.mrf.mxu0
      %v499 = vadd.f32 %v347, %v498
      %v500 = vpop.f32.mrf.mxu0
      %v501 = vadd.f32 %v352, %v500
      %502 = vmatmul.bf16.gmra.mxu0 %v469
      %v503 = vpop.f32.mrf.mxu0
      %v504 = vadd.f32 %v357, %v503
      %v505 = vpop.f32.mrf.mxu0
      %v506 = vadd.f32 %v362, %v505
      %507 = vmatmul.bf16.gmra.mxu0 %v472
      %v508 = vpop.f32.mrf.mxu0
      %v509 = vadd.f32 %v367, %v508
      %v510 = vpop.f32.mrf.mxu0
      %v511 = vadd.f32 %v372, %v510
      %512 = vmatmul.bf16.gmra.mxu0 %v475
      %v513 = vpop.f32.mrf.mxu0
      %v514 = vadd.f32 %v377, %v513
      %v515 = vpop.f32.mrf.mxu0
      %v516 = vadd.f32 %v382, %v515
      %517 = vmatmul.bf16.gmra.mxu0 %v478
      %v518 = vpop.f32.mrf.mxu0
      %v519 = vadd.f32 %v387, %v518
      %v520 = vpop.f32.mrf.mxu0
      %v521 = vadd.f32 %v392, %v520
      %522 = vmatmul.bf16.gmra.mxu0 %v481
      %v523 = vpop.f32.mrf.mxu0
      %v524 = vadd.f32 %v397, %v523
      %v525 = vpop.f32.mrf.mxu0
      %v526 = vadd.f32 %v402, %v525
      %527 = vmatmul.bf16.gmra.mxu0 %v484
      %v528 = vpop.f32.mrf.mxu0
      %v529 = vadd.f32 %v407, %v528
      %v530 = vpop.f32.mrf.mxu0
      %v531 = vadd.f32 %v412, %v530
      %532 = vmatmul.bf16.gmra.mxu0 %v487
      %v533 = vpop.f32.mrf.mxu0
      %v534 = vadd.f32 %v417, %v533
      %v535 = vpop.f32.mrf.mxu0
      %v536 = vadd.f32 %v422, %v535
      %537 = vdwg.mxu0
      %v538 = vmax.f32 %v499, 0.0
      %v539 = vmax.f32 %v501, 0.0
      %v540 = vmax.f32 %v504, 0.0
      %v541 = vmax.f32 %v506, 0.0
      %v542 = vmax.f32 %v509, 0.0
      %v543 = vmax.f32 %v511, 0.0
      %v544 = vmax.f32 %v514, 0.0
      %v545 = vmax.f32 %v516, 0.0
      %v546 = vmax.f32 %v519, 0.0
      %v547 = vmax.f32 %v521, 0.0
      %v548 = vmax.f32 %v524, 0.0
      %v549 = vmax.f32 %v526, 0.0
      %v550 = vmax.f32 %v529, 0.0
      %v551 = vmax.f32 %v531, 0.0
      %v552 = vmax.f32 %v534, 0.0
      %v553 = vmax.f32 %v536, 0.0
      %v554 = vld [vmem:[%s1 + $0x30] sm:$0xff]
      %v555 = vld [vmem:[%s1 + $0x78] sm:$0xff]
      %v556 = vld [vmem:[%s1 + $0xc0] sm:$0xff]
      %v557 = vld [vmem:[%s1 + $0x108] sm:$0xff]
      %v558 = vld [vmem:[%s291 + $0x30] sm:$0xff]
      %v559 = vld [vmem:[%s291 + $0x78] sm:$0xff]
      %v560 = vld [vmem:[%s291 + $0xc0] sm:$0xff]
      %v561 = vld [vmem:[%s291 + $0x108] sm:$0xff]
      %v562 = vmul.f32 %v296, %v554
      %v563 = vmul.f32 %v296, %v555
      %v564 = vmul.f32 %v296, %v556
      %v565 = vmul.f32 %v296, %v557
      %v566 = vmul.f32 %v301, %v558
      %v567 = vmul.f32 %v301, %v559
      %v568 = vmul.f32 %v301, %v560
      %v569 = vmul.f32 %v301, %v561
      %v570 = vadd.f32 %v562, %v566
      %v571 = vadd.f32 %v563, %v567
      %v572 = vadd.f32 %v564, %v568
      %v573 = vadd.f32 %v565, %v569
      %v574 = vpack.c.bf16 %v571, %v570
      %v575 = vpack.c.bf16 %v573, %v572
      %s576 = scalar_lea.vmem %s4, 16
      %v577 = vld [vmem:[%s576] sm:$0xf]
      %v578 = vld [vmem:[%s576 + $0x4] sm:$0xf]
      %v579 = vld [vmem:[%s576 + $0x8] sm:$0xf]
      %v580 = vld [vmem:[%s576 + $0xc] sm:$0xf]
      %v585 = vunpack.c.l.b16 %v577
      %v586 = vunpack.c.l.b16 %v578
      %v587 = vunpack.c.l.b16 %v579
      %v588 = vunpack.c.l.b16 %v580
      %v589 = vpack.c.b16 %v586, %v585
      %v590 = vpack.c.b16 %v588, %v587
      %v592 = vsel %vm464, %v589, 0
      %v595 = vsel %vm464, %v590, 0
      %597 = vmatpush.bf16.msra.mxu0 0
      %598 = vmatpush.bf16.msra.mxu0 0
      %599 = vmatpush.bf16.msra.mxu0 0
      %600 = vmatpush.bf16.msra.mxu0 0
      %601 = vmatpush.bf16.msra.mxu0 0
      %602 = vmatpush.bf16.msra.mxu0 0
      %603 = vmatpush.bf16.msra.mxu0 %v575
      %604 = vmatpush.bf16.msra.mxu0 %v574
      %605 = vmatmul.bf16.gmra.mxu0 %v592
      %v606 = vpop.f32.mrf.mxu0
      %v607 = vadd.f32 0.0, %v606
      %v608 = vpop.f32.mrf.mxu0
      %v609 = vadd.f32 0.0, %v608
      %610 = vmatmul.bf16.gmra.mxu0 %v595
      %v611 = vpop.f32.mrf.mxu0
      %v612 = vadd.f32 0.0, %v611
      %v613 = vpop.f32.mrf.mxu0
      %v614 = vadd.f32 0.0, %v613
      %615 = vdwg.mxu0
      %v616 = vld [vmem:[%s4] sm:$0xf]
      %v617 = vld [vmem:[%s4 + $0x4] sm:$0xf]
      %v618 = vld [vmem:[%s4 + $0x8] sm:$0xf]
      %v619 = vld [vmem:[%s4 + $0xc] sm:$0xf]
      %v620 = vld [vmem:[%s5] sm:$0xff]
      %v621 = vld [vmem:[%s5 + $0x8] sm:$0xff]
      %v622 = vld [vmem:[%s5 + $0x10] sm:$0xff]
      %v623 = vld [vmem:[%s5 + $0x18] sm:$0xff]
      %v624 = vpack.c.bf16 %v539, %v538
      %v625 = vpack.c.bf16 %v541, %v540
      %v630 = vunpack.c.l.b16 %v616
      %v631 = vunpack.c.l.b16 %v617
      %v632 = vunpack.c.l.b16 %v618
      %v633 = vunpack.c.l.b16 %v619
      %v634 = vpack.c.b16 %v631, %v630
      %v635 = vpack.c.b16 %v633, %v632
      %v637 = vsel %vm464, %v634, 0
      %v640 = vsel %vm464, %v635, 0
      %642 = vmatpush.bf16.msra.mxu0 0
      %643 = vmatpush.bf16.msra.mxu0 0
      %644 = vmatpush.bf16.msra.mxu0 0
      %645 = vmatpush.bf16.msra.mxu0 0
      %646 = vmatpush.bf16.msra.mxu0 0
      %647 = vmatpush.bf16.msra.mxu0 0
      %648 = vmatpush.bf16.msra.mxu0 %v625
      %649 = vmatpush.bf16.msra.mxu0 %v624
      %650 = vmatmul.bf16.gmra.mxu0 %v637
      %v651 = vpop.f32.mrf.mxu0
      %v652 = vadd.f32 %v607, %v651
      %v653 = vpop.f32.mrf.mxu0
      %v654 = vadd.f32 %v609, %v653
      %655 = vmatmul.bf16.gmra.mxu0 %v640
      %v656 = vpop.f32.mrf.mxu0
      %v657 = vadd.f32 %v612, %v656
      %v658 = vpop.f32.mrf.mxu0
      %v659 = vadd.f32 %v614, %v658
      %660 = vdwg.mxu0
      %662 = vset.pattern.permute.xlu0 1
      %663 = vperm.xlu0 %662, %v620
      %v664 = vpop.permute.xlu0 %663
      %667 = vset.pattern.permute.xlu0 1
      %668 = vperm.xlu0 %667, %v621
      %v669 = vpop.permute.xlu0 %668
      %672 = vset.pattern.permute.xlu0 1
      %673 = vperm.xlu0 %672, %v622
      %v674 = vpop.permute.xlu0 %673
      %677 = vset.pattern.permute.xlu0 1
      %678 = vperm.xlu0 %677, %v623
      %v679 = vpop.permute.xlu0 %678
      %v681 = vadd.f32 %v652, %v664
      %v682 = vadd.f32 %v654, %v669
      %v683 = vadd.f32 %v657, %v674
      %v684 = vadd.f32 %v659, %v679
      %v685 = vmax.f32 %v681, 0.0
      %v686 = vmax.f32 %v682, 0.0
      %v687 = vmax.f32 %v683, 0.0
      %v688 = vmax.f32 %v684, 0.0
      %v689 = vpack.c.bf16 %v543, %v542
      %v690 = vpack.c.bf16 %v545, %v544
      %695 = vrot.lane.b32.xlu0 %v607, 126
      %v696 = vpop.permute.xlu0 %695
      %697 = vrot.lane.b32.xlu0 %v609, 126
      %v698 = vpop.permute.xlu0 %697
      %699 = vrot.lane.b32.xlu0 %v612, 126
      %v700 = vpop.permute.xlu0 %699
      %701 = vrot.lane.b32.xlu0 %v614, 126
      %v702 = vpop.permute.xlu0 %701
      %707 = vmatpush.bf16.msra.mxu0 0
      %708 = vmatpush.bf16.msra.mxu0 0
      %709 = vmatpush.bf16.msra.mxu0 0
      %710 = vmatpush.bf16.msra.mxu0 0
      %711 = vmatpush.bf16.msra.mxu0 0
      %712 = vmatpush.bf16.msra.mxu0 0
      %713 = vmatpush.bf16.msra.mxu0 %v690
      %714 = vmatpush.bf16.msra.mxu0 %v689
      %715 = vmatmul.bf16.gmra.mxu0 %v637
      %v716 = vpop.f32.mrf.mxu0
      %v717 = vadd.f32 %v696, %v716
      %v718 = vpop.f32.mrf.mxu0
      %v719 = vadd.f32 %v698, %v718
      %720 = vmatmul.bf16.gmra.mxu0 %v640
      %v721 = vpop.f32.mrf.mxu0
      %v722 = vadd.f32 %v700, %v721
      %v723 = vpop.f32.mrf.mxu0
      %v724 = vadd.f32 %v702, %v723
      %725 = vdwg.mxu0
      %v726 = vadd.f32 %v717, %v664
      %v727 = vadd.f32 %v719, %v669
      %v728 = vadd.f32 %v722, %v674
      %v729 = vadd.f32 %v724, %v679
      %v730 = vmax.f32 %v726, 0.0
      %v731 = vmax.f32 %v727, 0.0
      %v732 = vmax.f32 %v728, 0.0
      %v733 = vmax.f32 %v729, 0.0
      %v734 = vpack.c.bf16 %v547, %v546
      %v735 = vpack.c.bf16 %v549, %v548
      %736 = vrot.lane.b32.xlu0 %v607, 124
      %v737 = vpop.permute.xlu0 %736
      %738 = vrot.lane.b32.xlu0 %v609, 124
      %v739 = vpop.permute.xlu0 %738
      %740 = vrot.lane.b32.xlu0 %v612, 124
      %v741 = vpop.permute.xlu0 %740
      %742 = vrot.lane.b32.xlu0 %v614, 124
      %v743 = vpop.permute.xlu0 %742
      %748 = vmatpush.bf16.msra.mxu0 0
      %749 = vmatpush.bf16.msra.mxu0 0
      %750 = vmatpush.bf16.msra.mxu0 0
      %751 = vmatpush.bf16.msra.mxu0 0
      %752 = vmatpush.bf16.msra.mxu0 0
      %753 = vmatpush.bf16.msra.mxu0 0
      %754 = vmatpush.bf16.msra.mxu0 %v735
      %755 = vmatpush.bf16.msra.mxu0 %v734
      %756 = vmatmul.bf16.gmra.mxu0 %v637
      %v757 = vpop.f32.mrf.mxu0
      %v758 = vadd.f32 %v737, %v757
      %v759 = vpop.f32.mrf.mxu0
      %v760 = vadd.f32 %v739, %v759
      %761 = vmatmul.bf16.gmra.mxu0 %v640
      %v762 = vpop.f32.mrf.mxu0
      %v763 = vadd.f32 %v741, %v762
      %v764 = vpop.f32.mrf.mxu0
      %v765 = vadd.f32 %v743, %v764
      %766 = vdwg.mxu0
      %v767 = vadd.f32 %v758, %v664
      %v768 = vadd.f32 %v760, %v669
      %v769 = vadd.f32 %v763, %v674
      %v770 = vadd.f32 %v765, %v679
      %v771 = vmax.f32 %v767, 0.0
      %v772 = vmax.f32 %v768, 0.0
      %v773 = vmax.f32 %v769, 0.0
      %v774 = vmax.f32 %v770, 0.0
      %v775 = vpack.c.bf16 %v551, %v550
      %v776 = vpack.c.bf16 %v553, %v552
      %777 = vrot.lane.b32.xlu0 %v607, 122
      %v778 = vpop.permute.xlu0 %777
      %779 = vrot.lane.b32.xlu0 %v609, 122
      %v780 = vpop.permute.xlu0 %779
      %781 = vrot.lane.b32.xlu0 %v612, 122
      %v782 = vpop.permute.xlu0 %781
      %783 = vrot.lane.b32.xlu0 %v614, 122
      %v784 = vpop.permute.xlu0 %783
      %789 = vmatpush.bf16.msra.mxu0 0
      %790 = vmatpush.bf16.msra.mxu0 0
      %791 = vmatpush.bf16.msra.mxu0 0
      %792 = vmatpush.bf16.msra.mxu0 0
      %793 = vmatpush.bf16.msra.mxu0 0
      %794 = vmatpush.bf16.msra.mxu0 0
      %795 = vmatpush.bf16.msra.mxu0 %v776
      %796 = vmatpush.bf16.msra.mxu0 %v775
      %797 = vmatmul.bf16.gmra.mxu0 %v637
      %v798 = vpop.f32.mrf.mxu0
      %v799 = vadd.f32 %v778, %v798
      %v800 = vpop.f32.mrf.mxu0
      %v801 = vadd.f32 %v780, %v800
      %802 = vmatmul.bf16.gmra.mxu0 %v640
      %v803 = vpop.f32.mrf.mxu0
      %v804 = vadd.f32 %v782, %v803
      %v805 = vpop.f32.mrf.mxu0
      %v806 = vadd.f32 %v784, %v805
      %807 = vdwg.mxu0
      %v808 = vadd.f32 %v799, %v664
      %v809 = vadd.f32 %v801, %v669
      %v810 = vadd.f32 %v804, %v674
      %v811 = vadd.f32 %v806, %v679
      %v812 = vmax.f32 %v808, 0.0
      %v813 = vmax.f32 %v809, 0.0
      %v814 = vmax.f32 %v810, 0.0
      %v815 = vmax.f32 %v811, 0.0
      %820 = vrot.lane.b32.xlu0 %v730, 2
      %v821 = vpop.permute.xlu0 %820
      %822 = vrot.lane.b32.xlu0 %v731, 2
      %v823 = vpop.permute.xlu0 %822
      %824 = vrot.lane.b32.xlu0 %v732, 2
      %v825 = vpop.permute.xlu0 %824
      %826 = vrot.lane.b32.xlu0 %v733, 2
      %v827 = vpop.permute.xlu0 %826
      %836 = vrot.lane.b32.xlu0 %v771, 4
      %v837 = vpop.permute.xlu0 %836
      %838 = vrot.lane.b32.xlu0 %v772, 4
      %v839 = vpop.permute.xlu0 %838
      %840 = vrot.lane.b32.xlu0 %v773, 4
      %v841 = vpop.permute.xlu0 %840
      %842 = vrot.lane.b32.xlu0 %v774, 4
      %v843 = vpop.permute.xlu0 %842
      %852 = vrot.lane.b32.xlu0 %v812, 6
      %v853 = vpop.permute.xlu0 %852
      %854 = vrot.lane.b32.xlu0 %v813, 6
      %v855 = vpop.permute.xlu0 %854
      %856 = vrot.lane.b32.xlu0 %v814, 6
      %v857 = vpop.permute.xlu0 %856
      %858 = vrot.lane.b32.xlu0 %v815, 6
      %v859 = vpop.permute.xlu0 %858
      %vm864 = vcmask 15360
      %v865 = vsel %vm864, %v685, %v821
      %v866 = vsel %vm864, %v686, %v823
      %v867 = vsel %vm864, %v687, %v825
      %v868 = vsel %vm864, %v688, %v827
      %vm869 = vcmask 31744
      %v870 = vsel %vm869, %v865, %v837
      %v871 = vsel %vm869, %v866, %v839
      %v872 = vsel %vm869, %v867, %v841
      %v873 = vsel %vm869, %v868, %v843
      %vm874 = vcmask 48128
      %v875 = vsel %vm874, %v870, %v853
      %v876 = vsel %vm874, %v871, %v855
      %v877 = vsel %vm874, %v872, %v857
      %v878 = vsel %vm874, %v873, %v859
      %s879 = scalar_lea.vmem %s3, 64
      %v880 = vld [vmem:[%s879] sm:$0xf]
      %v881 = vld [vmem:[%s879 + $0x4] sm:$0xf]
      %v882 = vld [vmem:[%s879 + $0x8] sm:$0xf]
      %v883 = vld [vmem:[%s879 + $0xc] sm:$0xf]
      %v884 = vld [vmem:[%s879 + $0x10] sm:$0xf]
      %v885 = vld [vmem:[%s879 + $0x14] sm:$0xf]
      %v886 = vld [vmem:[%s879 + $0x18] sm:$0xf]
      %v887 = vld [vmem:[%s879 + $0x1c] sm:$0xf]
      %s888 = scalar_lea.vmem %s5, 128
      %v889 = vld [vmem:[%s888] sm:$0xff]
      %v890 = vld [vmem:[%s888 + $0x8] sm:$0xff]
      %v891 = vld [vmem:[%s888 + $0x10] sm:$0xff]
      %v892 = vld [vmem:[%s888 + $0x18] sm:$0xff]
      %v893 = vld [vmem:[%s888 + $0x20] sm:$0xff]
      %v894 = vld [vmem:[%s888 + $0x28] sm:$0xff]
      %v895 = vld [vmem:[%s888 + $0x30] sm:$0xff]
      %v896 = vld [vmem:[%s888 + $0x38] sm:$0xff]
      %v897 = vpack.c.bf16 %v876, %v875
      %v898 = vpack.c.bf16 %v878, %v877
      %900 = vset.pattern.permute.xlu0 0
      %901 = vperm.xlu0 %900, %v889
      %v902 = vpop.permute.xlu0 %901
      %905 = vset.pattern.permute.xlu0 0
      %906 = vperm.xlu0 %905, %v890
      %v907 = vpop.permute.xlu0 %906
      %910 = vset.pattern.permute.xlu0 0
      %911 = vperm.xlu0 %910, %v891
      %v912 = vpop.permute.xlu0 %911
      %915 = vset.pattern.permute.xlu0 0
      %916 = vperm.xlu0 %915, %v892
      %v917 = vpop.permute.xlu0 %916
      %920 = vset.pattern.permute.xlu0 0
      %921 = vperm.xlu0 %920, %v893
      %v922 = vpop.permute.xlu0 %921
      %925 = vset.pattern.permute.xlu0 0
      %926 = vperm.xlu0 %925, %v894
      %v927 = vpop.permute.xlu0 %926
      %930 = vset.pattern.permute.xlu0 0
      %931 = vperm.xlu0 %930, %v895
      %v932 = vpop.permute.xlu0 %931
      %935 = vset.pattern.permute.xlu0 0
      %936 = vperm.xlu0 %935, %v896
      %v937 = vpop.permute.xlu0 %936
      %v947 = vunpack.c.l.b16 %v880
      %v948 = vunpack.c.l.b16 %v881
      %v949 = vunpack.c.l.b16 %v882
      %v950 = vunpack.c.l.b16 %v883
      %v951 = vunpack.c.l.b16 %v884
      %v952 = vunpack.c.l.b16 %v885
      %v953 = vunpack.c.l.b16 %v886
      %v954 = vunpack.c.l.b16 %v887
      %v955 = vpack.c.b16 %v948, %v947
      %v956 = vpack.c.b16 %v950, %v949
      %v957 = vpack.c.b16 %v952, %v951
      %v958 = vpack.c.b16 %v954, %v953
      %v960 = vsel %vm464, %v955, 0
      %v963 = vsel %vm464, %v956, 0
      %v966 = vsel %vm464, %v957, 0
      %v969 = vsel %vm464, %v958, 0
      %971 = vmatpush.bf16.msra.mxu0 0
      %972 = vmatpush.bf16.msra.mxu0 0
      %973 = vmatpush.bf16.msra.mxu0 0
      %974 = vmatpush.bf16.msra.mxu0 0
      %975 = vmatpush.bf16.msra.mxu0 0
      %976 = vmatpush.bf16.msra.mxu0 0
      %977 = vmatpush.bf16.msra.mxu0 %v898
      %978 = vmatpush.bf16.msra.mxu0 %v897
      %979 = vmatmul.bf16.gmra.mxu0 %v960
      %v980 = vpop.f32.mrf.mxu0
      %v981 = vadd.f32 %v902, %v980
      %v982 = vpop.f32.mrf.mxu0
      %v983 = vadd.f32 %v907, %v982
      %984 = vmatmul.bf16.gmra.mxu0 %v963
      %v985 = vpop.f32.mrf.mxu0
      %v986 = vadd.f32 %v912, %v985
      %v987 = vpop.f32.mrf.mxu0
      %v988 = vadd.f32 %v917, %v987
      %989 = vmatmul.bf16.gmra.mxu0 %v966
      %v990 = vpop.f32.mrf.mxu0
      %v991 = vadd.f32 %v922, %v990
      %v992 = vpop.f32.mrf.mxu0
      %v993 = vadd.f32 %v927, %v992
      %994 = vmatmul.bf16.gmra.mxu0 %v969
      %v995 = vpop.f32.mrf.mxu0
      %v996 = vadd.f32 %v932, %v995
      %v997 = vpop.f32.mrf.mxu0
      %v998 = vadd.f32 %v937, %v997
      %999 = vdwg.mxu0
      %v1000 = vmax.f32 %v981, 0.0
      %v1001 = vmax.f32 %v983, 0.0
      %v1002 = vmax.f32 %v986, 0.0
      %v1003 = vmax.f32 %v988, 0.0
      %v1004 = vmax.f32 %v991, 0.0
      %v1005 = vmax.f32 %v993, 0.0
      %v1006 = vmax.f32 %v996, 0.0
      %v1007 = vmax.f32 %v998, 0.0
      %v1008 = vld [vmem:[%s1 + $0x28] sm:$0xff]
      %v1009 = vld [vmem:[%s1 + $0x70] sm:$0xff]
      %v1010 = vld [vmem:[%s291 + $0x28] sm:$0xff]
      %v1011 = vld [vmem:[%s291 + $0x70] sm:$0xff]
      %v1012 = vmul.f32 %v296, %v1008
      %v1013 = vmul.f32 %v296, %v1009
      %v1014 = vmul.f32 %v301, %v1010
      %v1015 = vmul.f32 %v301, %v1011
      %v1016 = vadd.f32 %v1012, %v1014
      %v1017 = vadd.f32 %v1013, %v1015
      %v1018 = vpack.c.bf16 %v1017, %v1016
      %s1019 = scalar_lea.vmem %s4, 48
      %v1020 = vld [vmem:[%s1019] sm:$0xf]
      %v1021 = vld [vmem:[%s1019 + $0x4] sm:$0xf]
      %v1024 = vunpack.c.l.b16 %v1020
      %v1025 = vunpack.c.l.b16 %v1021
      %v1026 = vpack.c.b16 %v1025, %v1024
      %vm1027 = vcmask 130048
      %v1029 = vsel %vm1027, %v1026, 0
      %1031 = vmatpush.bf16.msra.mxu0 0
      %1032 = vmatpush.bf16.msra.mxu0 0
      %1033 = vmatpush.bf16.msra.mxu0 0
      %1034 = vmatpush.bf16.msra.mxu0 0
      %1035 = vmatpush.bf16.msra.mxu0 0
      %1036 = vmatpush.bf16.msra.mxu0 0
      %1037 = vmatpush.bf16.msra.mxu0 0
      %1038 = vmatpush.bf16.msra.mxu0 %v1018
      %1039 = vmatmul.bf16.gmra.mxu0 %v1029
      %v1040 = vpop.f32.mrf.mxu0
      %v1041 = vadd.f32 0.0, %v1040
      %v1042 = vpop.f32.mrf.mxu0
      %v1043 = vadd.f32 0.0, %v1042
      %1044 = vdwg.mxu0
      %s1045 = scalar_lea.vmem %s4, 32
      %v1046 = vld [vmem:[%s1045] sm:$0xf]
      %v1047 = vld [vmem:[%s1045 + $0x4] sm:$0xf]
      %v1048 = vld [vmem:[%s888] sm:$0xff]
      %v1049 = vld [vmem:[%s888 + $0x8] sm:$0xff]
      %v1050 = vpack.c.bf16 %v1001, %v1000
      %v1053 = vunpack.c.l.b16 %v1046
      %v1054 = vunpack.c.l.b16 %v1047
      %v1055 = vpack.c.b16 %v1054, %v1053
      %v1057 = vsel %vm1027, %v1055, 0
      %1059 = vmatpush.bf16.msra.mxu0 0
      %1060 = vmatpush.bf16.msra.mxu0 0
      %1061 = vmatpush.bf16.msra.mxu0 0
      %1062 = vmatpush.bf16.msra.mxu0 0
      %1063 = vmatpush.bf16.msra.mxu0 0
      %1064 = vmatpush.bf16.msra.mxu0 0
      %1065 = vmatpush.bf16.msra.mxu0 0
      %1066 = vmatpush.bf16.msra.mxu0 %v1050
      %1067 = vmatmul.bf16.gmra.mxu0 %v1057
      %v1068 = vpop.f32.mrf.mxu0
      %v1069 = vadd.f32 %v1041, %v1068
      %v1070 = vpop.f32.mrf.mxu0
      %v1071 = vadd.f32 %v1043, %v1070
      %1072 = vdwg.mxu0
      %1074 = vset.pattern.permute.xlu0 1
      %1075 = vperm.xlu0 %1074, %v1048
      %v1076 = vpop.permute.xlu0 %1075
      %1079 = vset.pattern.permute.xlu0 1
      %1080 = vperm.xlu0 %1079, %v1049
      %v1081 = vpop.permute.xlu0 %1080
      %v1083 = vadd.f32 %v1069, %v1076
      %v1084 = vadd.f32 %v1071, %v1081
      %v1085 = vmax.f32 %v1083, 0.0
      %v1086 = vmax.f32 %v1084, 0.0
      %v1087 = vpack.c.bf16 %v1003, %v1002
      %1090 = vrot.lane.b32.xlu0 %v1041, 120
      %v1091 = vpop.permute.xlu0 %1090
      %1092 = vrot.lane.b32.xlu0 %v1043, 120
      %v1093 = vpop.permute.xlu0 %1092
      %1096 = vmatpush.bf16.msra.mxu0 0
      %1097 = vmatpush.bf16.msra.mxu0 0
      %1098 = vmatpush.bf16.msra.mxu0 0
      %1099 = vmatpush.bf16.msra.mxu0 0
      %1100 = vmatpush.bf16.msra.mxu0 0
      %1101 = vmatpush.bf16.msra.mxu0 0
      %1102 = vmatpush.bf16.msra.mxu0 0
      %1103 = vmatpush.bf16.msra.mxu0 %v1087
      %1104 = vmatmul.bf16.gmra.mxu0 %v1057
      %v1105 = vpop.f32.mrf.mxu0
      %v1106 = vadd.f32 %v1091, %v1105
      %v1107 = vpop.f32.mrf.mxu0
      %v1108 = vadd.f32 %v1093, %v1107
      %1109 = vdwg.mxu0
      %v1110 = vadd.f32 %v1106, %v1076
      %v1111 = vadd.f32 %v1108, %v1081
      %v1112 = vmax.f32 %v1110, 0.0
      %v1113 = vmax.f32 %v1111, 0.0
      %v1114 = vpack.c.bf16 %v1005, %v1004
      %1115 = vrot.lane.b32.xlu0 %v1041, 112
      %v1116 = vpop.permute.xlu0 %1115
      %1117 = vrot.lane.b32.xlu0 %v1043, 112
      %v1118 = vpop.permute.xlu0 %1117
      %1121 = vmatpush.bf16.msra.mxu0 0
      %1122 = vmatpush.bf16.msra.mxu0 0
      %1123 = vmatpush.bf16.msra.mxu0 0
      %1124 = vmatpush.bf16.msra.mxu0 0
      %1125 = vmatpush.bf16.msra.mxu0 0
      %1126 = vmatpush.bf16.msra.mxu0 0
      %1127 = vmatpush.bf16.msra.mxu0 0
      %1128 = vmatpush.bf16.msra.mxu0 %v1114
      %1129 = vmatmul.bf16.gmra.mxu0 %v1057
      %v1130 = vpop.f32.mrf.mxu0
      %v1131 = vadd.f32 %v1116, %v1130
      %v1132 = vpop.f32.mrf.mxu0
      %v1133 = vadd.f32 %v1118, %v1132
      %1134 = vdwg.mxu0
      %v1135 = vadd.f32 %v1131, %v1076
      %v1136 = vadd.f32 %v1133, %v1081
      %v1137 = vmax.f32 %v1135, 0.0
      %v1138 = vmax.f32 %v1136, 0.0
      %v1139 = vpack.c.bf16 %v1007, %v1006
      %1140 = vrot.lane.b32.xlu0 %v1041, 104
      %v1141 = vpop.permute.xlu0 %1140
      %1142 = vrot.lane.b32.xlu0 %v1043, 104
      %v1143 = vpop.permute.xlu0 %1142
      %1146 = vmatpush.bf16.msra.mxu0 0
      %1147 = vmatpush.bf16.msra.mxu0 0
      %1148 = vmatpush.bf16.msra.mxu0 0
      %1149 = vmatpush.bf16.msra.mxu0 0
      %1150 = vmatpush.bf16.msra.mxu0 0
      %1151 = vmatpush.bf16.msra.mxu0 0
      %1152 = vmatpush.bf16.msra.mxu0 0
      %1153 = vmatpush.bf16.msra.mxu0 %v1139
      %1154 = vmatmul.bf16.gmra.mxu0 %v1057
      %v1155 = vpop.f32.mrf.mxu0
      %v1156 = vadd.f32 %v1141, %v1155
      %v1157 = vpop.f32.mrf.mxu0
      %v1158 = vadd.f32 %v1143, %v1157
      %1159 = vdwg.mxu0
      %v1160 = vadd.f32 %v1156, %v1076
      %v1161 = vadd.f32 %v1158, %v1081
      %v1162 = vmax.f32 %v1160, 0.0
      %v1163 = vmax.f32 %v1161, 0.0
      %1166 = vrot.lane.b32.xlu0 %v1112, 8
      %v1167 = vpop.permute.xlu0 %1166
      %1168 = vrot.lane.b32.xlu0 %v1113, 8
      %v1169 = vpop.permute.xlu0 %1168
      %1174 = vrot.lane.b32.xlu0 %v1137, 16
      %v1175 = vpop.permute.xlu0 %1174
      %1176 = vrot.lane.b32.xlu0 %v1138, 16
      %v1177 = vpop.permute.xlu0 %1176
      %1182 = vrot.lane.b32.xlu0 %v1162, 24
      %v1183 = vpop.permute.xlu0 %1182
      %1184 = vrot.lane.b32.xlu0 %v1163, 24
      %v1185 = vpop.permute.xlu0 %1184
      %vm1188 = vcmask 64512
      %v1189 = vsel %vm1188, %v1085, %v1167
      %v1190 = vsel %vm1188, %v1086, %v1169
      %v1191 = vsel %vm1027, %v1189, %v1175
      %v1192 = vsel %vm1027, %v1190, %v1177
      %vm1193 = vcmask 195584
      %v1194 = vsel %vm1193, %v1191, %v1183
      %v1195 = vsel %vm1193, %v1192, %v1185
      %s1196 = scalar_lea.vmem %s3, 128
      %v1197 = vld [vmem:[%s1196] sm:$0xf]
      %v1198 = vld [vmem:[%s1196 + $0x4] sm:$0xf]
      %v1199 = vld [vmem:[%s1196 + $0x8] sm:$0xf]
      %v1200 = vld [vmem:[%s1196 + $0xc] sm:$0xf]
      %v1201 = vld [vmem:[%s1196 + $0x10] sm:$0xf]
      %v1202 = vld [vmem:[%s1196 + $0x14] sm:$0xf]
      %v1203 = vld [vmem:[%s1196 + $0x18] sm:$0xf]
      %v1204 = vld [vmem:[%s1196 + $0x1c] sm:$0xf]
      %s1205 = scalar_lea.vmem %s5, 256
      %v1206 = vld [vmem:[%s1205] sm:$0xff]
      %v1207 = vld [vmem:[%s1205 + $0x8] sm:$0xff]
      %v1208 = vld [vmem:[%s1205 + $0x10] sm:$0xff]
      %v1209 = vld [vmem:[%s1205 + $0x18] sm:$0xff]
      %v1210 = vld [vmem:[%s1205 + $0x20] sm:$0xff]
      %v1211 = vld [vmem:[%s1205 + $0x28] sm:$0xff]
      %v1212 = vld [vmem:[%s1205 + $0x30] sm:$0xff]
      %v1213 = vld [vmem:[%s1205 + $0x38] sm:$0xff]
      %v1214 = vpack.c.bf16 %v1195, %v1194
      %1216 = vset.pattern.permute.xlu0 0
      %1217 = vperm.xlu0 %1216, %v1206
      %v1218 = vpop.permute.xlu0 %1217
      %1221 = vset.pattern.permute.xlu0 0
      %1222 = vperm.xlu0 %1221, %v1207
      %v1223 = vpop.permute.xlu0 %1222
      %1226 = vset.pattern.permute.xlu0 0
      %1227 = vperm.xlu0 %1226, %v1208
      %v1228 = vpop.permute.xlu0 %1227
      %1231 = vset.pattern.permute.xlu0 0
      %1232 = vperm.xlu0 %1231, %v1209
      %v1233 = vpop.permute.xlu0 %1232
      %1236 = vset.pattern.permute.xlu0 0
      %1237 = vperm.xlu0 %1236, %v1210
      %v1238 = vpop.permute.xlu0 %1237
      %1241 = vset.pattern.permute.xlu0 0
      %1242 = vperm.xlu0 %1241, %v1211
      %v1243 = vpop.permute.xlu0 %1242
      %1246 = vset.pattern.permute.xlu0 0
      %1247 = vperm.xlu0 %1246, %v1212
      %v1248 = vpop.permute.xlu0 %1247
      %1251 = vset.pattern.permute.xlu0 0
      %1252 = vperm.xlu0 %1251, %v1213
      %v1253 = vpop.permute.xlu0 %1252
      %v1263 = vunpack.c.l.b16 %v1197
      %v1264 = vunpack.c.l.b16 %v1198
      %v1265 = vunpack.c.l.b16 %v1199
      %v1266 = vunpack.c.l.b16 %v1200
      %v1267 = vunpack.c.l.b16 %v1201
      %v1268 = vunpack.c.l.b16 %v1202
      %v1269 = vunpack.c.l.b16 %v1203
      %v1270 = vunpack.c.l.b16 %v1204
      %v1271 = vpack.c.b16 %v1264, %v1263
      %v1272 = vpack.c.b16 %v1266, %v1265
      %v1273 = vpack.c.b16 %v1268, %v1267
      %v1274 = vpack.c.b16 %v1270, %v1269
      %v1276 = vsel %vm1027, %v1271, 0
      %v1279 = vsel %vm1027, %v1272, 0
      %v1282 = vsel %vm1027, %v1273, 0
      %v1285 = vsel %vm1027, %v1274, 0
      %1287 = vmatpush.bf16.msra.mxu0 0
      %1288 = vmatpush.bf16.msra.mxu0 0
      %1289 = vmatpush.bf16.msra.mxu0 0
      %1290 = vmatpush.bf16.msra.mxu0 0
      %1291 = vmatpush.bf16.msra.mxu0 0
      %1292 = vmatpush.bf16.msra.mxu0 0
      %1293 = vmatpush.bf16.msra.mxu0 0
      %1294 = vmatpush.bf16.msra.mxu0 %v1214
      %1295 = vmatmul.bf16.gmra.mxu0 %v1276
      %v1296 = vpop.f32.mrf.mxu0
      %v1297 = vadd.f32 %v1218, %v1296
      %v1298 = vpop.f32.mrf.mxu0
      %v1299 = vadd.f32 %v1223, %v1298
      %1300 = vmatmul.bf16.gmra.mxu0 %v1279
      %v1301 = vpop.f32.mrf.mxu0
      %v1302 = vadd.f32 %v1228, %v1301
      %v1303 = vpop.f32.mrf.mxu0
      %v1304 = vadd.f32 %v1233, %v1303
      %1305 = vmatmul.bf16.gmra.mxu0 %v1282
      %v1306 = vpop.f32.mrf.mxu0
      %v1307 = vadd.f32 %v1238, %v1306
      %v1308 = vpop.f32.mrf.mxu0
      %v1309 = vadd.f32 %v1243, %v1308
      %1310 = vmatmul.bf16.gmra.mxu0 %v1285
      %v1311 = vpop.f32.mrf.mxu0
      %v1312 = vadd.f32 %v1248, %v1311
      %v1313 = vpop.f32.mrf.mxu0
      %v1314 = vadd.f32 %v1253, %v1313
      %1315 = vdwg.mxu0
      %v1316 = vmax.f32 %v1297, 0.0
      %v1317 = vmax.f32 %v1299, 0.0
      %v1318 = vmax.f32 %v1302, 0.0
      %v1319 = vmax.f32 %v1304, 0.0
      %v1320 = vmax.f32 %v1307, 0.0
      %v1321 = vmax.f32 %v1309, 0.0
      %v1322 = vmax.f32 %v1312, 0.0
      %v1323 = vmax.f32 %v1314, 0.0
      %v1324 = vld [vmem:[%s1 + $0x20] sm:$0xff]
      %v1325 = vld [vmem:[%s1 + $0x68] sm:$0xff]
      %v1326 = vld [vmem:[%s291 + $0x20] sm:$0xff]
      %v1327 = vld [vmem:[%s291 + $0x68] sm:$0xff]
      %v1328 = vmul.f32 %v296, %v1324
      %v1329 = vmul.f32 %v296, %v1325
      %v1330 = vmul.f32 %v301, %v1326
      %v1331 = vmul.f32 %v301, %v1327
      %v1332 = vadd.f32 %v1328, %v1330
      %v1333 = vadd.f32 %v1329, %v1331
      %v1334 = vpack.c.bf16 %v1333, %v1332
      %s1335 = scalar_lea.vmem %s4, 80
      %v1336 = vld [vmem:[%s1335] sm:$0xf]
      %v1337 = vld [vmem:[%s1335 + $0x4] sm:$0xf]
      %v1340 = vunpack.c.l.b16 %v1336
      %v1341 = vunpack.c.l.b16 %v1337
      %v1342 = vpack.c.b16 %v1341, %v1340
      %v1344 = vsel %vm1027, %v1342, 0
      %1346 = vmatpush.bf16.msra.mxu0 0
      %1347 = vmatpush.bf16.msra.mxu0 0
      %1348 = vmatpush.bf16.msra.mxu0 0
      %1349 = vmatpush.bf16.msra.mxu0 0
      %1350 = vmatpush.bf16.msra.mxu0 0
      %1351 = vmatpush.bf16.msra.mxu0 0
      %1352 = vmatpush.bf16.msra.mxu0 0
      %1353 = vmatpush.bf16.msra.mxu0 %v1334
      %1354 = vmatmul.bf16.gmra.mxu0 %v1344
      %v1355 = vpop.f32.mrf.mxu0
      %v1356 = vadd.f32 0.0, %v1355
      %v1357 = vpop.f32.mrf.mxu0
      %v1358 = vadd.f32 0.0, %v1357
      %1359 = vdwg.mxu0
      %s1360 = scalar_lea.vmem %s4, 64
      %v1361 = vld [vmem:[%s1360] sm:$0xf]
      %v1362 = vld [vmem:[%s1360 + $0x4] sm:$0xf]
      %v1363 = vld [vmem:[%s1205] sm:$0xff]
      %v1364 = vld [vmem:[%s1205 + $0x8] sm:$0xff]
      %v1365 = vpack.c.bf16 %v1317, %v1316
      %v1368 = vunpack.c.l.b16 %v1361
      %v1369 = vunpack.c.l.b16 %v1362
      %v1370 = vpack.c.b16 %v1369, %v1368
      %v1372 = vsel %vm1027, %v1370, 0
      %1374 = vmatpush.bf16.msra.mxu0 0
      %1375 = vmatpush.bf16.msra.mxu0 0
      %1376 = vmatpush.bf16.msra.mxu0 0
      %1377 = vmatpush.bf16.msra.mxu0 0
      %1378 = vmatpush.bf16.msra.mxu0 0
      %1379 = vmatpush.bf16.msra.mxu0 0
      %1380 = vmatpush.bf16.msra.mxu0 0
      %1381 = vmatpush.bf16.msra.mxu0 %v1365
      %1382 = vmatmul.bf16.gmra.mxu0 %v1372
      %v1383 = vpop.f32.mrf.mxu0
      %v1384 = vadd.f32 %v1356, %v1383
      %v1385 = vpop.f32.mrf.mxu0
      %v1386 = vadd.f32 %v1358, %v1385
      %1387 = vdwg.mxu0
      %1389 = vset.pattern.permute.xlu0 1
      %1390 = vperm.xlu0 %1389, %v1363
      %v1391 = vpop.permute.xlu0 %1390
      %1394 = vset.pattern.permute.xlu0 1
      %1395 = vperm.xlu0 %1394, %v1364
      %v1396 = vpop.permute.xlu0 %1395
      %v1398 = vadd.f32 %v1384, %v1391
      %v1399 = vadd.f32 %v1386, %v1396
      %v1400 = vmax.f32 %v1398, 0.0
      %v1401 = vmax.f32 %v1399, 0.0
      %v1402 = vpack.c.bf16 %v1319, %v1318
      %1405 = vrot.lane.b32.xlu0 %v1356, 96
      %v1406 = vpop.permute.xlu0 %1405
      %1407 = vrot.lane.b32.xlu0 %v1358, 96
      %v1408 = vpop.permute.xlu0 %1407
      %1411 = vmatpush.bf16.msra.mxu0 0
      %1412 = vmatpush.bf16.msra.mxu0 0
      %1413 = vmatpush.bf16.msra.mxu0 0
      %1414 = vmatpush.bf16.msra.mxu0 0
      %1415 = vmatpush.bf16.msra.mxu0 0
      %1416 = vmatpush.bf16.msra.mxu0 0
      %1417 = vmatpush.bf16.msra.mxu0 0
      %1418 = vmatpush.bf16.msra.mxu0 %v1402
      %1419 = vmatmul.bf16.gmra.mxu0 %v1372
      %v1420 = vpop.f32.mrf.mxu0
      %v1421 = vadd.f32 %v1406, %v1420
      %v1422 = vpop.f32.mrf.mxu0
      %v1423 = vadd.f32 %v1408, %v1422
      %1424 = vdwg.mxu0
      %v1425 = vadd.f32 %v1421, %v1391
      %v1426 = vadd.f32 %v1423, %v1396
      %v1427 = vmax.f32 %v1425, 0.0
      %v1428 = vmax.f32 %v1426, 0.0
      %v1429 = vpack.c.bf16 %v1321, %v1320
      %1430 = vrot.lane.b32.xlu0 %v1356, 64
      %v1431 = vpop.permute.xlu0 %1430
      %1432 = vrot.lane.b32.xlu0 %v1358, 64
      %v1433 = vpop.permute.xlu0 %1432
      %1436 = vmatpush.bf16.msra.mxu0 0
      %1437 = vmatpush.bf16.msra.mxu0 0
      %1438 = vmatpush.bf16.msra.mxu0 0
      %1439 = vmatpush.bf16.msra.mxu0 0
      %1440 = vmatpush.bf16.msra.mxu0 0
      %1441 = vmatpush.bf16.msra.mxu0 0
      %1442 = vmatpush.bf16.msra.mxu0 0
      %1443 = vmatpush.bf16.msra.mxu0 %v1429
      %1444 = vmatmul.bf16.gmra.mxu0 %v1372
      %v1445 = vpop.f32.mrf.mxu0
      %v1446 = vadd.f32 %v1431, %v1445
      %v1447 = vpop.f32.mrf.mxu0
      %v1448 = vadd.f32 %v1433, %v1447
      %1449 = vdwg.mxu0
      %v1450 = vadd.f32 %v1446, %v1391
      %v1451 = vadd.f32 %v1448, %v1396
      %v1452 = vmax.f32 %v1450, 0.0
      %v1453 = vmax.f32 %v1451, 0.0
      %v1454 = vpack.c.bf16 %v1323, %v1322
      %1455 = vrot.lane.b32.xlu0 %v1356, 32
      %v1456 = vpop.permute.xlu0 %1455
      %1457 = vrot.lane.b32.xlu0 %v1358, 32
      %v1458 = vpop.permute.xlu0 %1457
      %1461 = vmatpush.bf16.msra.mxu0 0
      %1462 = vmatpush.bf16.msra.mxu0 0
      %1463 = vmatpush.bf16.msra.mxu0 0
      %1464 = vmatpush.bf16.msra.mxu0 0
      %1465 = vmatpush.bf16.msra.mxu0 0
      %1466 = vmatpush.bf16.msra.mxu0 0
      %1467 = vmatpush.bf16.msra.mxu0 0
      %1468 = vmatpush.bf16.msra.mxu0 %v1454
      %1469 = vmatmul.bf16.gmra.mxu0 %v1372
      %v1470 = vpop.f32.mrf.mxu0
      %v1471 = vadd.f32 %v1456, %v1470
      %v1472 = vpop.f32.mrf.mxu0
      %v1473 = vadd.f32 %v1458, %v1472
      %1474 = vdwg.mxu0
      %v1475 = vadd.f32 %v1471, %v1391
      %v1476 = vadd.f32 %v1473, %v1396
      %v1477 = vmax.f32 %v1475, 0.0
      %v1478 = vmax.f32 %v1476, 0.0
      %1481 = vrot.lane.b32.xlu0 %v1427, 32
      %v1482 = vpop.permute.xlu0 %1481
      %1483 = vrot.lane.b32.xlu0 %v1428, 32
      %v1484 = vpop.permute.xlu0 %1483
      %1489 = vrot.lane.b32.xlu0 %v1452, 64
      %v1490 = vpop.permute.xlu0 %1489
      %1491 = vrot.lane.b32.xlu0 %v1453, 64
      %v1492 = vpop.permute.xlu0 %1491
      %1497 = vrot.lane.b32.xlu0 %v1477, 96
      %v1498 = vpop.permute.xlu0 %1497
      %1499 = vrot.lane.b32.xlu0 %v1478, 96
      %v1500 = vpop.permute.xlu0 %1499
      %v1503 = vsel %vm464, %v1400, %v1482
      %v1504 = vsel %vm464, %v1401, %v1484
      %vm1505 = vcmask 523264
      %v1506 = vsel %vm1505, %v1503, %v1490
      %v1507 = vsel %vm1505, %v1504, %v1492
      %vm1508 = vcmask 785408
      %v1509 = vsel %vm1508, %v1506, %v1498
      %v1510 = vsel %vm1508, %v1507, %v1500
      %s1511 = scalar_lea.vmem %s3, 192
      %v1512 = vld [vmem:[%s1511] sm:$0xf]
      %v1513 = vld [vmem:[%s1511 + $0x4] sm:$0xf]
      %v1514 = vld [vmem:[%s1511 + $0x8] sm:$0xf]
      %v1515 = vld [vmem:[%s1511 + $0xc] sm:$0xf]
      %s1516 = scalar_lea.vmem %s5, 384
      %v1517 = vld [vmem:[%s1516] sm:$0xff]
      %v1518 = vld [vmem:[%s1516 + $0x8] sm:$0xff]
      %v1519 = vld [vmem:[%s1516 + $0x10] sm:$0xff]
      %v1520 = vld [vmem:[%s1516 + $0x18] sm:$0xff]
      %v1521 = vpack.c.bf16 %v1510, %v1509
      %1523 = vset.pattern.permute.xlu0 0
      %1524 = vperm.xlu0 %1523, %v1517
      %v1525 = vpop.permute.xlu0 %1524
      %1528 = vset.pattern.permute.xlu0 0
      %1529 = vperm.xlu0 %1528, %v1518
      %v1530 = vpop.permute.xlu0 %1529
      %1533 = vset.pattern.permute.xlu0 0
      %1534 = vperm.xlu0 %1533, %v1519
      %v1535 = vpop.permute.xlu0 %1534
      %1538 = vset.pattern.permute.xlu0 0
      %1539 = vperm.xlu0 %1538, %v1520
      %v1540 = vpop.permute.xlu0 %1539
      %v1546 = vunpack.c.l.b16 %v1512
      %v1547 = vunpack.c.l.b16 %v1513
      %v1548 = vunpack.c.l.b16 %v1514
      %v1549 = vunpack.c.l.b16 %v1515
      %v1550 = vpack.c.b16 %v1547, %v1546
      %v1551 = vpack.c.b16 %v1549, %v1548
      %v1553 = vsel %vm1027, %v1550, 0
      %v1556 = vsel %vm1027, %v1551, 0
      %1558 = vmatpush.bf16.msra.mxu0 0
      %1559 = vmatpush.bf16.msra.mxu0 0
      %1560 = vmatpush.bf16.msra.mxu0 0
      %1561 = vmatpush.bf16.msra.mxu0 0
      %1562 = vmatpush.bf16.msra.mxu0 0
      %1563 = vmatpush.bf16.msra.mxu0 0
      %1564 = vmatpush.bf16.msra.mxu0 0
      %1565 = vmatpush.bf16.msra.mxu0 %v1521
      %1566 = vmatmul.bf16.gmra.mxu0 %v1553
      %v1567 = vpop.f32.mrf.mxu0
      %v1568 = vadd.f32 %v1525, %v1567
      %v1569 = vpop.f32.mrf.mxu0
      %v1570 = vadd.f32 %v1530, %v1569
      %1571 = vmatmul.bf16.gmra.mxu0 %v1556
      %v1572 = vpop.f32.mrf.mxu0
      %v1573 = vadd.f32 %v1535, %v1572
      %v1574 = vpop.f32.mrf.mxu0
      %v1575 = vadd.f32 %v1540, %v1574
      %1576 = vdwg.mxu0
      %v1577 = vmax.f32 %v1568, 0.0
      %v1578 = vmax.f32 %v1570, 0.0
      %v1579 = vmax.f32 %v1573, 0.0
      %v1580 = vmax.f32 %v1575, 0.0
      %v1581 = vld [vmem:[%s1] sm:$0xff]
      %v1582 = vld [vmem:[%s1 + $0x8] sm:$0xff]
      %v1583 = vld [vmem:[%s1 + $0x10] sm:$0xff]
      %v1584 = vld [vmem:[%s1 + $0x18] sm:$0xff]
      %v1585 = vld [vmem:[%s291] sm:$0xff]
      %v1586 = vld [vmem:[%s291 + $0x8] sm:$0xff]
      %v1587 = vld [vmem:[%s291 + $0x10] sm:$0xff]
      %v1588 = vld [vmem:[%s291 + $0x18] sm:$0xff]
      %v1589 = vmul.f32 %v296, %v1581
      %v1590 = vmul.f32 %v296, %v1582
      %v1591 = vmul.f32 %v296, %v1583
      %v1592 = vmul.f32 %v296, %v1584
      %v1593 = vmul.f32 %v301, %v1585
      %v1594 = vmul.f32 %v301, %v1586
      %v1595 = vmul.f32 %v301, %v1587
      %v1596 = vmul.f32 %v301, %v1588
      %v1597 = vadd.f32 %v1589, %v1593
      %v1598 = vadd.f32 %v1590, %v1594
      %v1599 = vadd.f32 %v1591, %v1595
      %v1600 = vadd.f32 %v1592, %v1596
      %v1601 = vpack.c.bf16 %v1597, %v1597
      %v1602 = vpack.c.bf16 %v1598, %v1598
      %v1603 = vpack.c.bf16 %v1599, %v1599
      %v1604 = vpack.c.bf16 %v1600, %v1600
      %s1605 = scalar_lea.vmem %s4, 112
      %v1606 = vld [vmem:[%s1605] sm:$0xf]
      %v1608 = vsel %vm1188, %v1606, 0
      %vm1610 = vcmask 1043456
      %v1612 = vsel %vm1610, %v1601, 0
      %v1615 = vsel %vm1610, %v1602, 0
      %v1618 = vsel %vm1610, %v1603, 0
      %v1621 = vsel %vm1610, %v1604, 0
      %1623 = vmatpush.bf16.msra.mxu0 0
      %1624 = vmatpush.bf16.msra.mxu0 0
      %1625 = vmatpush.bf16.msra.mxu0 0
      %1626 = vmatpush.bf16.msra.mxu0 0
      %1627 = vmatpush.bf16.msra.mxu0 0
      %1628 = vmatpush.bf16.msra.mxu0 0
      %1629 = vmatpush.bf16.msra.mxu0 0
      %1630 = vmatpush.bf16.msra.mxu0 %v1612
      %1631 = vmatmul.bf16.gmra.mxu0 %v1608
      %v1632 = vpop.f32.mrf.mxu0
      %v1633 = vadd.f32 0.0, %v1632
      %v1634 = vpop.f32.mrf.mxu0
      %1635 = vdwg.mxu0
      %1636 = vmatpush.bf16.msra.mxu0 0
      %1637 = vmatpush.bf16.msra.mxu0 0
      %1638 = vmatpush.bf16.msra.mxu0 0
      %1639 = vmatpush.bf16.msra.mxu0 0
      %1640 = vmatpush.bf16.msra.mxu0 0
      %1641 = vmatpush.bf16.msra.mxu0 0
      %1642 = vmatpush.bf16.msra.mxu0 0
      %1643 = vmatpush.bf16.msra.mxu0 %v1615
      %1644 = vmatmul.bf16.gmra.mxu0 %v1608
      %v1645 = vpop.f32.mrf.mxu0
      %v1646 = vadd.f32 0.0, %v1645
      %v1647 = vpop.f32.mrf.mxu0
      %1648 = vdwg.mxu0
      %1649 = vmatpush.bf16.msra.mxu0 0
      %1650 = vmatpush.bf16.msra.mxu0 0
      %1651 = vmatpush.bf16.msra.mxu0 0
      %1652 = vmatpush.bf16.msra.mxu0 0
      %1653 = vmatpush.bf16.msra.mxu0 0
      %1654 = vmatpush.bf16.msra.mxu0 0
      %1655 = vmatpush.bf16.msra.mxu0 0
      %1656 = vmatpush.bf16.msra.mxu0 %v1618
      %1657 = vmatmul.bf16.gmra.mxu0 %v1608
      %v1658 = vpop.f32.mrf.mxu0
      %v1659 = vadd.f32 0.0, %v1658
      %v1660 = vpop.f32.mrf.mxu0
      %1661 = vdwg.mxu0
      %1662 = vmatpush.bf16.msra.mxu0 0
      %1663 = vmatpush.bf16.msra.mxu0 0
      %1664 = vmatpush.bf16.msra.mxu0 0
      %1665 = vmatpush.bf16.msra.mxu0 0
      %1666 = vmatpush.bf16.msra.mxu0 0
      %1667 = vmatpush.bf16.msra.mxu0 0
      %1668 = vmatpush.bf16.msra.mxu0 0
      %1669 = vmatpush.bf16.msra.mxu0 %v1621
      %1670 = vmatmul.bf16.gmra.mxu0 %v1608
      %v1671 = vpop.f32.mrf.mxu0
      %v1672 = vadd.f32 0.0, %v1671
      %v1673 = vpop.f32.mrf.mxu0
      %1674 = vdwg.mxu0
      %s1675 = scalar_lea.vmem %s4, 96
      %v1676 = vld [vmem:[%s1675] sm:$0xf]
      %v1677 = vld [vmem:[%s1516] sm:$0xff]
      %v1678 = vpack.c.bf16 %v1577, %v1577
      %v1680 = vsel %vm1188, %v1676, 0
      %v1683 = vsel %vm1610, %v1678, 0
      %1685 = vmatpush.bf16.msra.mxu0 0
      %1686 = vmatpush.bf16.msra.mxu0 0
      %1687 = vmatpush.bf16.msra.mxu0 0
      %1688 = vmatpush.bf16.msra.mxu0 0
      %1689 = vmatpush.bf16.msra.mxu0 0
      %1690 = vmatpush.bf16.msra.mxu0 0
      %1691 = vmatpush.bf16.msra.mxu0 0
      %1692 = vmatpush.bf16.msra.mxu0 %v1683
      %1693 = vmatmul.bf16.gmra.mxu0 %v1680
      %v1694 = vpop.f32.mrf.mxu0
      %v1695 = vadd.f32 %v1633, %v1694
      %v1696 = vpop.f32.mrf.mxu0
      %1697 = vdwg.mxu0
      %1699 = vset.pattern.permute.xlu0 1
      %1700 = vperm.xlu0 %1699, %v1677
      %v1701 = vpop.permute.xlu0 %1700
      %v1703 = vadd.f32 %v1695, %v1701
      %v1704 = vmax.f32 %v1703, 0.0
      %v1705 = vpack.c.bf16 %v1578, %v1578
      %v1707 = vsel %vm1610, %v1705, 0
      %1709 = vmatpush.bf16.msra.mxu0 0
      %1710 = vmatpush.bf16.msra.mxu0 0
      %1711 = vmatpush.bf16.msra.mxu0 0
      %1712 = vmatpush.bf16.msra.mxu0 0
      %1713 = vmatpush.bf16.msra.mxu0 0
      %1714 = vmatpush.bf16.msra.mxu0 0
      %1715 = vmatpush.bf16.msra.mxu0 0
      %1716 = vmatpush.bf16.msra.mxu0 %v1707
      %1717 = vmatmul.bf16.gmra.mxu0 %v1680
      %v1718 = vpop.f32.mrf.mxu0
      %v1719 = vadd.f32 %v1646, %v1718
      %v1720 = vpop.f32.mrf.mxu0
      %1721 = vdwg.mxu0
      %v1722 = vadd.f32 %v1719, %v1701
      %v1723 = vmax.f32 %v1722, 0.0
      %v1724 = vpack.c.bf16 %v1579, %v1579
      %v1726 = vsel %vm1610, %v1724, 0
      %1728 = vmatpush.bf16.msra.mxu0 0
      %1729 = vmatpush.bf16.msra.mxu0 0
      %1730 = vmatpush.bf16.msra.mxu0 0
      %1731 = vmatpush.bf16.msra.mxu0 0
      %1732 = vmatpush.bf16.msra.mxu0 0
      %1733 = vmatpush.bf16.msra.mxu0 0
      %1734 = vmatpush.bf16.msra.mxu0 0
      %1735 = vmatpush.bf16.msra.mxu0 %v1726
      %1736 = vmatmul.bf16.gmra.mxu0 %v1680
      %v1737 = vpop.f32.mrf.mxu0
      %v1738 = vadd.f32 %v1659, %v1737
      %v1739 = vpop.f32.mrf.mxu0
      %1740 = vdwg.mxu0
      %v1741 = vadd.f32 %v1738, %v1701
      %v1742 = vmax.f32 %v1741, 0.0
      %v1743 = vpack.c.bf16 %v1580, %v1580
      %v1745 = vsel %vm1610, %v1743, 0
      %1747 = vmatpush.bf16.msra.mxu0 0
      %1748 = vmatpush.bf16.msra.mxu0 0
      %1749 = vmatpush.bf16.msra.mxu0 0
      %1750 = vmatpush.bf16.msra.mxu0 0
      %1751 = vmatpush.bf16.msra.mxu0 0
      %1752 = vmatpush.bf16.msra.mxu0 0
      %1753 = vmatpush.bf16.msra.mxu0 0
      %1754 = vmatpush.bf16.msra.mxu0 %v1745
      %1755 = vmatmul.bf16.gmra.mxu0 %v1680
      %v1756 = vpop.f32.mrf.mxu0
      %v1757 = vadd.f32 %v1672, %v1756
      %v1758 = vpop.f32.mrf.mxu0
      %1759 = vdwg.mxu0
      %v1760 = vadd.f32 %v1757, %v1701
      %v1761 = vmax.f32 %v1760, 0.0
      %v1762 = vld [vmem:[%s274] sm:$0xff]
      %v1763 = vld [vmem:[%s274 + $0x8] sm:$0xff]
      %1766 = vst [vmem:[#allocation1] ss:$2 sm:$0xff] %v1762
      %s1767 = scalar_lea.vmem [#allocation1], 16
      %1768 = vst [vmem:[%s1767] ss:$2 sm:$0xff] %v1763
      %v1769 = vld.sshfl [vmem:[#allocation1] sm:$0xff pattern:$0x75316420]
      %v1770 = vld.sshfl [vmem:[#allocation1 + $0x8] sm:$0xff pattern:$0x75316420]
      %v1771 = vld.sshfl [vmem:[#allocation1 + $0x10] sm:$0xff pattern:$0x75316420]
      %v1772 = vld.sshfl [vmem:[#allocation1 + $0x18] sm:$0xff pattern:$0x75316420]
      %v1777 = vpack.c.bf16 %v1769, %v1769
      %v1778 = vpack.c.bf16 %v1770, %v1770
      %v1779 = vpack.c.bf16 %v1771, %v1771
      %v1780 = vpack.c.bf16 %v1772, %v1772
      %v1781 = vld [vmem:[%s6] sm:$0xf]
      %v1782 = vpack.c.bf16 %v1781, %v1781
      %v1783 = vpack.c.bf16 %v1704, %v1704
      %v1784 = vpack.c.bf16 %v1723, %v1723
      %v1785 = vpack.c.bf16 %v1742, %v1742
      %v1786 = vpack.c.bf16 %v1761, %v1761
      %1788 = vrot.lane.b32.xlu0 %v1782, 120
      %v1789 = vpop.permute.xlu0 %1788
      %v1791 = vsel %vm869, %v1789, 0
      %vm1793 = vcmask 1041408
      %v1795 = vsel %vm1793, %v1777, 0
      %v1798 = vsel %vm1793, %v1778, 0
      %v1801 = vsel %vm1793, %v1779, 0
      %v1804 = vsel %vm1793, %v1780, 0
      %1806 = vmatpush.bf16.msra.mxu0 0
      %1807 = vmatpush.bf16.msra.mxu0 0
      %1808 = vmatpush.bf16.msra.mxu0 0
      %1809 = vmatpush.bf16.msra.mxu0 0
      %1810 = vmatpush.bf16.msra.mxu0 0
      %1811 = vmatpush.bf16.msra.mxu0 0
      %1812 = vmatpush.bf16.msra.mxu0 0
      %1813 = vmatpush.bf16.msra.mxu0 %v1795
      %1814 = vmatmul.bf16.gmra.mxu0 %v1791
      %v1815 = vpop.f32.mrf.mxu0
      %v1816 = vadd.f32 0.0, %v1815
      %v1817 = vpop.f32.mrf.mxu0
      %1818 = vdwg.mxu0
      %1819 = vmatpush.bf16.msra.mxu0 0
      %1820 = vmatpush.bf16.msra.mxu0 0
      %1821 = vmatpush.bf16.msra.mxu0 0
      %1822 = vmatpush.bf16.msra.mxu0 0
      %1823 = vmatpush.bf16.msra.mxu0 0
      %1824 = vmatpush.bf16.msra.mxu0 0
      %1825 = vmatpush.bf16.msra.mxu0 0
      %1826 = vmatpush.bf16.msra.mxu0 %v1798
      %1827 = vmatmul.bf16.gmra.mxu0 %v1791
      %v1828 = vpop.f32.mrf.mxu0
      %v1829 = vadd.f32 0.0, %v1828
      %v1830 = vpop.f32.mrf.mxu0
      %1831 = vdwg.mxu0
      %1832 = vmatpush.bf16.msra.mxu0 0
      %1833 = vmatpush.bf16.msra.mxu0 0
      %1834 = vmatpush.bf16.msra.mxu0 0
      %1835 = vmatpush.bf16.msra.mxu0 0
      %1836 = vmatpush.bf16.msra.mxu0 0
      %1837 = vmatpush.bf16.msra.mxu0 0
      %1838 = vmatpush.bf16.msra.mxu0 0
      %1839 = vmatpush.bf16.msra.mxu0 %v1801
      %1840 = vmatmul.bf16.gmra.mxu0 %v1791
      %v1841 = vpop.f32.mrf.mxu0
      %v1842 = vadd.f32 0.0, %v1841
      %v1843 = vpop.f32.mrf.mxu0
      %1844 = vdwg.mxu0
      %1845 = vmatpush.bf16.msra.mxu0 0
      %1846 = vmatpush.bf16.msra.mxu0 0
      %1847 = vmatpush.bf16.msra.mxu0 0
      %1848 = vmatpush.bf16.msra.mxu0 0
      %1849 = vmatpush.bf16.msra.mxu0 0
      %1850 = vmatpush.bf16.msra.mxu0 0
      %1851 = vmatpush.bf16.msra.mxu0 0
      %1852 = vmatpush.bf16.msra.mxu0 %v1804
      %1853 = vmatmul.bf16.gmra.mxu0 %v1791
      %v1854 = vpop.f32.mrf.mxu0
      %v1855 = vadd.f32 0.0, %v1854
      %v1856 = vpop.f32.mrf.mxu0
      %1857 = vdwg.mxu0
      %v1859 = vsel %vm1188, %v1782, 0
      %v1862 = vsel %vm1610, %v1783, 0
      %v1865 = vsel %vm1610, %v1784, 0
      %v1868 = vsel %vm1610, %v1785, 0
      %v1871 = vsel %vm1610, %v1786, 0
      %1873 = vmatpush.bf16.msra.mxu0 0
      %1874 = vmatpush.bf16.msra.mxu0 0
      %1875 = vmatpush.bf16.msra.mxu0 0
      %1876 = vmatpush.bf16.msra.mxu0 0
      %1877 = vmatpush.bf16.msra.mxu0 0
      %1878 = vmatpush.bf16.msra.mxu0 0
      %1879 = vmatpush.bf16.msra.mxu0 0
      %1880 = vmatpush.bf16.msra.mxu0 %v1862
      %1881 = vmatmul.bf16.gmra.mxu0 %v1859
      %v1882 = vpop.f32.mrf.mxu0
      %v1883 = vadd.f32 %v1816, %v1882
      %v1884 = vpop.f32.mrf.mxu0
      %1885 = vdwg.mxu0
      %1886 = vmatpush.bf16.msra.mxu0 0
      %1887 = vmatpush.bf16.msra.mxu0 0
      %1888 = vmatpush.bf16.msra.mxu0 0
      %1889 = vmatpush.bf16.msra.mxu0 0
      %1890 = vmatpush.bf16.msra.mxu0 0
      %1891 = vmatpush.bf16.msra.mxu0 0
      %1892 = vmatpush.bf16.msra.mxu0 0
      %1893 = vmatpush.bf16.msra.mxu0 %v1865
      %1894 = vmatmul.bf16.gmra.mxu0 %v1859
      %v1895 = vpop.f32.mrf.mxu0
      %v1896 = vadd.f32 %v1829, %v1895
      %v1897 = vpop.f32.mrf.mxu0
      %1898 = vdwg.mxu0
      %1899 = vmatpush.bf16.msra.mxu0 0
      %1900 = vmatpush.bf16.msra.mxu0 0
      %1901 = vmatpush.bf16.msra.mxu0 0
      %1902 = vmatpush.bf16.msra.mxu0 0
      %1903 = vmatpush.bf16.msra.mxu0 0
      %1904 = vmatpush.bf16.msra.mxu0 0
      %1905 = vmatpush.bf16.msra.mxu0 0
      %1906 = vmatpush.bf16.msra.mxu0 %v1868
      %1907 = vmatmul.bf16.gmra.mxu0 %v1859
      %v1908 = vpop.f32.mrf.mxu0
      %v1909 = vadd.f32 %v1842, %v1908
      %v1910 = vpop.f32.mrf.mxu0
      %1911 = vdwg.mxu0
      %1912 = vmatpush.bf16.msra.mxu0 0
      %1913 = vmatpush.bf16.msra.mxu0 0
      %1914 = vmatpush.bf16.msra.mxu0 0
      %1915 = vmatpush.bf16.msra.mxu0 0
      %1916 = vmatpush.bf16.msra.mxu0 0
      %1917 = vmatpush.bf16.msra.mxu0 0
      %1918 = vmatpush.bf16.msra.mxu0 0
      %1919 = vmatpush.bf16.msra.mxu0 %v1871
      %1920 = vmatmul.bf16.gmra.mxu0 %v1859
      %v1921 = vpop.f32.mrf.mxu0
      %v1922 = vadd.f32 %v1855, %v1921
      %v1923 = vpop.f32.mrf.mxu0
      %1924 = vdwg.mxu0
      %1926 = vset.pattern.permute.xlu0 12
      %1927 = vperm.xlu0 %1926, %v1781
      %v1928 = vpop.permute.xlu0 %1927
      %v1930 = vadd.f32 %v1883, %v1928
      %v1931 = vadd.f32 %v1896, %v1928
      %v1932 = vadd.f32 %v1909, %v1928
      %v1933 = vadd.f32 %v1922, %v1928
      %v1938 = vrot.slane %v1931, 4
      %v1939 = vrot.slane %v1933, 4
      %v1940 = vsel %vm1610, %v1930, %v1938
      %v1941 = vsel %vm1610, %v1932, %v1939
      %1944 = vst [vmem:[%s279] sm:$0xff] %v1940
      %1945 = vst [vmem:[%s279 + $0x8] sm:$0xff] %v1941
      %p1946 = scmp.lt.s32.totalorder %s19, 2
      %s1947 = scalar_select %p1946, %s19, 2
      %s1948 = smul.addr %s1947, 4
      %s1949 = smul.addr %s1948, 4
      %s1950 = scalar_lea.vmem %s7, %s1949
      // Predicated region
      $region49: #{pcrl_forward.3} parent=47 // pred_check
        %p1951 = pneg %p189
      $region50: #{pcrl_forward.3} parent=47 // pred_check_branch
        %1953 = sbr.rel (%p1951) target = $region52
      $region51: #{pcrl_forward.3} parent=47 // pred_region
        _
      $region52: #{pcrl_forward.3} parent=47 // pred_fallthru
        _
    $region48: #{pcrl_forward.3} parent=5 // pred_fallthru
      _
    %p1954 = scmp.le.s32.totalorder 2, %s14
    // Predicated region
    $region53: #{pcrl_forward.3} parent=5 // pred_check
      %p1955 = pneg %p1954
    $region54: #{pcrl_forward.3} parent=5 // pred_check_branch
      %1957 = sbr.rel (%p1955) target = $region56
    $region55: #{pcrl_forward.3} parent=5 // pred_region
      %s1958 = ssub.s32 %s14, 2
      // Predicated region
      $region57: #{pcrl_forward.3} parent=55 // pred_check
        %p1959 = pneg %p195
      $region58: #{pcrl_forward.3} parent=55 // pred_check_branch
        %1961 = sbr.rel (%p1959) target = $region60
      $region59: #{pcrl_forward.3} parent=55 // pred_region
        %p1962 = scmp.lt.s32.totalorder %s20, 2
        %s1963 = scalar_select %p1962, %s20, 2
        %s1964 = smul.addr %s1963, 4
        %s1965 = smul.addr %s1964, 4
        %s1966 = scalar_lea.vmem %s7, %s1965
      $region60: #{pcrl_forward.3} parent=55 // pred_fallthru
        _
    $region56: #{pcrl_forward.3} parent=5 // pred_fallthru
      _
  $region6: #{pcrl_forward.3} parent=0 // loop_footer
    %s18 = sadd.s32 1, %s14
  $region7: #{pcrl_forward.3} parent=0 // loop_footer_branch
    %13 = sbr.rel target = $region3
  $region8: #{pcrl_forward.3} parent=0 // loop_exit
    _

</llo_original>
